<compile_context>
chip_gen: v5e
topology: v5e:2x2
jax: 0.10.0
libtpu: 0.0.40
codegen_flags: <defaults>
</compile_context>

<pallas_src>
import functools

import jax
import jax.numpy as jnp
from jax import lax
from jax.experimental import pallas as pl
from jax.experimental.pallas import tpu as pltpu

ATOM_PAD = 64          # 51 atoms padded to 64 lanes
NEG_INF = -1e30        # finite "-inf" for padded atom logits


# ---------------------------------------------------------------------------
# Fused forward kernel (one batch tile of `tb` rows per grid step)
# ---------------------------------------------------------------------------
def _c51_kernel(xblk_ref, w1_ref, b1_ref, w2_ref, b2_ref, w3_ref, b3_ref,
                w4_ref, b4_ref, w5_ref, b5_ref, probs_ref, *logits_refs,
                tb, cb, action_num):
    f32, bf16 = jnp.float32, jnp.bfloat16
    w1 = w1_ref[...]
    w2 = w2_ref[...]

    # conv1: 8x8 kernel, stride 4 (36x36 -> 8x8x32).  Input slab layout:
    #   xb[b, bh, bw*cb + ci*16 + p*4 + q] = x[b, ci, 4*bh + p, 4*bw + q]
    # For a fixed output column ox, the two row-taps di in {0,1} are contiguous
    # slices (2*cb = 128 lanes wide); lane-concat -> K = 4*cb = 256 matmul.
    xb = xblk_ref[...]                                      # (tb, 9, 9*cb) bf16
    h1_cols = []
    for ox in range(8):
        lo = ox * cb
        patch = jnp.concatenate(
            [xb[:, 0:8, lo:lo + 2 * cb],                    # di = 0
             xb[:, 1:9, lo:lo + 2 * cb]],                   # di = 1
            axis=-1).reshape(tb * 8, 4 * cb)                # rows = (b, oy)
        h1_cols.append(jnp.dot(patch, w1, preferred_element_type=f32))
    h1 = jnp.concatenate(h1_cols, axis=-1)                  # (tb*8, 256) lanes (ox, c)
    h1 = jnp.maximum(h1 + b1_ref[...], 0.0).astype(bf16)
    h1 = h1.reshape(tb, 8, 256)                             # rows (b, oy)

    # conv2: 4x4 kernel, stride 2 (8x8x32 -> 3x3x64).  Each output position
    # (u, v) needs 4 lane-dense 128-wide chunks (one per kernel row kh), lane
    # order (kh, kw, ci) -> one (tb, 512) @ (512, 64) matmul per position.
    h2_parts = []
    for u in range(3):
        for v in range(3):
            taps = [h1[:, 2 * u + kh, 64 * v:64 * v + 128] for kh in range(4)]
            patch = jnp.concatenate(taps, axis=-1)          # (tb, 512)
            h2_parts.append(jnp.dot(patch, w2, preferred_element_type=f32))
    h2 = jnp.concatenate(h2_parts, axis=-1)                 # (tb, 576) lanes (u, v, c)
    h2 = jnp.maximum(h2 + b2_ref[...], 0.0).astype(bf16)

    # conv3: 3x3 kernel on the 3x3 map -> 1x1x64 == full contraction over the
    # 576 lanes; single K=576 matmul.  Result == Flatten output.
    h3 = jnp.dot(h2, w3_ref[...], preferred_element_type=f32)
    h3 = jnp.maximum(h3 + b3_ref[...], 0.0).astype(bf16)    # (tb, 64)

    # fc4 (-> 512, ReLU) and fc5 (-> action_num * ATOM_PAD logits).
    y4 = jnp.dot(h3, w4_ref[...], preferred_element_type=f32)
    y4 = jnp.maximum(y4 + b4_ref[...], 0.0).astype(bf16)    # (tb, 512)
    logits = jnp.dot(y4, w5_ref[...], preferred_element_type=f32) + b5_ref[...]
    if logits_refs:                                         # optional HBM writeback
        logits_refs[0][...] = logits

    # Per-action softmax over the (padded) atom lanes; padded lanes carry a
    # -1e30 bias so exp() underflows to exactly 0 and row sums stay correct.
    segs = []
    for a in range(action_num):
        seg = logits[:, a * ATOM_PAD:(a + 1) * ATOM_PAD]
        m = jnp.max(seg, axis=-1, keepdims=True)
        e = jnp.exp(seg - m)
        s = jnp.sum(e, axis=-1, keepdims=True)
        segs.append(e * pl.reciprocal(s, approx=True))      # EUP, not VPU divide
    probs_ref[...] = jnp.concatenate(segs, axis=-1)


# ---------------------------------------------------------------------------
# Host-side wrappers
# ---------------------------------------------------------------------------
def _round_up(x, m):
    return -(-x // m) * m


def conv_out_hw(h, w):
    h1, w1 = (h - 8) // 4 + 1, (w - 8) // 4 + 1
    h2, w2 = (h1 - 4) // 2 + 1, (w1 - 4) // 2 + 1
    return h2 - 3 + 1, w2 - 3 + 1


def prepare_params(params, action_num, num_atoms):
    """Re-layout PyTorch-convention params into kernel/MXU-friendly layouts.

    Run ONCE at load time (hoisted out of the per-step jit in __main__).
    """
    bf16 = jnp.bfloat16
    co1, c, _, _ = params["w1"].shape                       # (32, c, 8, 8)
    # conv1 -> single K=4*c*16 matrix, contraction order (di, dj, ci, p, q).
    w1 = params["w1"].reshape(co1, c, 2, 4, 2, 4)           # (co, ci, di, p, dj, q)
    w1f = w1.transpose(2, 4, 1, 3, 5, 0).reshape(4 * c * 16, co1).astype(bf16)
    b1t = jnp.tile(params["b1"], 8).reshape(1, 8 * co1)     # h1 lanes = (ox, co)
    # conv2 -> (kh*kw*cin, cout), lane order (kh, kw, ci).
    w2f = params["w2"].transpose(2, 3, 1, 0).reshape(512, 64).astype(bf16)
    b2t = jnp.tile(params["b2"], 9).reshape(1, 576)         # h2 lanes = (u, v, co)
    # conv3 -> single (576, 64) matrix, lane order (u, v, ci).
    w3f = params["w3"].transpose(2, 3, 1, 0).reshape(576, 64).astype(bf16)
    b3 = params["b3"].reshape(1, 64)
    w4 = params["w4"].astype(bf16)                          # stored (in, out)
    b4 = params["b4"].reshape(1, -1)
    # fc5 -> atoms padded 51 -> 64 per action (pad weights 0, pad bias -1e30).
    # NOTE: b5 must stay f32 for the -1e30 padding trick to be exact.
    w5 = params["w5"].reshape(512, action_num, num_atoms)
    w5p = jnp.pad(w5, ((0, 0), (0, 0), (0, ATOM_PAD - num_atoms)))
    w5p = w5p.reshape(512, action_num * ATOM_PAD).astype(bf16)
    b5 = params["b5"].reshape(action_num, num_atoms)
    b5p = jnp.pad(b5, ((0, 0), (0, ATOM_PAD - num_atoms)),
                  constant_values=NEG_INF)
    b5p = b5p.reshape(1, action_num * ATOM_PAD).astype(jnp.float32)
    return {"w1": w1f, "b1": b1t, "w2": w2f, "b2": b2t, "w3": w3f, "b3": b3,
            "w4": w4, "b4": b4, "w5": w5p, "b5": b5p}


def _c51_pallas(kp, x, action_num, num_atoms, *, batch_tile=128,
                return_logits=True):
    # Same channels-last heuristic as the PyTorch module (fragile by design;
    # prefer an explicit layout argument in production).
    if x.shape[-1] < x.shape[1]:
        x = jnp.transpose(x, (0, 3, 1, 2))
    x = x.astype(jnp.float32)
    b, c, h, w = x.shape
    assert (h, w) == (36, 36), (
        "fused kernel is specialized to inputs whose conv stack reduces to "
        "1x1 spatial (e.g. 36x36)")
    assert num_atoms <= ATOM_PAD
    cb = c * 16

    # Batch tile: 128 keeps per-step VMEM well under v7x's 64 MiB; larger
    # tiles (512-1024) are profitable on v5e/v6e's 128 MiB VMEM.
    tb = min(batch_tile, _round_up(b, 8))
    bp = _round_up(b, tb)
    xp = jnp.pad(x, ((0, bp - b), (0, 0), (0, 0), (0, 0)))
    # Space-to-depth re-tile (host side, 3 XLA layout ops), cast to bf16:
    #   xblk[b, bh, bw*cb + ci*16 + p*4 + q] = x[b, ci, 4*bh + p, 4*bw + q]
    xblk = xp.reshape(bp, c, 9, 4, 9, 4).transpose(0, 2, 4, 1, 3, 5)
    xblk = xblk.reshape(bp, 9, 9 * cb).astype(jnp.bfloat16)

    out_dim = action_num * ATOM_PAD
    n_out = 2 if return_logits else 1
    full_spec = lambda arr: pl.BlockSpec(arr.shape, lambda i: (0, 0))
    in_specs = [pl.BlockSpec((tb, 9, 9 * cb), lambda i: (i, 0, 0))]
    for name in ("w1", "b1", "w2", "b2", "w3", "b3", "w4", "b4", "w5", "b5"):
        in_specs.append(full_spec(kp[name]))
    out_spec = pl.BlockSpec((tb, out_dim), lambda i: (i, 0))

    kernel = functools.partial(_c51_kernel, tb=tb, cb=cb, action_num=action_num)
    outs = pl.pallas_call(
        kernel,
        out_shape=(jax.ShapeDtypeStruct((bp, out_dim), jnp.float32),) * n_out,
        grid=(bp // tb,),
        in_specs=in_specs,
        out_specs=(out_spec,) * n_out,
        compiler_params=pltpu.CompilerParams(
            dimension_semantics=("parallel",),
            vmem_limit_bytes=32 * 1024 * 1024),
    )(xblk, kp["w1"], kp["b1"], kp["w2"], kp["b2"], kp["w3"], kp["b3"],
      kp["w4"], kp["b4"], kp["w5"], kp["b5"])

    probs = outs[0][:b].reshape(b, action_num, ATOM_PAD)[..., :num_atoms]
    if not return_logits:
        return probs, None
    logits = outs[1][:b].reshape(b, action_num, ATOM_PAD)[..., :num_atoms]
    return probs, logits.reshape(b, action_num * num_atoms)


def _c51_apply(params, x, action_num, num_atoms, **kw):
    # Convenience path; in production call prepare_params once at load time.
    kp = prepare_params(params, action_num, num_atoms)
    return _c51_pallas(kp, x, action_num, num_atoms, **kw)


def c51_forward(params, x, action_num, num_atoms):
    """Module-equivalent forward: x -> Z(x, *), shape (B, action_num, atoms)."""
    probs, _ = _c51_apply(params, x, action_num, num_atoms, return_logits=False)
    return probs


# ---------------------------------------------------------------------------
# Parameters (deterministic synthetic init, PyTorch-like shapes)
# ---------------------------------------------------------------------------
def init_params(key, c, h, w, action_num, num_atoms):
    """Linear weights are stored as (in, out), i.e. already transposed."""
    def u(k, shape, fan_in):
        bound = 1.0 / (fan_in ** 0.5)
        return jax.random.uniform(k, shape, jnp.float32, -bound, bound)

    ks = jax.random.split(key, 10)
    h3, w3 = conv_out_hw(h, w)
    feat = 64 * h3 * w3
    out_dim = action_num * num_atoms
    return {
        "w1": u(ks[0], (32, c, 8, 8), c * 8 * 8),
        "b1": u(ks[1], (32,), c * 8 * 8),
        "w2": u(ks[2], (64, 32, 4, 4), 32 * 4 * 4),
        "b2": u(ks[3], (64,), 32 * 4 * 4),
        "w3": u(ks[4], (64, 64, 3, 3), 64 * 3 * 3),
        "b3": u(ks[5], (64,), 64 * 3 * 3),
        "w4": u(ks[6], (feat, 512), feat),
        "b4": u(ks[7], (512,), feat),
        "w5": u(ks[8], (512, out_dim), 512),
        "b5": u(ks[9], (out_dim,), 512),
    }


# ---------------------------------------------------------------------------
# Pure-JAX (XLA, f32) reference for correctness checking
# ---------------------------------------------------------------------------
def c51_reference(params, x, action_num, num_atoms):
    if x.shape[-1] < x.shape[1]:
        x = jnp.transpose(x, (0, 3, 1, 2))
    x = x.astype(jnp.float32)
    hi = lax.Precision.HIGHEST

    def conv(y, wgt, bias, s):
        y = lax.conv_general_dilated(
            y, wgt, window_strides=(s, s), padding="VALID",
            dimension_numbers=("NCHW", "OIHW", "NCHW"), precision=hi)
        return jax.nn.relu(y + bias.reshape(1, -1, 1, 1))

    x = conv(x, params["w1"], params["b1"], 4)
    x = conv(x, params["w2"], params["b2"], 2)
    x = conv(x, params["w3"], params["b3"], 1)
    x = x.reshape(x.shape[0], -1)
    x = jax.nn.relu(jnp.dot(x, params["w4"], precision=hi) + params["b4"])
    logits = jnp.dot(x, params["w5"], precision=hi) + params["b5"]
    probs = jax.nn.softmax(logits.reshape(-1, num_atoms), axis=-1)
    return probs.reshape(-1, action_num, num_atoms), logits


if __name__ == "__main__":
    B, C, H, W = 2, 4, 36, 36          # minimal input whose conv stack -> 1x1
    ACTION_NUM, NUM_ATOMS = 6, 51

    key = jax.random.PRNGKey(0)
    k_param, k_x = jax.random.split(key)
    params = init_params(k_param, C, H, W, ACTION_NUM, NUM_ATOMS)
    x = jax.random.normal(k_x, (B, C, H, W), dtype=jnp.float32)

    # Weight re-layout happens once at "load time", outside the per-step jit.
    kp = prepare_params(params, ACTION_NUM, NUM_ATOMS)

    fwd = jax.jit(functools.partial(_c51_pallas, action_num=ACTION_NUM,
                                    num_atoms=NUM_ATOMS, return_logits=True))
    probs, logits = fwd(kp, x)
    probs = jax.block_until_ready(probs)
    logits = jax.block_until_ready(logits)

    assert probs.shape == (B, ACTION_NUM, NUM_ATOMS), probs.shape
    # distributional output: each (batch, action) row sums to ~1
    assert jnp.allclose(jnp.sum(probs, axis=-1), 1.0, atol=5e-3)

    # fused bf16 kernel vs. f32 XLA reference
    ref_probs, ref_logits = c51_reference(params, x, ACTION_NUM, NUM_ATOMS)
    assert jnp.allclose(logits, ref_logits, atol=1e-2), (
        float(jnp.max(jnp.abs(logits - ref_logits))))
    assert jnp.allclose(probs, ref_probs, atol=5e-3), (
        float(jnp.max(jnp.abs(probs - ref_probs))))

    # probs-only fast path (skips the f32 logits HBM writeback entirely)
    fwd_probs = jax.jit(functools.partial(_c51_pallas, action_num=ACTION_NUM,
                                          num_atoms=NUM_ATOMS,
                                          return_logits=False))
    probs2, _ = fwd_probs(kp, x)
    probs2 = jax.block_until_ready(probs2)
    assert jnp.allclose(probs2, probs, atol=1e-5)

    print("KERNEL_OK")
</pallas_src>

<mosaic_0001>
module attributes {stable_mosaic.version = 11 : i64} {
  func.func @_c51_kernel(%arg0: i32, %arg1: memref<8x9x576xbf16, #tpu.memory_space<vmem>>, %arg2: memref<256x32xbf16, #tpu.memory_space<vmem>>, %arg3: memref<1x256xf32, #tpu.memory_space<vmem>>, %arg4: memref<512x64xbf16, #tpu.memory_space<vmem>>, %arg5: memref<1x576xf32, #tpu.memory_space<vmem>>, %arg6: memref<576x64xbf16, #tpu.memory_space<vmem>>, %arg7: memref<1x64xf32, #tpu.memory_space<vmem>>, %arg8: memref<64x512xbf16, #tpu.memory_space<vmem>>, %arg9: memref<1x512xf32, #tpu.memory_space<vmem>>, %arg10: memref<512x384xbf16, #tpu.memory_space<vmem>>, %arg11: memref<1x384xf32, #tpu.memory_space<vmem>>, %arg12: memref<8x384xf32, #tpu.memory_space<vmem>>, %arg13: memref<8x384xf32, #tpu.memory_space<vmem>>) attributes {dimension_semantics = [#tpu.dimension_semantics<parallel>], iteration_bounds = array<i64: 1>, scalar_prefetch = 0 : i64, scratch_operands = 0 : i64, tpu.core_type = #tpu.core_type<tc>, window_params = [{transform_indices = @transform_0, window_bounds = array<i64: 8, 9, 576>}, {pipeline_mode = #tpu.pipeline_mode<synchronous>, transform_indices = @transform_1, window_bounds = array<i64: 256, 32>}, {pipeline_mode = #tpu.pipeline_mode<synchronous>, transform_indices = @transform_2, window_bounds = array<i64: 1, 256>}, {pipeline_mode = #tpu.pipeline_mode<synchronous>, transform_indices = @transform_3, window_bounds = array<i64: 512, 64>}, {pipeline_mode = #tpu.pipeline_mode<synchronous>, transform_indices = @transform_4, window_bounds = array<i64: 1, 576>}, {pipeline_mode = #tpu.pipeline_mode<synchronous>, transform_indices = @transform_5, window_bounds = array<i64: 576, 64>}, {pipeline_mode = #tpu.pipeline_mode<synchronous>, transform_indices = @transform_6, window_bounds = array<i64: 1, 64>}, {pipeline_mode = #tpu.pipeline_mode<synchronous>, transform_indices = @transform_7, window_bounds = array<i64: 64, 512>}, {pipeline_mode = #tpu.pipeline_mode<synchronous>, transform_indices = @transform_8, window_bounds = array<i64: 1, 512>}, {pipeline_mode = #tpu.pipeline_mode<synchronous>, transform_indices = @transform_9, window_bounds = array<i64: 512, 384>}, {pipeline_mode = #tpu.pipeline_mode<synchronous>, transform_indices = @transform_10, window_bounds = array<i64: 1, 384>}, {transform_indices = @transform_11, window_bounds = array<i64: 8, 384>}, {transform_indices = @transform_12, window_bounds = array<i64: 8, 384>}]} {
    %c0 = arith.constant 0 : index
    %c0_0 = arith.constant 0 : index
    %0 = vector.load %arg2[%c0, %c0_0] : memref<256x32xbf16, #tpu.memory_space<vmem>>, vector<256x32xbf16>
    %c0_1 = arith.constant 0 : index
    %c0_2 = arith.constant 0 : index
    %1 = vector.load %arg4[%c0_1, %c0_2] : memref<512x64xbf16, #tpu.memory_space<vmem>>, vector<512x64xbf16>
    %c0_3 = arith.constant 0 : index
    %c0_4 = arith.constant 0 : index
    %c0_5 = arith.constant 0 : index
    %2 = vector.load %arg1[%c0_3, %c0_4, %c0_5] : memref<8x9x576xbf16, #tpu.memory_space<vmem>>, vector<8x9x576xbf16>
    %3 = vector.extract_strided_slice %2 {offsets = [0, 0, 0], sizes = [8, 8, 128], strides = [1, 1, 1]} : vector<8x9x576xbf16> to vector<8x8x128xbf16>
    %4 = vector.extract_strided_slice %2 {offsets = [0, 1, 0], sizes = [8, 8, 128], strides = [1, 1, 1]} : vector<8x9x576xbf16> to vector<8x8x128xbf16>
    %5 = tpu.concatenate %3, %4 in 2 : vector<8x8x128xbf16>, vector<8x8x128xbf16> -> vector<8x8x256xbf16>
    %6 = vector.shape_cast %5 : vector<8x8x256xbf16> to vector<64x256xbf16>
    %cst = arith.constant dense<0.000000e+00> : vector<64x32xf32>
    %7 = tpu.matmul %6, %0, %cst {dimension_numbers = #tpu.dot_dimension_numbers<[1], [0], [0], [1], [0, 0, 1, 1], [], []>} : vector<64x256xbf16>, vector<256x32xbf16>, vector<64x32xf32> -> vector<64x32xf32>
    %8 = vector.extract_strided_slice %2 {offsets = [0, 0, 64], sizes = [8, 8, 128], strides = [1, 1, 1]} : vector<8x9x576xbf16> to vector<8x8x128xbf16>
    %9 = vector.extract_strided_slice %2 {offsets = [0, 1, 64], sizes = [8, 8, 128], strides = [1, 1, 1]} : vector<8x9x576xbf16> to vector<8x8x128xbf16>
    %10 = tpu.concatenate %8, %9 in 2 : vector<8x8x128xbf16>, vector<8x8x128xbf16> -> vector<8x8x256xbf16>
    %11 = vector.shape_cast %10 : vector<8x8x256xbf16> to vector<64x256xbf16>
    %cst_6 = arith.constant dense<0.000000e+00> : vector<64x32xf32>
    %12 = tpu.matmul %11, %0, %cst_6 {dimension_numbers = #tpu.dot_dimension_numbers<[1], [0], [0], [1], [0, 0, 1, 1], [], []>} : vector<64x256xbf16>, vector<256x32xbf16>, vector<64x32xf32> -> vector<64x32xf32>
    %13 = vector.extract_strided_slice %2 {offsets = [0, 0, 128], sizes = [8, 8, 128], strides = [1, 1, 1]} : vector<8x9x576xbf16> to vector<8x8x128xbf16>
    %14 = vector.extract_strided_slice %2 {offsets = [0, 1, 128], sizes = [8, 8, 128], strides = [1, 1, 1]} : vector<8x9x576xbf16> to vector<8x8x128xbf16>
    %15 = tpu.concatenate %13, %14 in 2 : vector<8x8x128xbf16>, vector<8x8x128xbf16> -> vector<8x8x256xbf16>
    %16 = vector.shape_cast %15 : vector<8x8x256xbf16> to vector<64x256xbf16>
    %cst_7 = arith.constant dense<0.000000e+00> : vector<64x32xf32>
    %17 = tpu.matmul %16, %0, %cst_7 {dimension_numbers = #tpu.dot_dimension_numbers<[1], [0], [0], [1], [0, 0, 1, 1], [], []>} : vector<64x256xbf16>, vector<256x32xbf16>, vector<64x32xf32> -> vector<64x32xf32>
    %18 = vector.extract_strided_slice %2 {offsets = [0, 0, 192], sizes = [8, 8, 128], strides = [1, 1, 1]} : vector<8x9x576xbf16> to vector<8x8x128xbf16>
    %19 = vector.extract_strided_slice %2 {offsets = [0, 1, 192], sizes = [8, 8, 128], strides = [1, 1, 1]} : vector<8x9x576xbf16> to vector<8x8x128xbf16>
    %20 = tpu.concatenate %18, %19 in 2 : vector<8x8x128xbf16>, vector<8x8x128xbf16> -> vector<8x8x256xbf16>
    %21 = vector.shape_cast %20 : vector<8x8x256xbf16> to vector<64x256xbf16>
    %cst_8 = arith.constant dense<0.000000e+00> : vector<64x32xf32>
    %22 = tpu.matmul %21, %0, %cst_8 {dimension_numbers = #tpu.dot_dimension_numbers<[1], [0], [0], [1], [0, 0, 1, 1], [], []>} : vector<64x256xbf16>, vector<256x32xbf16>, vector<64x32xf32> -> vector<64x32xf32>
    %23 = vector.extract_strided_slice %2 {offsets = [0, 0, 256], sizes = [8, 8, 128], strides = [1, 1, 1]} : vector<8x9x576xbf16> to vector<8x8x128xbf16>
    %24 = vector.extract_strided_slice %2 {offsets = [0, 1, 256], sizes = [8, 8, 128], strides = [1, 1, 1]} : vector<8x9x576xbf16> to vector<8x8x128xbf16>
    %25 = tpu.concatenate %23, %24 in 2 : vector<8x8x128xbf16>, vector<8x8x128xbf16> -> vector<8x8x256xbf16>
    %26 = vector.shape_cast %25 : vector<8x8x256xbf16> to vector<64x256xbf16>
    %cst_9 = arith.constant dense<0.000000e+00> : vector<64x32xf32>
    %27 = tpu.matmul %26, %0, %cst_9 {dimension_numbers = #tpu.dot_dimension_numbers<[1], [0], [0], [1], [0, 0, 1, 1], [], []>} : vector<64x256xbf16>, vector<256x32xbf16>, vector<64x32xf32> -> vector<64x32xf32>
    %28 = vector.extract_strided_slice %2 {offsets = [0, 0, 320], sizes = [8, 8, 128], strides = [1, 1, 1]} : vector<8x9x576xbf16> to vector<8x8x128xbf16>
    %29 = vector.extract_strided_slice %2 {offsets = [0, 1, 320], sizes = [8, 8, 128], strides = [1, 1, 1]} : vector<8x9x576xbf16> to vector<8x8x128xbf16>
    %30 = tpu.concatenate %28, %29 in 2 : vector<8x8x128xbf16>, vector<8x8x128xbf16> -> vector<8x8x256xbf16>
    %31 = vector.shape_cast %30 : vector<8x8x256xbf16> to vector<64x256xbf16>
    %cst_10 = arith.constant dense<0.000000e+00> : vector<64x32xf32>
    %32 = tpu.matmul %31, %0, %cst_10 {dimension_numbers = #tpu.dot_dimension_numbers<[1], [0], [0], [1], [0, 0, 1, 1], [], []>} : vector<64x256xbf16>, vector<256x32xbf16>, vector<64x32xf32> -> vector<64x32xf32>
    %33 = vector.extract_strided_slice %2 {offsets = [0, 0, 384], sizes = [8, 8, 128], strides = [1, 1, 1]} : vector<8x9x576xbf16> to vector<8x8x128xbf16>
    %34 = vector.extract_strided_slice %2 {offsets = [0, 1, 384], sizes = [8, 8, 128], strides = [1, 1, 1]} : vector<8x9x576xbf16> to vector<8x8x128xbf16>
    %35 = tpu.concatenate %33, %34 in 2 : vector<8x8x128xbf16>, vector<8x8x128xbf16> -> vector<8x8x256xbf16>
    %36 = vector.shape_cast %35 : vector<8x8x256xbf16> to vector<64x256xbf16>
    %cst_11 = arith.constant dense<0.000000e+00> : vector<64x32xf32>
    %37 = tpu.matmul %36, %0, %cst_11 {dimension_numbers = #tpu.dot_dimension_numbers<[1], [0], [0], [1], [0, 0, 1, 1], [], []>} : vector<64x256xbf16>, vector<256x32xbf16>, vector<64x32xf32> -> vector<64x32xf32>
    %38 = vector.extract_strided_slice %2 {offsets = [0, 0, 448], sizes = [8, 8, 128], strides = [1, 1, 1]} : vector<8x9x576xbf16> to vector<8x8x128xbf16>
    %39 = vector.extract_strided_slice %2 {offsets = [0, 1, 448], sizes = [8, 8, 128], strides = [1, 1, 1]} : vector<8x9x576xbf16> to vector<8x8x128xbf16>
    %40 = tpu.concatenate %38, %39 in 2 : vector<8x8x128xbf16>, vector<8x8x128xbf16> -> vector<8x8x256xbf16>
    %41 = vector.shape_cast %40 : vector<8x8x256xbf16> to vector<64x256xbf16>
    %cst_12 = arith.constant dense<0.000000e+00> : vector<64x32xf32>
    %42 = tpu.matmul %41, %0, %cst_12 {dimension_numbers = #tpu.dot_dimension_numbers<[1], [0], [0], [1], [0, 0, 1, 1], [], []>} : vector<64x256xbf16>, vector<256x32xbf16>, vector<64x32xf32> -> vector<64x32xf32>
    %43 = tpu.concatenate %7, %12, %17, %22, %27, %32, %37, %42 in 1 : vector<64x32xf32>, vector<64x32xf32>, vector<64x32xf32>, vector<64x32xf32>, vector<64x32xf32>, vector<64x32xf32>, vector<64x32xf32>, vector<64x32xf32> -> vector<64x256xf32>
    %c0_13 = arith.constant 0 : index
    %c0_14 = arith.constant 0 : index
    %44 = vector.load %arg3[%c0_13, %c0_14] : memref<1x256xf32, #tpu.memory_space<vmem>>, vector<1x256xf32>
    %45 = vector.broadcast %44 : vector<1x256xf32> to vector<64x256xf32>
    %46 = arith.addf %43, %45 : vector<64x256xf32>
    %cst_15 = arith.constant 0.000000e+00 : f32
    %47 = vector.broadcast %cst_15 : f32 to vector<64x256xf32>
    %48 = arith.maximumf %46, %47 : vector<64x256xf32>
    %49 = arith.truncf %48 : vector<64x256xf32> to vector<64x256xbf16>
    %50 = vector.shape_cast %49 : vector<64x256xbf16> to vector<8x8x256xbf16>
    %51 = vector.extract_strided_slice %50 {offsets = [0, 0, 0], sizes = [8, 1, 128], strides = [1, 1, 1]} : vector<8x8x256xbf16> to vector<8x1x128xbf16>
    %52 = vector.shape_cast %51 : vector<8x1x128xbf16> to vector<8x128xbf16>
    %53 = vector.extract_strided_slice %50 {offsets = [0, 1, 0], sizes = [8, 1, 128], strides = [1, 1, 1]} : vector<8x8x256xbf16> to vector<8x1x128xbf16>
    %54 = vector.shape_cast %53 : vector<8x1x128xbf16> to vector<8x128xbf16>
    %55 = vector.extract_strided_slice %50 {offsets = [0, 2, 0], sizes = [8, 1, 128], strides = [1, 1, 1]} : vector<8x8x256xbf16> to vector<8x1x128xbf16>
    %56 = vector.shape_cast %55 : vector<8x1x128xbf16> to vector<8x128xbf16>
    %57 = vector.extract_strided_slice %50 {offsets = [0, 3, 0], sizes = [8, 1, 128], strides = [1, 1, 1]} : vector<8x8x256xbf16> to vector<8x1x128xbf16>
    %58 = vector.shape_cast %57 : vector<8x1x128xbf16> to vector<8x128xbf16>
    %59 = tpu.concatenate %52, %54, %56, %58 in 1 : vector<8x128xbf16>, vector<8x128xbf16>, vector<8x128xbf16>, vector<8x128xbf16> -> vector<8x512xbf16>
    %cst_16 = arith.constant dense<0.000000e+00> : vector<8x64xf32>
    %60 = tpu.matmul %59, %1, %cst_16 {dimension_numbers = #tpu.dot_dimension_numbers<[1], [0], [0], [1], [0, 0, 1, 1], [], []>} : vector<8x512xbf16>, vector<512x64xbf16>, vector<8x64xf32> -> vector<8x64xf32>
    %61 = vector.extract_strided_slice %50 {offsets = [0, 0, 64], sizes = [8, 1, 128], strides = [1, 1, 1]} : vector<8x8x256xbf16> to vector<8x1x128xbf16>
    %62 = vector.shape_cast %61 : vector<8x1x128xbf16> to vector<8x128xbf16>
    %63 = vector.extract_strided_slice %50 {offsets = [0, 1, 64], sizes = [8, 1, 128], strides = [1, 1, 1]} : vector<8x8x256xbf16> to vector<8x1x128xbf16>
    %64 = vector.shape_cast %63 : vector<8x1x128xbf16> to vector<8x128xbf16>
    %65 = vector.extract_strided_slice %50 {offsets = [0, 2, 64], sizes = [8, 1, 128], strides = [1, 1, 1]} : vector<8x8x256xbf16> to vector<8x1x128xbf16>
    %66 = vector.shape_cast %65 : vector<8x1x128xbf16> to vector<8x128xbf16>
    %67 = vector.extract_strided_slice %50 {offsets = [0, 3, 64], sizes = [8, 1, 128], strides = [1, 1, 1]} : vector<8x8x256xbf16> to vector<8x1x128xbf16>
    %68 = vector.shape_cast %67 : vector<8x1x128xbf16> to vector<8x128xbf16>
    %69 = tpu.concatenate %62, %64, %66, %68 in 1 : vector<8x128xbf16>, vector<8x128xbf16>, vector<8x128xbf16>, vector<8x128xbf16> -> vector<8x512xbf16>
    %cst_17 = arith.constant dense<0.000000e+00> : vector<8x64xf32>
    %70 = tpu.matmul %69, %1, %cst_17 {dimension_numbers = #tpu.dot_dimension_numbers<[1], [0], [0], [1], [0, 0, 1, 1], [], []>} : vector<8x512xbf16>, vector<512x64xbf16>, vector<8x64xf32> -> vector<8x64xf32>
    %71 = vector.extract_strided_slice %50 {offsets = [0, 0, 128], sizes = [8, 1, 128], strides = [1, 1, 1]} : vector<8x8x256xbf16> to vector<8x1x128xbf16>
    %72 = vector.shape_cast %71 : vector<8x1x128xbf16> to vector<8x128xbf16>
    %73 = vector.extract_strided_slice %50 {offsets = [0, 1, 128], sizes = [8, 1, 128], strides = [1, 1, 1]} : vector<8x8x256xbf16> to vector<8x1x128xbf16>
    %74 = vector.shape_cast %73 : vector<8x1x128xbf16> to vector<8x128xbf16>
    %75 = vector.extract_strided_slice %50 {offsets = [0, 2, 128], sizes = [8, 1, 128], strides = [1, 1, 1]} : vector<8x8x256xbf16> to vector<8x1x128xbf16>
    %76 = vector.shape_cast %75 : vector<8x1x128xbf16> to vector<8x128xbf16>
    %77 = vector.extract_strided_slice %50 {offsets = [0, 3, 128], sizes = [8, 1, 128], strides = [1, 1, 1]} : vector<8x8x256xbf16> to vector<8x1x128xbf16>
    %78 = vector.shape_cast %77 : vector<8x1x128xbf16> to vector<8x128xbf16>
    %79 = tpu.concatenate %72, %74, %76, %78 in 1 : vector<8x128xbf16>, vector<8x128xbf16>, vector<8x128xbf16>, vector<8x128xbf16> -> vector<8x512xbf16>
    %cst_18 = arith.constant dense<0.000000e+00> : vector<8x64xf32>
    %80 = tpu.matmul %79, %1, %cst_18 {dimension_numbers = #tpu.dot_dimension_numbers<[1], [0], [0], [1], [0, 0, 1, 1], [], []>} : vector<8x512xbf16>, vector<512x64xbf16>, vector<8x64xf32> -> vector<8x64xf32>
    %81 = vector.extract_strided_slice %50 {offsets = [0, 2, 0], sizes = [8, 1, 128], strides = [1, 1, 1]} : vector<8x8x256xbf16> to vector<8x1x128xbf16>
    %82 = vector.shape_cast %81 : vector<8x1x128xbf16> to vector<8x128xbf16>
    %83 = vector.extract_strided_slice %50 {offsets = [0, 3, 0], sizes = [8, 1, 128], strides = [1, 1, 1]} : vector<8x8x256xbf16> to vector<8x1x128xbf16>
    %84 = vector.shape_cast %83 : vector<8x1x128xbf16> to vector<8x128xbf16>
    %85 = vector.extract_strided_slice %50 {offsets = [0, 4, 0], sizes = [8, 1, 128], strides = [1, 1, 1]} : vector<8x8x256xbf16> to vector<8x1x128xbf16>
    %86 = vector.shape_cast %85 : vector<8x1x128xbf16> to vector<8x128xbf16>
    %87 = vector.extract_strided_slice %50 {offsets = [0, 5, 0], sizes = [8, 1, 128], strides = [1, 1, 1]} : vector<8x8x256xbf16> to vector<8x1x128xbf16>
    %88 = vector.shape_cast %87 : vector<8x1x128xbf16> to vector<8x128xbf16>
    %89 = tpu.concatenate %82, %84, %86, %88 in 1 : vector<8x128xbf16>, vector<8x128xbf16>, vector<8x128xbf16>, vector<8x128xbf16> -> vector<8x512xbf16>
    %cst_19 = arith.constant dense<0.000000e+00> : vector<8x64xf32>
    %90 = tpu.matmul %89, %1, %cst_19 {dimension_numbers = #tpu.dot_dimension_numbers<[1], [0], [0], [1], [0, 0, 1, 1], [], []>} : vector<8x512xbf16>, vector<512x64xbf16>, vector<8x64xf32> -> vector<8x64xf32>
    %91 = vector.extract_strided_slice %50 {offsets = [0, 2, 64], sizes = [8, 1, 128], strides = [1, 1, 1]} : vector<8x8x256xbf16> to vector<8x1x128xbf16>
    %92 = vector.shape_cast %91 : vector<8x1x128xbf16> to vector<8x128xbf16>
    %93 = vector.extract_strided_slice %50 {offsets = [0, 3, 64], sizes = [8, 1, 128], strides = [1, 1, 1]} : vector<8x8x256xbf16> to vector<8x1x128xbf16>
    %94 = vector.shape_cast %93 : vector<8x1x128xbf16> to vector<8x128xbf16>
    %95 = vector.extract_strided_slice %50 {offsets = [0, 4, 64], sizes = [8, 1, 128], strides = [1, 1, 1]} : vector<8x8x256xbf16> to vector<8x1x128xbf16>
    %96 = vector.shape_cast %95 : vector<8x1x128xbf16> to vector<8x128xbf16>
    %97 = vector.extract_strided_slice %50 {offsets = [0, 5, 64], sizes = [8, 1, 128], strides = [1, 1, 1]} : vector<8x8x256xbf16> to vector<8x1x128xbf16>
    %98 = vector.shape_cast %97 : vector<8x1x128xbf16> to vector<8x128xbf16>
    %99 = tpu.concatenate %92, %94, %96, %98 in 1 : vector<8x128xbf16>, vector<8x128xbf16>, vector<8x128xbf16>, vector<8x128xbf16> -> vector<8x512xbf16>
    %cst_20 = arith.constant dense<0.000000e+00> : vector<8x64xf32>
    %100 = tpu.matmul %99, %1, %cst_20 {dimension_numbers = #tpu.dot_dimension_numbers<[1], [0], [0], [1], [0, 0, 1, 1], [], []>} : vector<8x512xbf16>, vector<512x64xbf16>, vector<8x64xf32> -> vector<8x64xf32>
    %101 = vector.extract_strided_slice %50 {offsets = [0, 2, 128], sizes = [8, 1, 128], strides = [1, 1, 1]} : vector<8x8x256xbf16> to vector<8x1x128xbf16>
    %102 = vector.shape_cast %101 : vector<8x1x128xbf16> to vector<8x128xbf16>
    %103 = vector.extract_strided_slice %50 {offsets = [0, 3, 128], sizes = [8, 1, 128], strides = [1, 1, 1]} : vector<8x8x256xbf16> to vector<8x1x128xbf16>
    %104 = vector.shape_cast %103 : vector<8x1x128xbf16> to vector<8x128xbf16>
    %105 = vector.extract_strided_slice %50 {offsets = [0, 4, 128], sizes = [8, 1, 128], strides = [1, 1, 1]} : vector<8x8x256xbf16> to vector<8x1x128xbf16>
    %106 = vector.shape_cast %105 : vector<8x1x128xbf16> to vector<8x128xbf16>
    %107 = vector.extract_strided_slice %50 {offsets = [0, 5, 128], sizes = [8, 1, 128], strides = [1, 1, 1]} : vector<8x8x256xbf16> to vector<8x1x128xbf16>
    %108 = vector.shape_cast %107 : vector<8x1x128xbf16> to vector<8x128xbf16>
    %109 = tpu.concatenate %102, %104, %106, %108 in 1 : vector<8x128xbf16>, vector<8x128xbf16>, vector<8x128xbf16>, vector<8x128xbf16> -> vector<8x512xbf16>
    %cst_21 = arith.constant dense<0.000000e+00> : vector<8x64xf32>
    %110 = tpu.matmul %109, %1, %cst_21 {dimension_numbers = #tpu.dot_dimension_numbers<[1], [0], [0], [1], [0, 0, 1, 1], [], []>} : vector<8x512xbf16>, vector<512x64xbf16>, vector<8x64xf32> -> vector<8x64xf32>
    %111 = vector.extract_strided_slice %50 {offsets = [0, 4, 0], sizes = [8, 1, 128], strides = [1, 1, 1]} : vector<8x8x256xbf16> to vector<8x1x128xbf16>
    %112 = vector.shape_cast %111 : vector<8x1x128xbf16> to vector<8x128xbf16>
    %113 = vector.extract_strided_slice %50 {offsets = [0, 5, 0], sizes = [8, 1, 128], strides = [1, 1, 1]} : vector<8x8x256xbf16> to vector<8x1x128xbf16>
    %114 = vector.shape_cast %113 : vector<8x1x128xbf16> to vector<8x128xbf16>
    %115 = vector.extract_strided_slice %50 {offsets = [0, 6, 0], sizes = [8, 1, 128], strides = [1, 1, 1]} : vector<8x8x256xbf16> to vector<8x1x128xbf16>
    %116 = vector.shape_cast %115 : vector<8x1x128xbf16> to vector<8x128xbf16>
    %117 = vector.extract_strided_slice %50 {offsets = [0, 7, 0], sizes = [8, 1, 128], strides = [1, 1, 1]} : vector<8x8x256xbf16> to vector<8x1x128xbf16>
    %118 = vector.shape_cast %117 : vector<8x1x128xbf16> to vector<8x128xbf16>
    %119 = tpu.concatenate %112, %114, %116, %118 in 1 : vector<8x128xbf16>, vector<8x128xbf16>, vector<8x128xbf16>, vector<8x128xbf16> -> vector<8x512xbf16>
    %cst_22 = arith.constant dense<0.000000e+00> : vector<8x64xf32>
    %120 = tpu.matmul %119, %1, %cst_22 {dimension_numbers = #tpu.dot_dimension_numbers<[1], [0], [0], [1], [0, 0, 1, 1], [], []>} : vector<8x512xbf16>, vector<512x64xbf16>, vector<8x64xf32> -> vector<8x64xf32>
    %121 = vector.extract_strided_slice %50 {offsets = [0, 4, 64], sizes = [8, 1, 128], strides = [1, 1, 1]} : vector<8x8x256xbf16> to vector<8x1x128xbf16>
    %122 = vector.shape_cast %121 : vector<8x1x128xbf16> to vector<8x128xbf16>
    %123 = vector.extract_strided_slice %50 {offsets = [0, 5, 64], sizes = [8, 1, 128], strides = [1, 1, 1]} : vector<8x8x256xbf16> to vector<8x1x128xbf16>
    %124 = vector.shape_cast %123 : vector<8x1x128xbf16> to vector<8x128xbf16>
    %125 = vector.extract_strided_slice %50 {offsets = [0, 6, 64], sizes = [8, 1, 128], strides = [1, 1, 1]} : vector<8x8x256xbf16> to vector<8x1x128xbf16>
    %126 = vector.shape_cast %125 : vector<8x1x128xbf16> to vector<8x128xbf16>
    %127 = vector.extract_strided_slice %50 {offsets = [0, 7, 64], sizes = [8, 1, 128], strides = [1, 1, 1]} : vector<8x8x256xbf16> to vector<8x1x128xbf16>
    %128 = vector.shape_cast %127 : vector<8x1x128xbf16> to vector<8x128xbf16>
    %129 = tpu.concatenate %122, %124, %126, %128 in 1 : vector<8x128xbf16>, vector<8x128xbf16>, vector<8x128xbf16>, vector<8x128xbf16> -> vector<8x512xbf16>
    %cst_23 = arith.constant dense<0.000000e+00> : vector<8x64xf32>
    %130 = tpu.matmul %129, %1, %cst_23 {dimension_numbers = #tpu.dot_dimension_numbers<[1], [0], [0], [1], [0, 0, 1, 1], [], []>} : vector<8x512xbf16>, vector<512x64xbf16>, vector<8x64xf32> -> vector<8x64xf32>
    %131 = vector.extract_strided_slice %50 {offsets = [0, 4, 128], sizes = [8, 1, 128], strides = [1, 1, 1]} : vector<8x8x256xbf16> to vector<8x1x128xbf16>
    %132 = vector.shape_cast %131 : vector<8x1x128xbf16> to vector<8x128xbf16>
    %133 = vector.extract_strided_slice %50 {offsets = [0, 5, 128], sizes = [8, 1, 128], strides = [1, 1, 1]} : vector<8x8x256xbf16> to vector<8x1x128xbf16>
    %134 = vector.shape_cast %133 : vector<8x1x128xbf16> to vector<8x128xbf16>
    %135 = vector.extract_strided_slice %50 {offsets = [0, 6, 128], sizes = [8, 1, 128], strides = [1, 1, 1]} : vector<8x8x256xbf16> to vector<8x1x128xbf16>
    %136 = vector.shape_cast %135 : vector<8x1x128xbf16> to vector<8x128xbf16>
    %137 = vector.extract_strided_slice %50 {offsets = [0, 7, 128], sizes = [8, 1, 128], strides = [1, 1, 1]} : vector<8x8x256xbf16> to vector<8x1x128xbf16>
    %138 = vector.shape_cast %137 : vector<8x1x128xbf16> to vector<8x128xbf16>
    %139 = tpu.concatenate %132, %134, %136, %138 in 1 : vector<8x128xbf16>, vector<8x128xbf16>, vector<8x128xbf16>, vector<8x128xbf16> -> vector<8x512xbf16>
    %cst_24 = arith.constant dense<0.000000e+00> : vector<8x64xf32>
    %140 = tpu.matmul %139, %1, %cst_24 {dimension_numbers = #tpu.dot_dimension_numbers<[1], [0], [0], [1], [0, 0, 1, 1], [], []>} : vector<8x512xbf16>, vector<512x64xbf16>, vector<8x64xf32> -> vector<8x64xf32>
    %141 = tpu.concatenate %60, %70, %80, %90, %100, %110, %120, %130, %140 in 1 : vector<8x64xf32>, vector<8x64xf32>, vector<8x64xf32>, vector<8x64xf32>, vector<8x64xf32>, vector<8x64xf32>, vector<8x64xf32>, vector<8x64xf32>, vector<8x64xf32> -> vector<8x576xf32>
    %c0_25 = arith.constant 0 : index
    %c0_26 = arith.constant 0 : index
    %142 = vector.load %arg5[%c0_25, %c0_26] : memref<1x576xf32, #tpu.memory_space<vmem>>, vector<1x576xf32>
    %143 = vector.broadcast %142 : vector<1x576xf32> to vector<8x576xf32>
    %144 = arith.addf %141, %143 : vector<8x576xf32>
    %cst_27 = arith.constant 0.000000e+00 : f32
    %145 = vector.broadcast %cst_27 : f32 to vector<8x576xf32>
    %146 = arith.maximumf %144, %145 : vector<8x576xf32>
    %147 = arith.truncf %146 : vector<8x576xf32> to vector<8x576xbf16>
    %c0_28 = arith.constant 0 : index
    %c0_29 = arith.constant 0 : index
    %148 = vector.load %arg6[%c0_28, %c0_29] : memref<576x64xbf16, #tpu.memory_space<vmem>>, vector<576x64xbf16>
    %cst_30 = arith.constant dense<0.000000e+00> : vector<8x64xf32>
    %149 = tpu.matmul %147, %148, %cst_30 {dimension_numbers = #tpu.dot_dimension_numbers<[1], [0], [0], [1], [0, 0, 1, 1], [], []>} : vector<8x576xbf16>, vector<576x64xbf16>, vector<8x64xf32> -> vector<8x64xf32>
    %c0_31 = arith.constant 0 : index
    %c0_32 = arith.constant 0 : index
    %150 = vector.load %arg7[%c0_31, %c0_32] : memref<1x64xf32, #tpu.memory_space<vmem>>, vector<1x64xf32>
    %151 = vector.broadcast %150 : vector<1x64xf32> to vector<8x64xf32>
    %152 = arith.addf %149, %151 : vector<8x64xf32>
    %cst_33 = arith.constant 0.000000e+00 : f32
    %153 = vector.broadcast %cst_33 : f32 to vector<8x64xf32>
    %154 = arith.maximumf %152, %153 : vector<8x64xf32>
    %155 = arith.truncf %154 : vector<8x64xf32> to vector<8x64xbf16>
    %c0_34 = arith.constant 0 : index
    %c0_35 = arith.constant 0 : index
    %156 = vector.load %arg8[%c0_34, %c0_35] : memref<64x512xbf16, #tpu.memory_space<vmem>>, vector<64x512xbf16>
    %cst_36 = arith.constant dense<0.000000e+00> : vector<8x512xf32>
    %157 = tpu.matmul %155, %156, %cst_36 {dimension_numbers = #tpu.dot_dimension_numbers<[1], [0], [0], [1], [0, 0, 1, 1], [], []>} : vector<8x64xbf16>, vector<64x512xbf16>, vector<8x512xf32> -> vector<8x512xf32>
    %c0_37 = arith.constant 0 : index
    %c0_38 = arith.constant 0 : index
    %158 = vector.load %arg9[%c0_37, %c0_38] : memref<1x512xf32, #tpu.memory_space<vmem>>, vector<1x512xf32>
    %159 = vector.broadcast %158 : vector<1x512xf32> to vector<8x512xf32>
    %160 = arith.addf %157, %159 : vector<8x512xf32>
    %cst_39 = arith.constant 0.000000e+00 : f32
    %161 = vector.broadcast %cst_39 : f32 to vector<8x512xf32>
    %162 = arith.maximumf %160, %161 : vector<8x512xf32>
    %163 = arith.truncf %162 : vector<8x512xf32> to vector<8x512xbf16>
    %c0_40 = arith.constant 0 : index
    %c0_41 = arith.constant 0 : index
    %164 = vector.load %arg10[%c0_40, %c0_41] : memref<512x384xbf16, #tpu.memory_space<vmem>>, vector<512x384xbf16>
    %cst_42 = arith.constant dense<0.000000e+00> : vector<8x384xf32>
    %165 = tpu.matmul %163, %164, %cst_42 {dimension_numbers = #tpu.dot_dimension_numbers<[1], [0], [0], [1], [0, 0, 1, 1], [], []>} : vector<8x512xbf16>, vector<512x384xbf16>, vector<8x384xf32> -> vector<8x384xf32>
    %c0_43 = arith.constant 0 : index
    %c0_44 = arith.constant 0 : index
    %166 = vector.load %arg11[%c0_43, %c0_44] : memref<1x384xf32, #tpu.memory_space<vmem>>, vector<1x384xf32>
    %167 = vector.broadcast %166 : vector<1x384xf32> to vector<8x384xf32>
    %168 = arith.addf %165, %167 : vector<8x384xf32>
    %c0_45 = arith.constant 0 : index
    %c0_46 = arith.constant 0 : index
    %169 = vector.load %arg13[%c0_45, %c0_46] : memref<8x384xf32, #tpu.memory_space<vmem>>, vector<8x384xf32>
    tpu.vector_store %arg13[%c0_45, %c0_46], %168 {strides = array<i32>} : memref<8x384xf32, #tpu.memory_space<vmem>>, vector<8x384xf32>,
    %170 = vector.extract_strided_slice %168 {offsets = [0, 0], sizes = [8, 64], strides = [1, 1]} : vector<8x384xf32> to vector<8x64xf32>
    %cst_47 = arith.constant dense<0xFF800000> : vector<8xf32>
    %171 = vector.multi_reduction <maximumf>, %170, %cst_47 [1] : vector<8x64xf32> to vector<8xf32>
    %172 = vector.shape_cast %171 : vector<8xf32> to vector<8x1xf32>
    %173 = vector.broadcast %172 : vector<8x1xf32> to vector<8x64xf32>
    %174 = arith.subf %170, %173 : vector<8x64xf32>
    %175 = math.exp %174 : vector<8x64xf32>
    %cst_48 = arith.constant dense<0.000000e+00> : vector<8xf32>
    %176 = vector.multi_reduction <add>, %175, %cst_48 [1] : vector<8x64xf32> to vector<8xf32>
    %177 = vector.shape_cast %176 : vector<8xf32> to vector<8x1xf32>
    %178 = tpu.reciprocal %177 {approx = true} : vector<8x1xf32> -> vector<8x1xf32>
    %179 = vector.broadcast %178 : vector<8x1xf32> to vector<8x64xf32>
    %180 = arith.mulf %175, %179 : vector<8x64xf32>
    %181 = vector.extract_strided_slice %168 {offsets = [0, 64], sizes = [8, 64], strides = [1, 1]} : vector<8x384xf32> to vector<8x64xf32>
    %cst_49 = arith.constant dense<0xFF800000> : vector<8xf32>
    %182 = vector.multi_reduction <maximumf>, %181, %cst_49 [1] : vector<8x64xf32> to vector<8xf32>
    %183 = vector.shape_cast %182 : vector<8xf32> to vector<8x1xf32>
    %184 = vector.broadcast %183 : vector<8x1xf32> to vector<8x64xf32>
    %185 = arith.subf %181, %184 : vector<8x64xf32>
    %186 = math.exp %185 : vector<8x64xf32>
    %cst_50 = arith.constant dense<0.000000e+00> : vector<8xf32>
    %187 = vector.multi_reduction <add>, %186, %cst_50 [1] : vector<8x64xf32> to vector<8xf32>
    %188 = vector.shape_cast %187 : vector<8xf32> to vector<8x1xf32>
    %189 = tpu.reciprocal %188 {approx = true} : vector<8x1xf32> -> vector<8x1xf32>
    %190 = vector.broadcast %189 : vector<8x1xf32> to vector<8x64xf32>
    %191 = arith.mulf %186, %190 : vector<8x64xf32>
    %192 = vector.extract_strided_slice %168 {offsets = [0, 128], sizes = [8, 64], strides = [1, 1]} : vector<8x384xf32> to vector<8x64xf32>
    %cst_51 = arith.constant dense<0xFF800000> : vector<8xf32>
    %193 = vector.multi_reduction <maximumf>, %192, %cst_51 [1] : vector<8x64xf32> to vector<8xf32>
    %194 = vector.shape_cast %193 : vector<8xf32> to vector<8x1xf32>
    %195 = vector.broadcast %194 : vector<8x1xf32> to vector<8x64xf32>
    %196 = arith.subf %192, %195 : vector<8x64xf32>
    %197 = math.exp %196 : vector<8x64xf32>
    %cst_52 = arith.constant dense<0.000000e+00> : vector<8xf32>
    %198 = vector.multi_reduction <add>, %197, %cst_52 [1] : vector<8x64xf32> to vector<8xf32>
    %199 = vector.shape_cast %198 : vector<8xf32> to vector<8x1xf32>
    %200 = tpu.reciprocal %199 {approx = true} : vector<8x1xf32> -> vector<8x1xf32>
    %201 = vector.broadcast %200 : vector<8x1xf32> to vector<8x64xf32>
    %202 = arith.mulf %197, %201 : vector<8x64xf32>
    %203 = vector.extract_strided_slice %168 {offsets = [0, 192], sizes = [8, 64], strides = [1, 1]} : vector<8x384xf32> to vector<8x64xf32>
    %cst_53 = arith.constant dense<0xFF800000> : vector<8xf32>
    %204 = vector.multi_reduction <maximumf>, %203, %cst_53 [1] : vector<8x64xf32> to vector<8xf32>
    %205 = vector.shape_cast %204 : vector<8xf32> to vector<8x1xf32>
    %206 = vector.broadcast %205 : vector<8x1xf32> to vector<8x64xf32>
    %207 = arith.subf %203, %206 : vector<8x64xf32>
    %208 = math.exp %207 : vector<8x64xf32>
    %cst_54 = arith.constant dense<0.000000e+00> : vector<8xf32>
    %209 = vector.multi_reduction <add>, %208, %cst_54 [1] : vector<8x64xf32> to vector<8xf32>
    %210 = vector.shape_cast %209 : vector<8xf32> to vector<8x1xf32>
    %211 = tpu.reciprocal %210 {approx = true} : vector<8x1xf32> -> vector<8x1xf32>
    %212 = vector.broadcast %211 : vector<8x1xf32> to vector<8x64xf32>
    %213 = arith.mulf %208, %212 : vector<8x64xf32>
    %214 = vector.extract_strided_slice %168 {offsets = [0, 256], sizes = [8, 64], strides = [1, 1]} : vector<8x384xf32> to vector<8x64xf32>
    %cst_55 = arith.constant dense<0xFF800000> : vector<8xf32>
    %215 = vector.multi_reduction <maximumf>, %214, %cst_55 [1] : vector<8x64xf32> to vector<8xf32>
    %216 = vector.shape_cast %215 : vector<8xf32> to vector<8x1xf32>
    %217 = vector.broadcast %216 : vector<8x1xf32> to vector<8x64xf32>
    %218 = arith.subf %214, %217 : vector<8x64xf32>
    %219 = math.exp %218 : vector<8x64xf32>
    %cst_56 = arith.constant dense<0.000000e+00> : vector<8xf32>
    %220 = vector.multi_reduction <add>, %219, %cst_56 [1] : vector<8x64xf32> to vector<8xf32>
    %221 = vector.shape_cast %220 : vector<8xf32> to vector<8x1xf32>
    %222 = tpu.reciprocal %221 {approx = true} : vector<8x1xf32> -> vector<8x1xf32>
    %223 = vector.broadcast %222 : vector<8x1xf32> to vector<8x64xf32>
    %224 = arith.mulf %219, %223 : vector<8x64xf32>
    %225 = vector.extract_strided_slice %168 {offsets = [0, 320], sizes = [8, 64], strides = [1, 1]} : vector<8x384xf32> to vector<8x64xf32>
    %cst_57 = arith.constant dense<0xFF800000> : vector<8xf32>
    %226 = vector.multi_reduction <maximumf>, %225, %cst_57 [1] : vector<8x64xf32> to vector<8xf32>
    %227 = vector.shape_cast %226 : vector<8xf32> to vector<8x1xf32>
    %228 = vector.broadcast %227 : vector<8x1xf32> to vector<8x64xf32>
    %229 = arith.subf %225, %228 : vector<8x64xf32>
    %230 = math.exp %229 : vector<8x64xf32>
    %cst_58 = arith.constant dense<0.000000e+00> : vector<8xf32>
    %231 = vector.multi_reduction <add>, %230, %cst_58 [1] : vector<8x64xf32> to vector<8xf32>
    %232 = vector.shape_cast %231 : vector<8xf32> to vector<8x1xf32>
    %233 = tpu.reciprocal %232 {approx = true} : vector<8x1xf32> -> vector<8x1xf32>
    %234 = vector.broadcast %233 : vector<8x1xf32> to vector<8x64xf32>
    %235 = arith.mulf %230, %234 : vector<8x64xf32>
    %236 = tpu.concatenate %180, %191, %202, %213, %224, %235 in 1 : vector<8x64xf32>, vector<8x64xf32>, vector<8x64xf32>, vector<8x64xf32>, vector<8x64xf32>, vector<8x64xf32> -> vector<8x384xf32>
    %c0_59 = arith.constant 0 : index
    %c0_60 = arith.constant 0 : index
    %237 = vector.load %arg12[%c0_59, %c0_60] : memref<8x384xf32, #tpu.memory_space<vmem>>, vector<8x384xf32>
    tpu.vector_store %arg12[%c0_59, %c0_60], %236 {strides = array<i32>} : memref<8x384xf32, #tpu.memory_space<vmem>>, vector<8x384xf32>,
    return
  }
  func.func @transform_0(%arg0: i32) -> (i32, i32, i32) {
    %c0_i32 = arith.constant 0 : i32
    %c0_i32_0 = arith.constant 0 : i32
    %c0_i32_1 = arith.constant 0 : i32
    return %arg0, %c0_i32, %c0_i32_0 : i32, i32, i32
  }
  func.func @transform_1(%arg0: i32) -> (i32, i32) {
    %c0_i32 = arith.constant 0 : i32
    %c0_i32_0 = arith.constant 0 : i32
    %c0_i32_1 = arith.constant 0 : i32
    return %c0_i32, %c0_i32_0 : i32, i32
  }
  func.func @transform_2(%arg0: i32) -> (i32, i32) {
    %c0_i32 = arith.constant 0 : i32
    %c0_i32_0 = arith.constant 0 : i32
    %c0_i32_1 = arith.constant 0 : i32
    return %c0_i32, %c0_i32_0 : i32, i32
  }
  func.func @transform_3(%arg0: i32) -> (i32, i32) {
    %c0_i32 = arith.constant 0 : i32
    %c0_i32_0 = arith.constant 0 : i32
    %c0_i32_1 = arith.constant 0 : i32
    return %c0_i32, %c0_i32_0 : i32, i32
  }
  func.func @transform_4(%arg0: i32) -> (i32, i32) {
    %c0_i32 = arith.constant 0 : i32
    %c0_i32_0 = arith.constant 0 : i32
    %c0_i32_1 = arith.constant 0 : i32
    return %c0_i32, %c0_i32_0 : i32, i32
  }
  func.func @transform_5(%arg0: i32) -> (i32, i32) {
    %c0_i32 = arith.constant 0 : i32
    %c0_i32_0 = arith.constant 0 : i32
    %c0_i32_1 = arith.constant 0 : i32
    return %c0_i32, %c0_i32_0 : i32, i32
  }
  func.func @transform_6(%arg0: i32) -> (i32, i32) {
    %c0_i32 = arith.constant 0 : i32
    %c0_i32_0 = arith.constant 0 : i32
    %c0_i32_1 = arith.constant 0 : i32
    return %c0_i32, %c0_i32_0 : i32, i32
  }
  func.func @transform_7(%arg0: i32) -> (i32, i32) {
    %c0_i32 = arith.constant 0 : i32
    %c0_i32_0 = arith.constant 0 : i32
    %c0_i32_1 = arith.constant 0 : i32
    return %c0_i32, %c0_i32_0 : i32, i32
  }
  func.func @transform_8(%arg0: i32) -> (i32, i32) {
    %c0_i32 = arith.constant 0 : i32
    %c0_i32_0 = arith.constant 0 : i32
    %c0_i32_1 = arith.constant 0 : i32
    return %c0_i32, %c0_i32_0 : i32, i32
  }
  func.func @transform_9(%arg0: i32) -> (i32, i32) {
    %c0_i32 = arith.constant 0 : i32
    %c0_i32_0 = arith.constant 0 : i32
    %c0_i32_1 = arith.constant 0 : i32
    return %c0_i32, %c0_i32_0 : i32, i32
  }
  func.func @transform_10(%arg0: i32) -> (i32, i32) {
    %c0_i32 = arith.constant 0 : i32
    %c0_i32_0 = arith.constant 0 : i32
    %c0_i32_1 = arith.constant 0 : i32
    return %c0_i32, %c0_i32_0 : i32, i32
  }
  func.func @transform_11(%arg0: i32) -> (i32, i32) {
    %c0_i32 = arith.constant 0 : i32
    %c0_i32_0 = arith.constant 0 : i32
    return %arg0, %c0_i32 : i32, i32
  }
  func.func @transform_12(%arg0: i32) -> (i32, i32) {
    %c0_i32 = arith.constant 0 : i32
    %c0_i32_0 = arith.constant 0 : i32
    return %arg0, %c0_i32 : i32, i32
  }
}

</mosaic_0001>

<llo_original>
// kernel: _c51_pallas.1
$region0: #{_c51_pallas.1}
  #allocation0 [shape = 'u32[]', space=smem, size = 0x4, offset = 0x4, fixed_abs, tag = 'smem constant byte address 0x4 - core index']
  #allocation1 [shape = 'u32[72,128]{1,0:T(1,128)}', space=vmem, size = 0x9000, scoped, tag = 'internal scratch']
  %s0 = inlined_call_operand.vmem [shape: bf16[8,9,576], index: 0, kind: input, shape index: {}]
  %s1 = inlined_call_operand.vmem [shape: bf16[256,32], index: 1, kind: input, shape index: {}]
  %s2 = inlined_call_operand.vmem [shape: f32[1,256], index: 2, kind: input, shape index: {}]
  %s3 = inlined_call_operand.vmem [shape: bf16[512,64], index: 3, kind: input, shape index: {}]
  %s4 = inlined_call_operand.vmem [shape: f32[1,576], index: 4, kind: input, shape index: {}]
  %s5 = inlined_call_operand.vmem [shape: bf16[576,64], index: 5, kind: input, shape index: {}]
  %s6 = inlined_call_operand.vmem [shape: f32[1,64], index: 6, kind: input, shape index: {}]
  %s7 = inlined_call_operand.vmem [shape: bf16[64,512], index: 7, kind: input, shape index: {}]
  %s8 = inlined_call_operand.vmem [shape: f32[1,512], index: 8, kind: input, shape index: {}]
  %s9 = inlined_call_operand.vmem [shape: bf16[512,384], index: 9, kind: input, shape index: {}]
  %s10 = inlined_call_operand.vmem [shape: f32[1,384], index: 10, kind: input, shape index: {}]
  %s11 = inlined_call_operand.vmem [shape: f32[8,384], index: 11, kind: output, shape index: {0}]
  %s12 = inlined_call_operand.vmem [shape: f32[8,384], index: 12, kind: output, shape index: {1}]
  %13 = xla_tuple %s11, %s12
  %s14 = sld [smem:[#allocation0]]
  $region62: #{_c51_pallas.1} parent=0
    _
  %s16 = ssub.s32 1, %s14
  %s17 = scalar_select 0, %s16, %s14
  // Predicated region
  $region2: #{_c51_pallas.1} parent=0 // pred_check
    _
  $region3: #{_c51_pallas.1} parent=0 // pred_check_branch
    %19 = sbr.rel (0) target = $region5
  $region4: #{_c51_pallas.1} parent=0 // pred_region
    _
  $region5: #{_c51_pallas.1} parent=0 // pred_fallthru
    _
  // Predicated region
  $region6: #{_c51_pallas.1} parent=0 // pred_check
    _
  $region7: #{_c51_pallas.1} parent=0 // pred_check_branch
    %21 = sbr.rel (0) target = $region9
  $region8: #{_c51_pallas.1} parent=0 // pred_region
    _
  $region9: #{_c51_pallas.1} parent=0 // pred_fallthru
    _
  // Predicated region
  $region10: #{_c51_pallas.1} parent=0 // pred_check
    _
  $region11: #{_c51_pallas.1} parent=0 // pred_check_branch
    %23 = sbr.rel (0) target = $region13
  $region12: #{_c51_pallas.1} parent=0 // pred_region
    _
  $region13: #{_c51_pallas.1} parent=0 // pred_fallthru
    _
  // Predicated region
  $region14: #{_c51_pallas.1} parent=0 // pred_check
    _
  $region15: #{_c51_pallas.1} parent=0 // pred_check_branch
    %25 = sbr.rel (0) target = $region17
  $region16: #{_c51_pallas.1} parent=0 // pred_region
    _
  $region17: #{_c51_pallas.1} parent=0 // pred_fallthru
    _
  // Predicated region
  $region18: #{_c51_pallas.1} parent=0 // pred_check
    _
  $region19: #{_c51_pallas.1} parent=0 // pred_check_branch
    %27 = sbr.rel (0) target = $region21
  $region20: #{_c51_pallas.1} parent=0 // pred_region
    _
  $region21: #{_c51_pallas.1} parent=0 // pred_fallthru
    _
  // Predicated region
  $region22: #{_c51_pallas.1} parent=0 // pred_check
    _
  $region23: #{_c51_pallas.1} parent=0 // pred_check_branch
    %29 = sbr.rel (0) target = $region25
  $region24: #{_c51_pallas.1} parent=0 // pred_region
    _
  $region25: #{_c51_pallas.1} parent=0 // pred_fallthru
    _
  // Predicated region
  $region26: #{_c51_pallas.1} parent=0 // pred_check
    _
  $region27: #{_c51_pallas.1} parent=0 // pred_check_branch
    %31 = sbr.rel (0) target = $region29
  $region28: #{_c51_pallas.1} parent=0 // pred_region
    _
  $region29: #{_c51_pallas.1} parent=0 // pred_fallthru
    _
  // Predicated region
  $region30: #{_c51_pallas.1} parent=0 // pred_check
    _
  $region31: #{_c51_pallas.1} parent=0 // pred_check_branch
    %33 = sbr.rel (0) target = $region33
  $region32: #{_c51_pallas.1} parent=0 // pred_region
    _
  $region33: #{_c51_pallas.1} parent=0 // pred_fallthru
    _
  // Predicated region
  $region34: #{_c51_pallas.1} parent=0 // pred_check
    _
  $region35: #{_c51_pallas.1} parent=0 // pred_check_branch
    %35 = sbr.rel (0) target = $region37
  $region36: #{_c51_pallas.1} parent=0 // pred_region
    _
  $region37: #{_c51_pallas.1} parent=0 // pred_fallthru
    _
  // Predicated region
  $region38: #{_c51_pallas.1} parent=0 // pred_check
    _
  $region39: #{_c51_pallas.1} parent=0 // pred_check_branch
    %37 = sbr.rel (0) target = $region41
  $region40: #{_c51_pallas.1} parent=0 // pred_region
    _
  $region41: #{_c51_pallas.1} parent=0 // pred_fallthru
    _
  // Predicated region
  $region42: #{_c51_pallas.1} parent=0 // pred_check
    _
  $region43: #{_c51_pallas.1} parent=0 // pred_check_branch
    %39 = sbr.rel (0) target = $region45
  $region44: #{_c51_pallas.1} parent=0 // pred_region
    _
  $region45: #{_c51_pallas.1} parent=0 // pred_fallthru
    _
  %v41 = vld [vmem:[%s1] sm:$0xf]
  %v42 = vld [vmem:[%s1 + $0x4] sm:$0xf]
  %v43 = vld [vmem:[%s1 + $0x8] sm:$0xf]
  %v44 = vld [vmem:[%s1 + $0xc] sm:$0xf]
  %v45 = vld [vmem:[%s1 + $0x10] sm:$0xf]
  %v46 = vld [vmem:[%s1 + $0x14] sm:$0xf]
  %v47 = vld [vmem:[%s1 + $0x18] sm:$0xf]
  %v48 = vld [vmem:[%s1 + $0x1c] sm:$0xf]
  %v49 = vld [vmem:[%s1 + $0x20] sm:$0xf]
  %v50 = vld [vmem:[%s1 + $0x24] sm:$0xf]
  %v51 = vld [vmem:[%s1 + $0x28] sm:$0xf]
  %v52 = vld [vmem:[%s1 + $0x2c] sm:$0xf]
  %v53 = vld [vmem:[%s1 + $0x30] sm:$0xf]
  %v54 = vld [vmem:[%s1 + $0x34] sm:$0xf]
  %v55 = vld [vmem:[%s1 + $0x38] sm:$0xf]
  %v56 = vld [vmem:[%s1 + $0x3c] sm:$0xf]
  %v57 = vld [vmem:[%s1 + $0x40] sm:$0xf]
  %v58 = vld [vmem:[%s1 + $0x44] sm:$0xf]
  %v59 = vld [vmem:[%s1 + $0x48] sm:$0xf]
  %v60 = vld [vmem:[%s1 + $0x4c] sm:$0xf]
  %v61 = vld [vmem:[%s1 + $0x50] sm:$0xf]
  %v62 = vld [vmem:[%s1 + $0x54] sm:$0xf]
  %v63 = vld [vmem:[%s1 + $0x58] sm:$0xf]
  %v64 = vld [vmem:[%s1 + $0x5c] sm:$0xf]
  %v65 = vld [vmem:[%s1 + $0x60] sm:$0xf]
  %v66 = vld [vmem:[%s1 + $0x64] sm:$0xf]
  %v67 = vld [vmem:[%s1 + $0x68] sm:$0xf]
  %v68 = vld [vmem:[%s1 + $0x6c] sm:$0xf]
  %v69 = vld [vmem:[%s1 + $0x70] sm:$0xf]
  %v70 = vld [vmem:[%s1 + $0x74] sm:$0xf]
  %v71 = vld [vmem:[%s1 + $0x78] sm:$0xf]
  %v72 = vld [vmem:[%s1 + $0x7c] sm:$0xf]
  %v73 = vld [vmem:[%s3] sm:$0xf]
  %v74 = vld [vmem:[%s3 + $0x4] sm:$0xf]
  %v75 = vld [vmem:[%s3 + $0x8] sm:$0xf]
  %v76 = vld [vmem:[%s3 + $0xc] sm:$0xf]
  %v77 = vld [vmem:[%s3 + $0x10] sm:$0xf]
  %v78 = vld [vmem:[%s3 + $0x14] sm:$0xf]
  %v79 = vld [vmem:[%s3 + $0x18] sm:$0xf]
  %v80 = vld [vmem:[%s3 + $0x1c] sm:$0xf]
  %v81 = vld [vmem:[%s3 + $0x20] sm:$0xf]
  %v82 = vld [vmem:[%s3 + $0x24] sm:$0xf]
  %v83 = vld [vmem:[%s3 + $0x28] sm:$0xf]
  %v84 = vld [vmem:[%s3 + $0x2c] sm:$0xf]
  %v85 = vld [vmem:[%s3 + $0x30] sm:$0xf]
  %v86 = vld [vmem:[%s3 + $0x34] sm:$0xf]
  %v87 = vld [vmem:[%s3 + $0x38] sm:$0xf]
  %v88 = vld [vmem:[%s3 + $0x3c] sm:$0xf]
  %v89 = vld [vmem:[%s3 + $0x40] sm:$0xf]
  %v90 = vld [vmem:[%s3 + $0x44] sm:$0xf]
  %v91 = vld [vmem:[%s3 + $0x48] sm:$0xf]
  %v92 = vld [vmem:[%s3 + $0x4c] sm:$0xf]
  %v93 = vld [vmem:[%s3 + $0x50] sm:$0xf]
  %v94 = vld [vmem:[%s3 + $0x54] sm:$0xf]
  %v95 = vld [vmem:[%s3 + $0x58] sm:$0xf]
  %v96 = vld [vmem:[%s3 + $0x5c] sm:$0xf]
  %v97 = vld [vmem:[%s3 + $0x60] sm:$0xf]
  %v98 = vld [vmem:[%s3 + $0x64] sm:$0xf]
  %v99 = vld [vmem:[%s3 + $0x68] sm:$0xf]
  %v100 = vld [vmem:[%s3 + $0x6c] sm:$0xf]
  %v101 = vld [vmem:[%s3 + $0x70] sm:$0xf]
  %v102 = vld [vmem:[%s3 + $0x74] sm:$0xf]
  %v103 = vld [vmem:[%s3 + $0x78] sm:$0xf]
  %v104 = vld [vmem:[%s3 + $0x7c] sm:$0xf]
  %v105 = vld [vmem:[%s3 + $0x80] sm:$0xf]
  %v106 = vld [vmem:[%s3 + $0x84] sm:$0xf]
  %v107 = vld [vmem:[%s3 + $0x88] sm:$0xf]
  %v108 = vld [vmem:[%s3 + $0x8c] sm:$0xf]
  %v109 = vld [vmem:[%s3 + $0x90] sm:$0xf]
  %v110 = vld [vmem:[%s3 + $0x94] sm:$0xf]
  %v111 = vld [vmem:[%s3 + $0x98] sm:$0xf]
  %v112 = vld [vmem:[%s3 + $0x9c] sm:$0xf]
  %v113 = vld [vmem:[%s3 + $0xa0] sm:$0xf]
  %v114 = vld [vmem:[%s3 + $0xa4] sm:$0xf]
  %v115 = vld [vmem:[%s3 + $0xa8] sm:$0xf]
  %v116 = vld [vmem:[%s3 + $0xac] sm:$0xf]
  %v117 = vld [vmem:[%s3 + $0xb0] sm:$0xf]
  %v118 = vld [vmem:[%s3 + $0xb4] sm:$0xf]
  %v119 = vld [vmem:[%s3 + $0xb8] sm:$0xf]
  %v120 = vld [vmem:[%s3 + $0xbc] sm:$0xf]
  %v121 = vld [vmem:[%s3 + $0xc0] sm:$0xf]
  %v122 = vld [vmem:[%s3 + $0xc4] sm:$0xf]
  %v123 = vld [vmem:[%s3 + $0xc8] sm:$0xf]
  %v124 = vld [vmem:[%s3 + $0xcc] sm:$0xf]
  %v125 = vld [vmem:[%s3 + $0xd0] sm:$0xf]
  %v126 = vld [vmem:[%s3 + $0xd4] sm:$0xf]
  %v127 = vld [vmem:[%s3 + $0xd8] sm:$0xf]
  %v128 = vld [vmem:[%s3 + $0xdc] sm:$0xf]
  %v129 = vld [vmem:[%s3 + $0xe0] sm:$0xf]
  %v130 = vld [vmem:[%s3 + $0xe4] sm:$0xf]
  %v131 = vld [vmem:[%s3 + $0xe8] sm:$0xf]
  %v132 = vld [vmem:[%s3 + $0xec] sm:$0xf]
  %v133 = vld [vmem:[%s3 + $0xf0] sm:$0xf]
  %v134 = vld [vmem:[%s3 + $0xf4] sm:$0xf]
  %v135 = vld [vmem:[%s3 + $0xf8] sm:$0xf]
  %v136 = vld [vmem:[%s3 + $0xfc] sm:$0xf]
  %v137 = vld [vmem:[%s0] sm:$0xff]
  %v138 = vld [vmem:[%s0 + $0x8] sm:$0xff]
  %v139 = vld [vmem:[%s0 + $0x10] sm:$0xf]
  %v140 = vld [vmem:[%s0 + $0x14] sm:$0x11]
  %v141 = vld [vmem:[%s0 + $0x1c] sm:$0x11]
  %v142 = vld [vmem:[%s0 + $0x24] sm:$0x1]
  %v143 = vld [vmem:[%s0 + $0x28] sm:$0xff]
  %v144 = vld [vmem:[%s0 + $0x30] sm:$0xff]
  %v145 = vld [vmem:[%s0 + $0x38] sm:$0xf]
  %v146 = vld [vmem:[%s0 + $0x3c] sm:$0x11]
  %v147 = vld [vmem:[%s0 + $0x44] sm:$0x11]
  %v148 = vld [vmem:[%s0 + $0x4c] sm:$0x1]
  %v149 = vld [vmem:[%s0 + $0x50] sm:$0xff]
  %v150 = vld [vmem:[%s0 + $0x58] sm:$0xff]
  %v151 = vld [vmem:[%s0 + $0x60] sm:$0xf]
  %v152 = vld [vmem:[%s0 + $0x64] sm:$0x11]
  %v153 = vld [vmem:[%s0 + $0x6c] sm:$0x11]
  %v154 = vld [vmem:[%s0 + $0x74] sm:$0x1]
  %v155 = vld [vmem:[%s0 + $0x78] sm:$0xff]
  %v156 = vld [vmem:[%s0 + $0x80] sm:$0xff]
  %v157 = vld [vmem:[%s0 + $0x88] sm:$0xf]
  %v158 = vld [vmem:[%s0 + $0x8c] sm:$0x11]
  %v159 = vld [vmem:[%s0 + $0x94] sm:$0x11]
  %v160 = vld [vmem:[%s0 + $0x9c] sm:$0x1]
  %v161 = vld [vmem:[%s0 + $0xa0] sm:$0xff]
  %v162 = vld [vmem:[%s0 + $0xa8] sm:$0xff]
  %v163 = vld [vmem:[%s0 + $0xb0] sm:$0xf]
  %v164 = vld [vmem:[%s0 + $0xb4] sm:$0x11]
  %v165 = vld [vmem:[%s0 + $0xbc] sm:$0x11]
  %v166 = vld [vmem:[%s0 + $0xc4] sm:$0x1]
  %v167 = vld [vmem:[%s0 + $0xc8] sm:$0xff]
  %v168 = vld [vmem:[%s0 + $0xd0] sm:$0xff]
  %v169 = vld [vmem:[%s0 + $0xd8] sm:$0xf]
  %v170 = vld [vmem:[%s0 + $0xdc] sm:$0x11]
  %v171 = vld [vmem:[%s0 + $0xe4] sm:$0x11]
  %v172 = vld [vmem:[%s0 + $0xec] sm:$0x1]
  %v173 = vld [vmem:[%s0 + $0xf0] sm:$0xff]
  %v174 = vld [vmem:[%s0 + $0xf8] sm:$0xff]
  %v175 = vld [vmem:[%s0 + $0x100] sm:$0xf]
  %v176 = vld [vmem:[%s0 + $0x104] sm:$0x11]
  %v177 = vld [vmem:[%s0 + $0x10c] sm:$0x11]
  %v178 = vld [vmem:[%s0 + $0x114] sm:$0x1]
  %v179 = vld [vmem:[%s0 + $0x118] sm:$0xff]
  %v180 = vld [vmem:[%s0 + $0x120] sm:$0xff]
  %v181 = vld [vmem:[%s0 + $0x128] sm:$0xf]
  %v182 = vld [vmem:[%s0 + $0x12c] sm:$0x11]
  %v183 = vld [vmem:[%s0 + $0x134] sm:$0x11]
  %v184 = vld [vmem:[%s0 + $0x13c] sm:$0x1]
  %v201 = vunpack.c.l.b16 %v137
  %v202 = vunpack.c.l.b16 %v140
  %v203 = vunpack.c.l.b16 %v143
  %v204 = vunpack.c.l.b16 %v146
  %v205 = vunpack.c.l.b16 %v149
  %v206 = vunpack.c.l.b16 %v152
  %v207 = vunpack.c.l.b16 %v155
  %v208 = vunpack.c.l.b16 %v158
  %v209 = vunpack.c.l.b16 %v161
  %v210 = vunpack.c.l.b16 %v164
  %v211 = vunpack.c.l.b16 %v167
  %v212 = vunpack.c.l.b16 %v170
  %v213 = vunpack.c.l.b16 %v173
  %v214 = vunpack.c.l.b16 %v176
  %v215 = vunpack.c.l.b16 %v179
  %v216 = vunpack.c.l.b16 %v182
  %v217 = vpack.c.b16 %v202, %v201
  %v218 = vpack.c.b16 %v204, %v203
  %v219 = vpack.c.b16 %v206, %v205
  %v220 = vpack.c.b16 %v208, %v207
  %v221 = vpack.c.b16 %v210, %v209
  %v222 = vpack.c.b16 %v212, %v211
  %v223 = vpack.c.b16 %v214, %v213
  %v224 = vpack.c.b16 %v216, %v215
  %v226 = vshrl.u32 %v217, 16
  %v228 = vshll.u32 %v217, 16
  %v230 = vrot.slane %v228, 1
  %v231 = vor.u32 %v226, %v230
  %v233 = vshrl.u32 %v218, 16
  %v235 = vshll.u32 %v218, 16
  %v237 = vrot.slane %v235, 1
  %v238 = vor.u32 %v233, %v237
  %v240 = vshrl.u32 %v219, 16
  %v242 = vshll.u32 %v219, 16
  %v244 = vrot.slane %v242, 1
  %v245 = vor.u32 %v240, %v244
  %v247 = vshrl.u32 %v220, 16
  %v249 = vshll.u32 %v220, 16
  %v251 = vrot.slane %v249, 1
  %v252 = vor.u32 %v247, %v251
  %v254 = vshrl.u32 %v221, 16
  %v256 = vshll.u32 %v221, 16
  %v258 = vrot.slane %v256, 1
  %v259 = vor.u32 %v254, %v258
  %v261 = vshrl.u32 %v222, 16
  %v263 = vshll.u32 %v222, 16
  %v265 = vrot.slane %v263, 1
  %v266 = vor.u32 %v261, %v265
  %v268 = vshrl.u32 %v223, 16
  %v270 = vshll.u32 %v223, 16
  %v272 = vrot.slane %v270, 1
  %v273 = vor.u32 %v268, %v272
  %v275 = vshrl.u32 %v224, 16
  %v277 = vshll.u32 %v224, 16
  %v279 = vrot.slane %v277, 1
  %v280 = vor.u32 %v275, %v279
  %v281 = vunpack.c.l.b16 %v231
  %v282 = vunpack.c.l.b16 %v238
  %v283 = vunpack.c.l.b16 %v245
  %v284 = vunpack.c.l.b16 %v252
  %v285 = vunpack.c.l.b16 %v259
  %v286 = vunpack.c.l.b16 %v266
  %v287 = vunpack.c.l.b16 %v273
  %v288 = vunpack.c.l.b16 %v280
  %v289 = vpack.c.b16 %v203, %v201
  %v290 = vpack.c.b16 %v282, %v281
  %v291 = vpack.c.b16 %v207, %v205
  %v292 = vpack.c.b16 %v284, %v283
  %v293 = vpack.c.b16 %v211, %v209
  %v294 = vpack.c.b16 %v286, %v285
  %v295 = vpack.c.b16 %v215, %v213
  %v296 = vpack.c.b16 %v288, %v287
  %v337 = vunpack.c.l.b16 %v41
  %v338 = vunpack.c.l.b16 %v42
  %v339 = vunpack.c.l.b16 %v43
  %v340 = vunpack.c.l.b16 %v44
  %v341 = vunpack.c.l.b16 %v45
  %v342 = vunpack.c.l.b16 %v46
  %v343 = vunpack.c.l.b16 %v47
  %v344 = vunpack.c.l.b16 %v48
  %v345 = vunpack.c.l.b16 %v49
  %v346 = vunpack.c.l.b16 %v50
  %v347 = vunpack.c.l.b16 %v51
  %v348 = vunpack.c.l.b16 %v52
  %v349 = vunpack.c.l.b16 %v53
  %v350 = vunpack.c.l.b16 %v54
  %v351 = vunpack.c.l.b16 %v55
  %v352 = vunpack.c.l.b16 %v56
  %v353 = vunpack.c.l.b16 %v57
  %v354 = vunpack.c.l.b16 %v58
  %v355 = vunpack.c.l.b16 %v59
  %v356 = vunpack.c.l.b16 %v60
  %v357 = vunpack.c.l.b16 %v61
  %v358 = vunpack.c.l.b16 %v62
  %v359 = vunpack.c.l.b16 %v63
  %v360 = vunpack.c.l.b16 %v64
  %v361 = vunpack.c.l.b16 %v65
  %v362 = vunpack.c.l.b16 %v66
  %v363 = vunpack.c.l.b16 %v67
  %v364 = vunpack.c.l.b16 %v68
  %v365 = vunpack.c.l.b16 %v69
  %v366 = vunpack.c.l.b16 %v70
  %v367 = vunpack.c.l.b16 %v71
  %v368 = vunpack.c.l.b16 %v72
  %v369 = vpack.c.b16 %v338, %v337
  %v370 = vpack.c.b16 %v340, %v339
  %v371 = vpack.c.b16 %v342, %v341
  %v372 = vpack.c.b16 %v344, %v343
  %v373 = vpack.c.b16 %v346, %v345
  %v374 = vpack.c.b16 %v348, %v347
  %v375 = vpack.c.b16 %v350, %v349
  %v376 = vpack.c.b16 %v352, %v351
  %v377 = vpack.c.b16 %v354, %v353
  %v378 = vpack.c.b16 %v356, %v355
  %v379 = vpack.c.b16 %v358, %v357
  %v380 = vpack.c.b16 %v360, %v359
  %v381 = vpack.c.b16 %v362, %v361
  %v382 = vpack.c.b16 %v364, %v363
  %v383 = vpack.c.b16 %v366, %v365
  %v384 = vpack.c.b16 %v368, %v367
  %401 = vmatpush.bf16.msra.mxu0 %v376
  %402 = vmatpush.bf16.msra.mxu0 %v375
  %403 = vmatpush.bf16.msra.mxu0 %v374
  %404 = vmatpush.bf16.msra.mxu0 %v373
  %405 = vmatpush.bf16.msra.mxu0 %v372
  %406 = vmatpush.bf16.msra.mxu0 %v371
  %407 = vmatpush.bf16.msra.mxu0 %v370
  %408 = vmatpush.bf16.msra.mxu0 %v369
  %409 = vmatmul.bf16.gmra.mxu0 %v289
  %v410 = vpop.f32.mrf.mxu0
  %v411 = vadd.f32 0.0, %v410
  %v412 = vpop.f32.mrf.mxu0
  %v413 = vadd.f32 0.0, %v412
  %414 = vmatmul.bf16.gmra.mxu0 %v291
  %v415 = vpop.f32.mrf.mxu0
  %v416 = vadd.f32 0.0, %v415
  %v417 = vpop.f32.mrf.mxu0
  %v418 = vadd.f32 0.0, %v417
  %419 = vmatmul.bf16.gmra.mxu0 %v293
  %v420 = vpop.f32.mrf.mxu0
  %v421 = vadd.f32 0.0, %v420
  %v422 = vpop.f32.mrf.mxu0
  %v423 = vadd.f32 0.0, %v422
  %424 = vmatmul.bf16.gmra.mxu0 %v295
  %v425 = vpop.f32.mrf.mxu0
  %v426 = vadd.f32 0.0, %v425
  %v427 = vpop.f32.mrf.mxu0
  %v428 = vadd.f32 0.0, %v427
  %429 = vdwg.mxu0
  %430 = vmatpush.bf16.msra.mxu0 %v384
  %431 = vmatpush.bf16.msra.mxu0 %v383
  %432 = vmatpush.bf16.msra.mxu0 %v382
  %433 = vmatpush.bf16.msra.mxu0 %v381
  %434 = vmatpush.bf16.msra.mxu0 %v380
  %435 = vmatpush.bf16.msra.mxu0 %v379
  %436 = vmatpush.bf16.msra.mxu0 %v378
  %437 = vmatpush.bf16.msra.mxu0 %v377
  %438 = vmatmul.bf16.gmra.mxu0 %v290
  %v439 = vpop.f32.mrf.mxu0
  %v440 = vadd.f32 %v411, %v439
  %v441 = vpop.f32.mrf.mxu0
  %v442 = vadd.f32 %v413, %v441
  %443 = vmatmul.bf16.gmra.mxu0 %v292
  %v444 = vpop.f32.mrf.mxu0
  %v445 = vadd.f32 %v416, %v444
  %v446 = vpop.f32.mrf.mxu0
  %v447 = vadd.f32 %v418, %v446
  %448 = vmatmul.bf16.gmra.mxu0 %v294
  %v449 = vpop.f32.mrf.mxu0
  %v450 = vadd.f32 %v421, %v449
  %v451 = vpop.f32.mrf.mxu0
  %v452 = vadd.f32 %v423, %v451
  %453 = vmatmul.bf16.gmra.mxu0 %v296
  %v454 = vpop.f32.mrf.mxu0
  %v455 = vadd.f32 %v426, %v454
  %v456 = vpop.f32.mrf.mxu0
  %v457 = vadd.f32 %v428, %v456
  %458 = vdwg.mxu0
  %v459 = vunpack.c.h.b16 %v137
  %v460 = vunpack.c.h.b16 %v143
  %v461 = vunpack.c.h.b16 %v149
  %v462 = vunpack.c.h.b16 %v155
  %v463 = vunpack.c.h.b16 %v161
  %v464 = vunpack.c.h.b16 %v167
  %v465 = vunpack.c.h.b16 %v173
  %v466 = vunpack.c.h.b16 %v179
  %v467 = vpack.c.b16 %v201, %v201
  %v468 = vpack.c.b16 %v459, %v459
  %v469 = vpack.c.b16 %v203, %v203
  %v470 = vpack.c.b16 %v460, %v460
  %v471 = vpack.c.b16 %v205, %v205
  %v472 = vpack.c.b16 %v461, %v461
  %v473 = vpack.c.b16 %v207, %v207
  %v474 = vpack.c.b16 %v462, %v462
  %v475 = vpack.c.b16 %v209, %v209
  %v476 = vpack.c.b16 %v463, %v463
  %v477 = vpack.c.b16 %v211, %v211
  %v478 = vpack.c.b16 %v464, %v464
  %v479 = vpack.c.b16 %v213, %v213
  %v480 = vpack.c.b16 %v465, %v465
  %v481 = vpack.c.b16 %v215, %v215
  %v482 = vpack.c.b16 %v466, %v466
  %483 = vrot.lane.b32.xlu0 %v467, 64
  %v484 = vpop.permute.xlu0 %483
  %485 = vrot.lane.b32.xlu0 %v468, 64
  %v486 = vpop.permute.xlu0 %485
  %487 = vrot.lane.b32.xlu0 %v469, 64
  %v488 = vpop.permute.xlu0 %487
  %489 = vrot.lane.b32.xlu0 %v470, 64
  %v490 = vpop.permute.xlu0 %489
  %491 = vrot.lane.b32.xlu0 %v471, 64
  %v492 = vpop.permute.xlu0 %491
  %493 = vrot.lane.b32.xlu0 %v472, 64
  %v494 = vpop.permute.xlu0 %493
  %495 = vrot.lane.b32.xlu0 %v473, 64
  %v496 = vpop.permute.xlu0 %495
  %497 = vrot.lane.b32.xlu0 %v474, 64
  %v498 = vpop.permute.xlu0 %497
  %499 = vrot.lane.b32.xlu0 %v475, 64
  %v500 = vpop.permute.xlu0 %499
  %501 = vrot.lane.b32.xlu0 %v476, 64
  %v502 = vpop.permute.xlu0 %501
  %503 = vrot.lane.b32.xlu0 %v477, 64
  %v504 = vpop.permute.xlu0 %503
  %505 = vrot.lane.b32.xlu0 %v478, 64
  %v506 = vpop.permute.xlu0 %505
  %507 = vrot.lane.b32.xlu0 %v479, 64
  %v508 = vpop.permute.xlu0 %507
  %509 = vrot.lane.b32.xlu0 %v480, 64
  %v510 = vpop.permute.xlu0 %509
  %511 = vrot.lane.b32.xlu0 %v481, 64
  %v512 = vpop.permute.xlu0 %511
  %513 = vrot.lane.b32.xlu0 %v482, 64
  %v514 = vpop.permute.xlu0 %513
  %vm515 = vcmask 523264
  %v516 = vsel %vm515, %v484, %v486
  %v517 = vsel %vm515, %v488, %v490
  %v518 = vsel %vm515, %v492, %v494
  %v519 = vsel %vm515, %v496, %v498
  %v520 = vsel %vm515, %v500, %v502
  %v521 = vsel %vm515, %v504, %v506
  %v522 = vsel %vm515, %v508, %v510
  %v523 = vsel %vm515, %v512, %v514
  %v524 = vunpack.c.h.b16 %v140
  %v525 = vunpack.c.h.b16 %v146
  %v526 = vunpack.c.h.b16 %v152
  %v527 = vunpack.c.h.b16 %v158
  %v528 = vunpack.c.h.b16 %v164
  %v529 = vunpack.c.h.b16 %v170
  %v530 = vunpack.c.h.b16 %v176
  %v531 = vunpack.c.h.b16 %v182
  %v532 = vpack.c.b16 %v524, %v459
  %v533 = vpack.c.b16 %v525, %v460
  %v534 = vpack.c.b16 %v526, %v461
  %v535 = vpack.c.b16 %v527, %v462
  %v536 = vpack.c.b16 %v528, %v463
  %v537 = vpack.c.b16 %v529, %v464
  %v538 = vpack.c.b16 %v530, %v465
  %v539 = vpack.c.b16 %v531, %v466
  %v541 = vshrl.u32 %v532, 16
  %v543 = vshll.u32 %v532, 16
  %v545 = vrot.slane %v543, 1
  %v546 = vor.u32 %v541, %v545
  %v548 = vshrl.u32 %v533, 16
  %v550 = vshll.u32 %v533, 16
  %v552 = vrot.slane %v550, 1
  %v553 = vor.u32 %v548, %v552
  %v555 = vshrl.u32 %v534, 16
  %v557 = vshll.u32 %v534, 16
  %v559 = vrot.slane %v557, 1
  %v560 = vor.u32 %v555, %v559
  %v562 = vshrl.u32 %v535, 16
  %v564 = vshll.u32 %v535, 16
  %v566 = vrot.slane %v564, 1
  %v567 = vor.u32 %v562, %v566
  %v569 = vshrl.u32 %v536, 16
  %v571 = vshll.u32 %v536, 16
  %v573 = vrot.slane %v571, 1
  %v574 = vor.u32 %v569, %v573
  %v576 = vshrl.u32 %v537, 16
  %v578 = vshll.u32 %v537, 16
  %v580 = vrot.slane %v578, 1
  %v581 = vor.u32 %v576, %v580
  %v583 = vshrl.u32 %v538, 16
  %v585 = vshll.u32 %v538, 16
  %v587 = vrot.slane %v585, 1
  %v588 = vor.u32 %v583, %v587
  %v590 = vshrl.u32 %v539, 16
  %v592 = vshll.u32 %v539, 16
  %v594 = vrot.slane %v592, 1
  %v595 = vor.u32 %v590, %v594
  %596 = vrot.lane.b32.xlu0 %v231, 64
  %v597 = vpop.permute.xlu0 %596
  %598 = vrot.lane.b32.xlu0 %v546, 64
  %v599 = vpop.permute.xlu0 %598
  %600 = vrot.lane.b32.xlu0 %v238, 64
  %v601 = vpop.permute.xlu0 %600
  %602 = vrot.lane.b32.xlu0 %v553, 64
  %v603 = vpop.permute.xlu0 %602
  %604 = vrot.lane.b32.xlu0 %v245, 64
  %v605 = vpop.permute.xlu0 %604
  %606 = vrot.lane.b32.xlu0 %v560, 64
  %v607 = vpop.permute.xlu0 %606
  %608 = vrot.lane.b32.xlu0 %v252, 64
  %v609 = vpop.permute.xlu0 %608
  %610 = vrot.lane.b32.xlu0 %v567, 64
  %v611 = vpop.permute.xlu0 %610
  %612 = vrot.lane.b32.xlu0 %v259, 64
  %v613 = vpop.permute.xlu0 %612
  %614 = vrot.lane.b32.xlu0 %v574, 64
  %v615 = vpop.permute.xlu0 %614
  %616 = vrot.lane.b32.xlu0 %v266, 64
  %v617 = vpop.permute.xlu0 %616
  %618 = vrot.lane.b32.xlu0 %v581, 64
  %v619 = vpop.permute.xlu0 %618
  %620 = vrot.lane.b32.xlu0 %v273, 64
  %v621 = vpop.permute.xlu0 %620
  %622 = vrot.lane.b32.xlu0 %v588, 64
  %v623 = vpop.permute.xlu0 %622
  %624 = vrot.lane.b32.xlu0 %v280, 64
  %v625 = vpop.permute.xlu0 %624
  %626 = vrot.lane.b32.xlu0 %v595, 64
  %v627 = vpop.permute.xlu0 %626
  %v628 = vsel %vm515, %v597, %v599
  %v629 = vsel %vm515, %v601, %v603
  %v630 = vsel %vm515, %v605, %v607
  %v631 = vsel %vm515, %v609, %v611
  %v632 = vsel %vm515, %v613, %v615
  %v633 = vsel %vm515, %v617, %v619
  %v634 = vsel %vm515, %v621, %v623
  %v635 = vsel %vm515, %v625, %v627
  %v636 = vunpack.c.l.b16 %v516
  %v637 = vunpack.c.l.b16 %v628
  %v638 = vunpack.c.l.b16 %v517
  %v639 = vunpack.c.l.b16 %v629
  %v640 = vunpack.c.l.b16 %v518
  %v641 = vunpack.c.l.b16 %v630
  %v642 = vunpack.c.l.b16 %v519
  %v643 = vunpack.c.l.b16 %v631
  %v644 = vunpack.c.l.b16 %v520
  %v645 = vunpack.c.l.b16 %v632
  %v646 = vunpack.c.l.b16 %v521
  %v647 = vunpack.c.l.b16 %v633
  %v648 = vunpack.c.l.b16 %v522
  %v649 = vunpack.c.l.b16 %v634
  %v650 = vunpack.c.l.b16 %v523
  %v651 = vunpack.c.l.b16 %v635
  %v652 = vpack.c.b16 %v638, %v636
  %v653 = vpack.c.b16 %v639, %v637
  %v654 = vpack.c.b16 %v642, %v640
  %v655 = vpack.c.b16 %v643, %v641
  %v656 = vpack.c.b16 %v646, %v644
  %v657 = vpack.c.b16 %v647, %v645
  %v658 = vpack.c.b16 %v650, %v648
  %v659 = vpack.c.b16 %v651, %v649
  %668 = vmatpush.bf16.msra.mxu0 %v376
  %669 = vmatpush.bf16.msra.mxu0 %v375
  %670 = vmatpush.bf16.msra.mxu0 %v374
  %671 = vmatpush.bf16.msra.mxu0 %v373
  %672 = vmatpush.bf16.msra.mxu0 %v372
  %673 = vmatpush.bf16.msra.mxu0 %v371
  %674 = vmatpush.bf16.msra.mxu0 %v370
  %675 = vmatpush.bf16.msra.mxu0 %v369
  %676 = vmatmul.bf16.gmra.mxu0 %v652
  %v677 = vpop.f32.mrf.mxu0
  %v678 = vadd.f32 0.0, %v677
  %v679 = vpop.f32.mrf.mxu0
  %v680 = vadd.f32 0.0, %v679
  %681 = vmatmul.bf16.gmra.mxu0 %v654
  %v682 = vpop.f32.mrf.mxu0
  %v683 = vadd.f32 0.0, %v682
  %v684 = vpop.f32.mrf.mxu0
  %v685 = vadd.f32 0.0, %v684
  %686 = vmatmul.bf16.gmra.mxu0 %v656
  %v687 = vpop.f32.mrf.mxu0
  %v688 = vadd.f32 0.0, %v687
  %v689 = vpop.f32.mrf.mxu0
  %v690 = vadd.f32 0.0, %v689
  %691 = vmatmul.bf16.gmra.mxu0 %v658
  %v692 = vpop.f32.mrf.mxu0
  %v693 = vadd.f32 0.0, %v692
  %v694 = vpop.f32.mrf.mxu0
  %v695 = vadd.f32 0.0, %v694
  %696 = vdwg.mxu0
  %697 = vmatpush.bf16.msra.mxu0 %v384
  %698 = vmatpush.bf16.msra.mxu0 %v383
  %699 = vmatpush.bf16.msra.mxu0 %v382
  %700 = vmatpush.bf16.msra.mxu0 %v381
  %701 = vmatpush.bf16.msra.mxu0 %v380
  %702 = vmatpush.bf16.msra.mxu0 %v379
  %703 = vmatpush.bf16.msra.mxu0 %v378
  %704 = vmatpush.bf16.msra.mxu0 %v377
  %705 = vmatmul.bf16.gmra.mxu0 %v653
  %v706 = vpop.f32.mrf.mxu0
  %v707 = vadd.f32 %v678, %v706
  %v708 = vpop.f32.mrf.mxu0
  %v709 = vadd.f32 %v680, %v708
  %710 = vmatmul.bf16.gmra.mxu0 %v655
  %v711 = vpop.f32.mrf.mxu0
  %v712 = vadd.f32 %v683, %v711
  %v713 = vpop.f32.mrf.mxu0
  %v714 = vadd.f32 %v685, %v713
  %715 = vmatmul.bf16.gmra.mxu0 %v657
  %v716 = vpop.f32.mrf.mxu0
  %v717 = vadd.f32 %v688, %v716
  %v718 = vpop.f32.mrf.mxu0
  %v719 = vadd.f32 %v690, %v718
  %720 = vmatmul.bf16.gmra.mxu0 %v659
  %v721 = vpop.f32.mrf.mxu0
  %v722 = vadd.f32 %v693, %v721
  %v723 = vpop.f32.mrf.mxu0
  %v724 = vadd.f32 %v695, %v723
  %725 = vdwg.mxu0
  %v726 = vunpack.c.l.b16 %v546
  %v727 = vunpack.c.l.b16 %v553
  %v728 = vunpack.c.l.b16 %v560
  %v729 = vunpack.c.l.b16 %v567
  %v730 = vunpack.c.l.b16 %v574
  %v731 = vunpack.c.l.b16 %v581
  %v732 = vunpack.c.l.b16 %v588
  %v733 = vunpack.c.l.b16 %v595
  %v734 = vpack.c.b16 %v460, %v459
  %v735 = vpack.c.b16 %v727, %v726
  %v736 = vpack.c.b16 %v462, %v461
  %v737 = vpack.c.b16 %v729, %v728
  %v738 = vpack.c.b16 %v464, %v463
  %v739 = vpack.c.b16 %v731, %v730
  %v740 = vpack.c.b16 %v466, %v465
  %v741 = vpack.c.b16 %v733, %v732
  %750 = vmatpush.bf16.msra.mxu0 %v376
  %751 = vmatpush.bf16.msra.mxu0 %v375
  %752 = vmatpush.bf16.msra.mxu0 %v374
  %753 = vmatpush.bf16.msra.mxu0 %v373
  %754 = vmatpush.bf16.msra.mxu0 %v372
  %755 = vmatpush.bf16.msra.mxu0 %v371
  %756 = vmatpush.bf16.msra.mxu0 %v370
  %757 = vmatpush.bf16.msra.mxu0 %v369
  %758 = vmatmul.bf16.gmra.mxu0 %v734
  %v759 = vpop.f32.mrf.mxu0
  %v760 = vadd.f32 0.0, %v759
  %v761 = vpop.f32.mrf.mxu0
  %v762 = vadd.f32 0.0, %v761
  %763 = vmatmul.bf16.gmra.mxu0 %v736
  %v764 = vpop.f32.mrf.mxu0
  %v765 = vadd.f32 0.0, %v764
  %v766 = vpop.f32.mrf.mxu0
  %v767 = vadd.f32 0.0, %v766
  %768 = vmatmul.bf16.gmra.mxu0 %v738
  %v769 = vpop.f32.mrf.mxu0
  %v770 = vadd.f32 0.0, %v769
  %v771 = vpop.f32.mrf.mxu0
  %v772 = vadd.f32 0.0, %v771
  %773 = vmatmul.bf16.gmra.mxu0 %v740
  %v774 = vpop.f32.mrf.mxu0
  %v775 = vadd.f32 0.0, %v774
  %v776 = vpop.f32.mrf.mxu0
  %v777 = vadd.f32 0.0, %v776
  %778 = vdwg.mxu0
  %779 = vmatpush.bf16.msra.mxu0 %v384
  %780 = vmatpush.bf16.msra.mxu0 %v383
  %781 = vmatpush.bf16.msra.mxu0 %v382
  %782 = vmatpush.bf16.msra.mxu0 %v381
  %783 = vmatpush.bf16.msra.mxu0 %v380
  %784 = vmatpush.bf16.msra.mxu0 %v379
  %785 = vmatpush.bf16.msra.mxu0 %v378
  %786 = vmatpush.bf16.msra.mxu0 %v377
  %787 = vmatmul.bf16.gmra.mxu0 %v735
  %v788 = vpop.f32.mrf.mxu0
  %v789 = vadd.f32 %v760, %v788
  %v790 = vpop.f32.mrf.mxu0
  %v791 = vadd.f32 %v762, %v790
  %792 = vmatmul.bf16.gmra.mxu0 %v737
  %v793 = vpop.f32.mrf.mxu0
  %v794 = vadd.f32 %v765, %v793
  %v795 = vpop.f32.mrf.mxu0
  %v796 = vadd.f32 %v767, %v795
  %797 = vmatmul.bf16.gmra.mxu0 %v739
  %v798 = vpop.f32.mrf.mxu0
  %v799 = vadd.f32 %v770, %v798
  %v800 = vpop.f32.mrf.mxu0
  %v801 = vadd.f32 %v772, %v800
  %802 = vmatmul.bf16.gmra.mxu0 %v741
  %v803 = vpop.f32.mrf.mxu0
  %v804 = vadd.f32 %v775, %v803
  %v805 = vpop.f32.mrf.mxu0
  %v806 = vadd.f32 %v777, %v805
  %807 = vdwg.mxu0
  %v816 = vunpack.c.l.b16 %v138
  %v817 = vunpack.c.l.b16 %v144
  %v818 = vunpack.c.l.b16 %v150
  %v819 = vunpack.c.l.b16 %v156
  %v820 = vunpack.c.l.b16 %v162
  %v821 = vunpack.c.l.b16 %v168
  %v822 = vunpack.c.l.b16 %v174
  %v823 = vunpack.c.l.b16 %v180
  %v824 = vpack.c.b16 %v816, %v816
  %v825 = vpack.c.b16 %v817, %v817
  %v826 = vpack.c.b16 %v818, %v818
  %v827 = vpack.c.b16 %v819, %v819
  %v828 = vpack.c.b16 %v820, %v820
  %v829 = vpack.c.b16 %v821, %v821
  %v830 = vpack.c.b16 %v822, %v822
  %v831 = vpack.c.b16 %v823, %v823
  %832 = vrot.lane.b32.xlu0 %v824, 64
  %v833 = vpop.permute.xlu0 %832
  %834 = vrot.lane.b32.xlu0 %v825, 64
  %v835 = vpop.permute.xlu0 %834
  %836 = vrot.lane.b32.xlu0 %v826, 64
  %v837 = vpop.permute.xlu0 %836
  %838 = vrot.lane.b32.xlu0 %v827, 64
  %v839 = vpop.permute.xlu0 %838
  %840 = vrot.lane.b32.xlu0 %v828, 64
  %v841 = vpop.permute.xlu0 %840
  %842 = vrot.lane.b32.xlu0 %v829, 64
  %v843 = vpop.permute.xlu0 %842
  %844 = vrot.lane.b32.xlu0 %v830, 64
  %v845 = vpop.permute.xlu0 %844
  %846 = vrot.lane.b32.xlu0 %v831, 64
  %v847 = vpop.permute.xlu0 %846
  %v848 = vsel %vm515, %v486, %v833
  %v849 = vsel %vm515, %v490, %v835
  %v850 = vsel %vm515, %v494, %v837
  %v851 = vsel %vm515, %v498, %v839
  %v852 = vsel %vm515, %v502, %v841
  %v853 = vsel %vm515, %v506, %v843
  %v854 = vsel %vm515, %v510, %v845
  %v855 = vsel %vm515, %v514, %v847
  %v864 = vunpack.c.l.b16 %v141
  %v865 = vunpack.c.l.b16 %v147
  %v866 = vunpack.c.l.b16 %v153
  %v867 = vunpack.c.l.b16 %v159
  %v868 = vunpack.c.l.b16 %v165
  %v869 = vunpack.c.l.b16 %v171
  %v870 = vunpack.c.l.b16 %v177
  %v871 = vunpack.c.l.b16 %v183
  %v872 = vpack.c.b16 %v864, %v816
  %v873 = vpack.c.b16 %v865, %v817
  %v874 = vpack.c.b16 %v866, %v818
  %v875 = vpack.c.b16 %v867, %v819
  %v876 = vpack.c.b16 %v868, %v820
  %v877 = vpack.c.b16 %v869, %v821
  %v878 = vpack.c.b16 %v870, %v822
  %v879 = vpack.c.b16 %v871, %v823
  %v881 = vshrl.u32 %v872, 16
  %v883 = vshll.u32 %v872, 16
  %v885 = vrot.slane %v883, 1
  %v886 = vor.u32 %v881, %v885
  %v888 = vshrl.u32 %v873, 16
  %v890 = vshll.u32 %v873, 16
  %v892 = vrot.slane %v890, 1
  %v893 = vor.u32 %v888, %v892
  %v895 = vshrl.u32 %v874, 16
  %v897 = vshll.u32 %v874, 16
  %v899 = vrot.slane %v897, 1
  %v900 = vor.u32 %v895, %v899
  %v902 = vshrl.u32 %v875, 16
  %v904 = vshll.u32 %v875, 16
  %v906 = vrot.slane %v904, 1
  %v907 = vor.u32 %v902, %v906
  %v909 = vshrl.u32 %v876, 16
  %v911 = vshll.u32 %v876, 16
  %v913 = vrot.slane %v911, 1
  %v914 = vor.u32 %v909, %v913
  %v916 = vshrl.u32 %v877, 16
  %v918 = vshll.u32 %v877, 16
  %v920 = vrot.slane %v918, 1
  %v921 = vor.u32 %v916, %v920
  %v923 = vshrl.u32 %v878, 16
  %v925 = vshll.u32 %v878, 16
  %v927 = vrot.slane %v925, 1
  %v928 = vor.u32 %v923, %v927
  %v930 = vshrl.u32 %v879, 16
  %v932 = vshll.u32 %v879, 16
  %v934 = vrot.slane %v932, 1
  %v935 = vor.u32 %v930, %v934
  %936 = vrot.lane.b32.xlu0 %v886, 64
  %v937 = vpop.permute.xlu0 %936
  %938 = vrot.lane.b32.xlu0 %v893, 64
  %v939 = vpop.permute.xlu0 %938
  %940 = vrot.lane.b32.xlu0 %v900, 64
  %v941 = vpop.permute.xlu0 %940
  %942 = vrot.lane.b32.xlu0 %v907, 64
  %v943 = vpop.permute.xlu0 %942
  %944 = vrot.lane.b32.xlu0 %v914, 64
  %v945 = vpop.permute.xlu0 %944
  %946 = vrot.lane.b32.xlu0 %v921, 64
  %v947 = vpop.permute.xlu0 %946
  %948 = vrot.lane.b32.xlu0 %v928, 64
  %v949 = vpop.permute.xlu0 %948
  %950 = vrot.lane.b32.xlu0 %v935, 64
  %v951 = vpop.permute.xlu0 %950
  %v952 = vsel %vm515, %v599, %v937
  %v953 = vsel %vm515, %v603, %v939
  %v954 = vsel %vm515, %v607, %v941
  %v955 = vsel %vm515, %v611, %v943
  %v956 = vsel %vm515, %v615, %v945
  %v957 = vsel %vm515, %v619, %v947
  %v958 = vsel %vm515, %v623, %v949
  %v959 = vsel %vm515, %v627, %v951
  %v960 = vunpack.c.l.b16 %v848
  %v961 = vunpack.c.l.b16 %v952
  %v962 = vunpack.c.l.b16 %v849
  %v963 = vunpack.c.l.b16 %v953
  %v964 = vunpack.c.l.b16 %v850
  %v965 = vunpack.c.l.b16 %v954
  %v966 = vunpack.c.l.b16 %v851
  %v967 = vunpack.c.l.b16 %v955
  %v968 = vunpack.c.l.b16 %v852
  %v969 = vunpack.c.l.b16 %v956
  %v970 = vunpack.c.l.b16 %v853
  %v971 = vunpack.c.l.b16 %v957
  %v972 = vunpack.c.l.b16 %v854
  %v973 = vunpack.c.l.b16 %v958
  %v974 = vunpack.c.l.b16 %v855
  %v975 = vunpack.c.l.b16 %v959
  %v976 = vpack.c.b16 %v962, %v960
  %v977 = vpack.c.b16 %v963, %v961
  %v978 = vpack.c.b16 %v966, %v964
  %v979 = vpack.c.b16 %v967, %v965
  %v980 = vpack.c.b16 %v970, %v968
  %v981 = vpack.c.b16 %v971, %v969
  %v982 = vpack.c.b16 %v974, %v972
  %v983 = vpack.c.b16 %v975, %v973
  %992 = vmatpush.bf16.msra.mxu0 %v376
  %993 = vmatpush.bf16.msra.mxu0 %v375
  %994 = vmatpush.bf16.msra.mxu0 %v374
  %995 = vmatpush.bf16.msra.mxu0 %v373
  %996 = vmatpush.bf16.msra.mxu0 %v372
  %997 = vmatpush.bf16.msra.mxu0 %v371
  %998 = vmatpush.bf16.msra.mxu0 %v370
  %999 = vmatpush.bf16.msra.mxu0 %v369
  %1000 = vmatmul.bf16.gmra.mxu0 %v976
  %v1001 = vpop.f32.mrf.mxu0
  %v1002 = vadd.f32 0.0, %v1001
  %v1003 = vpop.f32.mrf.mxu0
  %v1004 = vadd.f32 0.0, %v1003
  %1005 = vmatmul.bf16.gmra.mxu0 %v978
  %v1006 = vpop.f32.mrf.mxu0
  %v1007 = vadd.f32 0.0, %v1006
  %v1008 = vpop.f32.mrf.mxu0
  %v1009 = vadd.f32 0.0, %v1008
  %1010 = vmatmul.bf16.gmra.mxu0 %v980
  %v1011 = vpop.f32.mrf.mxu0
  %v1012 = vadd.f32 0.0, %v1011
  %v1013 = vpop.f32.mrf.mxu0
  %v1014 = vadd.f32 0.0, %v1013
  %1015 = vmatmul.bf16.gmra.mxu0 %v982
  %v1016 = vpop.f32.mrf.mxu0
  %v1017 = vadd.f32 0.0, %v1016
  %v1018 = vpop.f32.mrf.mxu0
  %v1019 = vadd.f32 0.0, %v1018
  %1020 = vdwg.mxu0
  %1021 = vmatpush.bf16.msra.mxu0 %v384
  %1022 = vmatpush.bf16.msra.mxu0 %v383
  %1023 = vmatpush.bf16.msra.mxu0 %v382
  %1024 = vmatpush.bf16.msra.mxu0 %v381
  %1025 = vmatpush.bf16.msra.mxu0 %v380
  %1026 = vmatpush.bf16.msra.mxu0 %v379
  %1027 = vmatpush.bf16.msra.mxu0 %v378
  %1028 = vmatpush.bf16.msra.mxu0 %v377
  %1029 = vmatmul.bf16.gmra.mxu0 %v977
  %v1030 = vpop.f32.mrf.mxu0
  %v1031 = vadd.f32 %v1002, %v1030
  %v1032 = vpop.f32.mrf.mxu0
  %v1033 = vadd.f32 %v1004, %v1032
  %1034 = vmatmul.bf16.gmra.mxu0 %v979
  %v1035 = vpop.f32.mrf.mxu0
  %v1036 = vadd.f32 %v1007, %v1035
  %v1037 = vpop.f32.mrf.mxu0
  %v1038 = vadd.f32 %v1009, %v1037
  %1039 = vmatmul.bf16.gmra.mxu0 %v981
  %v1040 = vpop.f32.mrf.mxu0
  %v1041 = vadd.f32 %v1012, %v1040
  %v1042 = vpop.f32.mrf.mxu0
  %v1043 = vadd.f32 %v1014, %v1042
  %1044 = vmatmul.bf16.gmra.mxu0 %v983
  %v1045 = vpop.f32.mrf.mxu0
  %v1046 = vadd.f32 %v1017, %v1045
  %v1047 = vpop.f32.mrf.mxu0
  %v1048 = vadd.f32 %v1019, %v1047
  %1049 = vdwg.mxu0
  %v1050 = vunpack.c.l.b16 %v886
  %v1051 = vunpack.c.l.b16 %v893
  %v1052 = vunpack.c.l.b16 %v900
  %v1053 = vunpack.c.l.b16 %v907
  %v1054 = vunpack.c.l.b16 %v914
  %v1055 = vunpack.c.l.b16 %v921
  %v1056 = vunpack.c.l.b16 %v928
  %v1057 = vunpack.c.l.b16 %v935
  %v1058 = vpack.c.b16 %v817, %v816
  %v1059 = vpack.c.b16 %v1051, %v1050
  %v1060 = vpack.c.b16 %v819, %v818
  %v1061 = vpack.c.b16 %v1053, %v1052
  %v1062 = vpack.c.b16 %v821, %v820
  %v1063 = vpack.c.b16 %v1055, %v1054
  %v1064 = vpack.c.b16 %v823, %v822
  %v1065 = vpack.c.b16 %v1057, %v1056
  %1074 = vmatpush.bf16.msra.mxu0 %v376
  %1075 = vmatpush.bf16.msra.mxu0 %v375
  %1076 = vmatpush.bf16.msra.mxu0 %v374
  %1077 = vmatpush.bf16.msra.mxu0 %v373
  %1078 = vmatpush.bf16.msra.mxu0 %v372
  %1079 = vmatpush.bf16.msra.mxu0 %v371
  %1080 = vmatpush.bf16.msra.mxu0 %v370
  %1081 = vmatpush.bf16.msra.mxu0 %v369
  %1082 = vmatmul.bf16.gmra.mxu0 %v1058
  %v1083 = vpop.f32.mrf.mxu0
  %v1084 = vadd.f32 0.0, %v1083
  %v1085 = vpop.f32.mrf.mxu0
  %v1086 = vadd.f32 0.0, %v1085
  %1087 = vmatmul.bf16.gmra.mxu0 %v1060
  %v1088 = vpop.f32.mrf.mxu0
  %v1089 = vadd.f32 0.0, %v1088
  %v1090 = vpop.f32.mrf.mxu0
  %v1091 = vadd.f32 0.0, %v1090
  %1092 = vmatmul.bf16.gmra.mxu0 %v1062
  %v1093 = vpop.f32.mrf.mxu0
  %v1094 = vadd.f32 0.0, %v1093
  %v1095 = vpop.f32.mrf.mxu0
  %v1096 = vadd.f32 0.0, %v1095
  %1097 = vmatmul.bf16.gmra.mxu0 %v1064
  %v1098 = vpop.f32.mrf.mxu0
  %v1099 = vadd.f32 0.0, %v1098
  %v1100 = vpop.f32.mrf.mxu0
  %v1101 = vadd.f32 0.0, %v1100
  %1102 = vdwg.mxu0
  %1103 = vmatpush.bf16.msra.mxu0 %v384
  %1104 = vmatpush.bf16.msra.mxu0 %v383
  %1105 = vmatpush.bf16.msra.mxu0 %v382
  %1106 = vmatpush.bf16.msra.mxu0 %v381
  %1107 = vmatpush.bf16.msra.mxu0 %v380
  %1108 = vmatpush.bf16.msra.mxu0 %v379
  %1109 = vmatpush.bf16.msra.mxu0 %v378
  %1110 = vmatpush.bf16.msra.mxu0 %v377
  %1111 = vmatmul.bf16.gmra.mxu0 %v1059
  %v1112 = vpop.f32.mrf.mxu0
  %v1113 = vadd.f32 %v1084, %v1112
  %v1114 = vpop.f32.mrf.mxu0
  %v1115 = vadd.f32 %v1086, %v1114
  %1116 = vmatmul.bf16.gmra.mxu0 %v1061
  %v1117 = vpop.f32.mrf.mxu0
  %v1118 = vadd.f32 %v1089, %v1117
  %v1119 = vpop.f32.mrf.mxu0
  %v1120 = vadd.f32 %v1091, %v1119
  %1121 = vmatmul.bf16.gmra.mxu0 %v1063
  %v1122 = vpop.f32.mrf.mxu0
  %v1123 = vadd.f32 %v1094, %v1122
  %v1124 = vpop.f32.mrf.mxu0
  %v1125 = vadd.f32 %v1096, %v1124
  %1126 = vmatmul.bf16.gmra.mxu0 %v1065
  %v1127 = vpop.f32.mrf.mxu0
  %v1128 = vadd.f32 %v1099, %v1127
  %v1129 = vpop.f32.mrf.mxu0
  %v1130 = vadd.f32 %v1101, %v1129
  %1131 = vdwg.mxu0
  %v1132 = vunpack.c.h.b16 %v138
  %v1133 = vunpack.c.h.b16 %v144
  %v1134 = vunpack.c.h.b16 %v150
  %v1135 = vunpack.c.h.b16 %v156
  %v1136 = vunpack.c.h.b16 %v162
  %v1137 = vunpack.c.h.b16 %v168
  %v1138 = vunpack.c.h.b16 %v174
  %v1139 = vunpack.c.h.b16 %v180
  %v1140 = vpack.c.b16 %v1132, %v1132
  %v1141 = vpack.c.b16 %v1133, %v1133
  %v1142 = vpack.c.b16 %v1134, %v1134
  %v1143 = vpack.c.b16 %v1135, %v1135
  %v1144 = vpack.c.b16 %v1136, %v1136
  %v1145 = vpack.c.b16 %v1137, %v1137
  %v1146 = vpack.c.b16 %v1138, %v1138
  %v1147 = vpack.c.b16 %v1139, %v1139
  %1148 = vrot.lane.b32.xlu0 %v1140, 64
  %v1149 = vpop.permute.xlu0 %1148
  %1150 = vrot.lane.b32.xlu0 %v1141, 64
  %v1151 = vpop.permute.xlu0 %1150
  %1152 = vrot.lane.b32.xlu0 %v1142, 64
  %v1153 = vpop.permute.xlu0 %1152
  %1154 = vrot.lane.b32.xlu0 %v1143, 64
  %v1155 = vpop.permute.xlu0 %1154
  %1156 = vrot.lane.b32.xlu0 %v1144, 64
  %v1157 = vpop.permute.xlu0 %1156
  %1158 = vrot.lane.b32.xlu0 %v1145, 64
  %v1159 = vpop.permute.xlu0 %1158
  %1160 = vrot.lane.b32.xlu0 %v1146, 64
  %v1161 = vpop.permute.xlu0 %1160
  %1162 = vrot.lane.b32.xlu0 %v1147, 64
  %v1163 = vpop.permute.xlu0 %1162
  %v1164 = vsel %vm515, %v833, %v1149
  %v1165 = vsel %vm515, %v835, %v1151
  %v1166 = vsel %vm515, %v837, %v1153
  %v1167 = vsel %vm515, %v839, %v1155
  %v1168 = vsel %vm515, %v841, %v1157
  %v1169 = vsel %vm515, %v843, %v1159
  %v1170 = vsel %vm515, %v845, %v1161
  %v1171 = vsel %vm515, %v847, %v1163
  %v1172 = vunpack.c.h.b16 %v141
  %v1173 = vunpack.c.h.b16 %v147
  %v1174 = vunpack.c.h.b16 %v153
  %v1175 = vunpack.c.h.b16 %v159
  %v1176 = vunpack.c.h.b16 %v165
  %v1177 = vunpack.c.h.b16 %v171
  %v1178 = vunpack.c.h.b16 %v177
  %v1179 = vunpack.c.h.b16 %v183
  %v1180 = vpack.c.b16 %v1172, %v1132
  %v1181 = vpack.c.b16 %v1173, %v1133
  %v1182 = vpack.c.b16 %v1174, %v1134
  %v1183 = vpack.c.b16 %v1175, %v1135
  %v1184 = vpack.c.b16 %v1176, %v1136
  %v1185 = vpack.c.b16 %v1177, %v1137
  %v1186 = vpack.c.b16 %v1178, %v1138
  %v1187 = vpack.c.b16 %v1179, %v1139
  %v1189 = vshrl.u32 %v1180, 16
  %v1191 = vshll.u32 %v1180, 16
  %v1193 = vrot.slane %v1191, 1
  %v1194 = vor.u32 %v1189, %v1193
  %v1196 = vshrl.u32 %v1181, 16
  %v1198 = vshll.u32 %v1181, 16
  %v1200 = vrot.slane %v1198, 1
  %v1201 = vor.u32 %v1196, %v1200
  %v1203 = vshrl.u32 %v1182, 16
  %v1205 = vshll.u32 %v1182, 16
  %v1207 = vrot.slane %v1205, 1
  %v1208 = vor.u32 %v1203, %v1207
  %v1210 = vshrl.u32 %v1183, 16
  %v1212 = vshll.u32 %v1183, 16
  %v1214 = vrot.slane %v1212, 1
  %v1215 = vor.u32 %v1210, %v1214
  %v1217 = vshrl.u32 %v1184, 16
  %v1219 = vshll.u32 %v1184, 16
  %v1221 = vrot.slane %v1219, 1
  %v1222 = vor.u32 %v1217, %v1221
  %v1224 = vshrl.u32 %v1185, 16
  %v1226 = vshll.u32 %v1185, 16
  %v1228 = vrot.slane %v1226, 1
  %v1229 = vor.u32 %v1224, %v1228
  %v1231 = vshrl.u32 %v1186, 16
  %v1233 = vshll.u32 %v1186, 16
  %v1235 = vrot.slane %v1233, 1
  %v1236 = vor.u32 %v1231, %v1235
  %v1238 = vshrl.u32 %v1187, 16
  %v1240 = vshll.u32 %v1187, 16
  %v1242 = vrot.slane %v1240, 1
  %v1243 = vor.u32 %v1238, %v1242
  %1244 = vrot.lane.b32.xlu0 %v1194, 64
  %v1245 = vpop.permute.xlu0 %1244
  %1246 = vrot.lane.b32.xlu0 %v1201, 64
  %v1247 = vpop.permute.xlu0 %1246
  %1248 = vrot.lane.b32.xlu0 %v1208, 64
  %v1249 = vpop.permute.xlu0 %1248
  %1250 = vrot.lane.b32.xlu0 %v1215, 64
  %v1251 = vpop.permute.xlu0 %1250
  %1252 = vrot.lane.b32.xlu0 %v1222, 64
  %v1253 = vpop.permute.xlu0 %1252
  %1254 = vrot.lane.b32.xlu0 %v1229, 64
  %v1255 = vpop.permute.xlu0 %1254
  %1256 = vrot.lane.b32.xlu0 %v1236, 64
  %v1257 = vpop.permute.xlu0 %1256
  %1258 = vrot.lane.b32.xlu0 %v1243, 64
  %v1259 = vpop.permute.xlu0 %1258
  %v1260 = vsel %vm515, %v937, %v1245
  %v1261 = vsel %vm515, %v939, %v1247
  %v1262 = vsel %vm515, %v941, %v1249
  %v1263 = vsel %vm515, %v943, %v1251
  %v1264 = vsel %vm515, %v945, %v1253
  %v1265 = vsel %vm515, %v947, %v1255
  %v1266 = vsel %vm515, %v949, %v1257
  %v1267 = vsel %vm515, %v951, %v1259
  %v1268 = vunpack.c.l.b16 %v1164
  %v1269 = vunpack.c.l.b16 %v1260
  %v1270 = vunpack.c.l.b16 %v1165
  %v1271 = vunpack.c.l.b16 %v1261
  %v1272 = vunpack.c.l.b16 %v1166
  %v1273 = vunpack.c.l.b16 %v1262
  %v1274 = vunpack.c.l.b16 %v1167
  %v1275 = vunpack.c.l.b16 %v1263
  %v1276 = vunpack.c.l.b16 %v1168
  %v1277 = vunpack.c.l.b16 %v1264
  %v1278 = vunpack.c.l.b16 %v1169
  %v1279 = vunpack.c.l.b16 %v1265
  %v1280 = vunpack.c.l.b16 %v1170
  %v1281 = vunpack.c.l.b16 %v1266
  %v1282 = vunpack.c.l.b16 %v1171
  %v1283 = vunpack.c.l.b16 %v1267
  %v1284 = vpack.c.b16 %v1270, %v1268
  %v1285 = vpack.c.b16 %v1271, %v1269
  %v1286 = vpack.c.b16 %v1274, %v1272
  %v1287 = vpack.c.b16 %v1275, %v1273
  %v1288 = vpack.c.b16 %v1278, %v1276
  %v1289 = vpack.c.b16 %v1279, %v1277
  %v1290 = vpack.c.b16 %v1282, %v1280
  %v1291 = vpack.c.b16 %v1283, %v1281
  %1300 = vmatpush.bf16.msra.mxu0 %v376
  %1301 = vmatpush.bf16.msra.mxu0 %v375
  %1302 = vmatpush.bf16.msra.mxu0 %v374
  %1303 = vmatpush.bf16.msra.mxu0 %v373
  %1304 = vmatpush.bf16.msra.mxu0 %v372
  %1305 = vmatpush.bf16.msra.mxu0 %v371
  %1306 = vmatpush.bf16.msra.mxu0 %v370
  %1307 = vmatpush.bf16.msra.mxu0 %v369
  %1308 = vmatmul.bf16.gmra.mxu0 %v1284
  %v1309 = vpop.f32.mrf.mxu0
  %v1310 = vadd.f32 0.0, %v1309
  %v1311 = vpop.f32.mrf.mxu0
  %v1312 = vadd.f32 0.0, %v1311
  %1313 = vmatmul.bf16.gmra.mxu0 %v1286
  %v1314 = vpop.f32.mrf.mxu0
  %v1315 = vadd.f32 0.0, %v1314
  %v1316 = vpop.f32.mrf.mxu0
  %v1317 = vadd.f32 0.0, %v1316
  %1318 = vmatmul.bf16.gmra.mxu0 %v1288
  %v1319 = vpop.f32.mrf.mxu0
  %v1320 = vadd.f32 0.0, %v1319
  %v1321 = vpop.f32.mrf.mxu0
  %v1322 = vadd.f32 0.0, %v1321
  %1323 = vmatmul.bf16.gmra.mxu0 %v1290
  %v1324 = vpop.f32.mrf.mxu0
  %v1325 = vadd.f32 0.0, %v1324
  %v1326 = vpop.f32.mrf.mxu0
  %v1327 = vadd.f32 0.0, %v1326
  %1328 = vdwg.mxu0
  %1329 = vmatpush.bf16.msra.mxu0 %v384
  %1330 = vmatpush.bf16.msra.mxu0 %v383
  %1331 = vmatpush.bf16.msra.mxu0 %v382
  %1332 = vmatpush.bf16.msra.mxu0 %v381
  %1333 = vmatpush.bf16.msra.mxu0 %v380
  %1334 = vmatpush.bf16.msra.mxu0 %v379
  %1335 = vmatpush.bf16.msra.mxu0 %v378
  %1336 = vmatpush.bf16.msra.mxu0 %v377
  %1337 = vmatmul.bf16.gmra.mxu0 %v1285
  %v1338 = vpop.f32.mrf.mxu0
  %v1339 = vadd.f32 %v1310, %v1338
  %v1340 = vpop.f32.mrf.mxu0
  %v1341 = vadd.f32 %v1312, %v1340
  %1342 = vmatmul.bf16.gmra.mxu0 %v1287
  %v1343 = vpop.f32.mrf.mxu0
  %v1344 = vadd.f32 %v1315, %v1343
  %v1345 = vpop.f32.mrf.mxu0
  %v1346 = vadd.f32 %v1317, %v1345
  %1347 = vmatmul.bf16.gmra.mxu0 %v1289
  %v1348 = vpop.f32.mrf.mxu0
  %v1349 = vadd.f32 %v1320, %v1348
  %v1350 = vpop.f32.mrf.mxu0
  %v1351 = vadd.f32 %v1322, %v1350
  %1352 = vmatmul.bf16.gmra.mxu0 %v1291
  %v1353 = vpop.f32.mrf.mxu0
  %v1354 = vadd.f32 %v1325, %v1353
  %v1355 = vpop.f32.mrf.mxu0
  %v1356 = vadd.f32 %v1327, %v1355
  %1357 = vdwg.mxu0
  %v1358 = vunpack.c.l.b16 %v1194
  %v1359 = vunpack.c.l.b16 %v1201
  %v1360 = vunpack.c.l.b16 %v1208
  %v1361 = vunpack.c.l.b16 %v1215
  %v1362 = vunpack.c.l.b16 %v1222
  %v1363 = vunpack.c.l.b16 %v1229
  %v1364 = vunpack.c.l.b16 %v1236
  %v1365 = vunpack.c.l.b16 %v1243
  %v1366 = vpack.c.b16 %v1133, %v1132
  %v1367 = vpack.c.b16 %v1359, %v1358
  %v1368 = vpack.c.b16 %v1135, %v1134
  %v1369 = vpack.c.b16 %v1361, %v1360
  %v1370 = vpack.c.b16 %v1137, %v1136
  %v1371 = vpack.c.b16 %v1363, %v1362
  %v1372 = vpack.c.b16 %v1139, %v1138
  %v1373 = vpack.c.b16 %v1365, %v1364
  %1382 = vmatpush.bf16.msra.mxu0 %v376
  %1383 = vmatpush.bf16.msra.mxu0 %v375
  %1384 = vmatpush.bf16.msra.mxu0 %v374
  %1385 = vmatpush.bf16.msra.mxu0 %v373
  %1386 = vmatpush.bf16.msra.mxu0 %v372
  %1387 = vmatpush.bf16.msra.mxu0 %v371
  %1388 = vmatpush.bf16.msra.mxu0 %v370
  %1389 = vmatpush.bf16.msra.mxu0 %v369
  %1390 = vmatmul.bf16.gmra.mxu0 %v1366
  %v1391 = vpop.f32.mrf.mxu0
  %v1392 = vadd.f32 0.0, %v1391
  %v1393 = vpop.f32.mrf.mxu0
  %v1394 = vadd.f32 0.0, %v1393
  %1395 = vmatmul.bf16.gmra.mxu0 %v1368
  %v1396 = vpop.f32.mrf.mxu0
  %v1397 = vadd.f32 0.0, %v1396
  %v1398 = vpop.f32.mrf.mxu0
  %v1399 = vadd.f32 0.0, %v1398
  %1400 = vmatmul.bf16.gmra.mxu0 %v1370
  %v1401 = vpop.f32.mrf.mxu0
  %v1402 = vadd.f32 0.0, %v1401
  %v1403 = vpop.f32.mrf.mxu0
  %v1404 = vadd.f32 0.0, %v1403
  %1405 = vmatmul.bf16.gmra.mxu0 %v1372
  %v1406 = vpop.f32.mrf.mxu0
  %v1407 = vadd.f32 0.0, %v1406
  %v1408 = vpop.f32.mrf.mxu0
  %v1409 = vadd.f32 0.0, %v1408
  %1410 = vdwg.mxu0
  %1411 = vmatpush.bf16.msra.mxu0 %v384
  %1412 = vmatpush.bf16.msra.mxu0 %v383
  %1413 = vmatpush.bf16.msra.mxu0 %v382
  %1414 = vmatpush.bf16.msra.mxu0 %v381
  %1415 = vmatpush.bf16.msra.mxu0 %v380
  %1416 = vmatpush.bf16.msra.mxu0 %v379
  %1417 = vmatpush.bf16.msra.mxu0 %v378
  %1418 = vmatpush.bf16.msra.mxu0 %v377
  %1419 = vmatmul.bf16.gmra.mxu0 %v1367
  %v1420 = vpop.f32.mrf.mxu0
  %v1421 = vadd.f32 %v1392, %v1420
  %v1422 = vpop.f32.mrf.mxu0
  %v1423 = vadd.f32 %v1394, %v1422
  %1424 = vmatmul.bf16.gmra.mxu0 %v1369
  %v1425 = vpop.f32.mrf.mxu0
  %v1426 = vadd.f32 %v1397, %v1425
  %v1427 = vpop.f32.mrf.mxu0
  %v1428 = vadd.f32 %v1399, %v1427
  %1429 = vmatmul.bf16.gmra.mxu0 %v1371
  %v1430 = vpop.f32.mrf.mxu0
  %v1431 = vadd.f32 %v1402, %v1430
  %v1432 = vpop.f32.mrf.mxu0
  %v1433 = vadd.f32 %v1404, %v1432
  %1434 = vmatmul.bf16.gmra.mxu0 %v1373
  %v1435 = vpop.f32.mrf.mxu0
  %v1436 = vadd.f32 %v1407, %v1435
  %v1437 = vpop.f32.mrf.mxu0
  %v1438 = vadd.f32 %v1409, %v1437
  %1439 = vdwg.mxu0
  %v1448 = vunpack.c.l.b16 %v139
  %v1449 = vunpack.c.l.b16 %v145
  %v1450 = vunpack.c.l.b16 %v151
  %v1451 = vunpack.c.l.b16 %v157
  %v1452 = vunpack.c.l.b16 %v163
  %v1453 = vunpack.c.l.b16 %v169
  %v1454 = vunpack.c.l.b16 %v175
  %v1455 = vunpack.c.l.b16 %v181
  %v1456 = vpack.c.b16 %v1448, %v1448
  %v1457 = vpack.c.b16 %v1449, %v1449
  %v1458 = vpack.c.b16 %v1450, %v1450
  %v1459 = vpack.c.b16 %v1451, %v1451
  %v1460 = vpack.c.b16 %v1452, %v1452
  %v1461 = vpack.c.b16 %v1453, %v1453
  %v1462 = vpack.c.b16 %v1454, %v1454
  %v1463 = vpack.c.b16 %v1455, %v1455
  %1464 = vrot.lane.b32.xlu0 %v1456, 64
  %v1465 = vpop.permute.xlu0 %1464
  %1466 = vrot.lane.b32.xlu0 %v1457, 64
  %v1467 = vpop.permute.xlu0 %1466
  %1468 = vrot.lane.b32.xlu0 %v1458, 64
  %v1469 = vpop.permute.xlu0 %1468
  %1470 = vrot.lane.b32.xlu0 %v1459, 64
  %v1471 = vpop.permute.xlu0 %1470
  %1472 = vrot.lane.b32.xlu0 %v1460, 64
  %v1473 = vpop.permute.xlu0 %1472
  %1474 = vrot.lane.b32.xlu0 %v1461, 64
  %v1475 = vpop.permute.xlu0 %1474
  %1476 = vrot.lane.b32.xlu0 %v1462, 64
  %v1477 = vpop.permute.xlu0 %1476
  %1478 = vrot.lane.b32.xlu0 %v1463, 64
  %v1479 = vpop.permute.xlu0 %1478
  %v1480 = vsel %vm515, %v1149, %v1465
  %v1481 = vsel %vm515, %v1151, %v1467
  %v1482 = vsel %vm515, %v1153, %v1469
  %v1483 = vsel %vm515, %v1155, %v1471
  %v1484 = vsel %vm515, %v1157, %v1473
  %v1485 = vsel %vm515, %v1159, %v1475
  %v1486 = vsel %vm515, %v1161, %v1477
  %v1487 = vsel %vm515, %v1163, %v1479
  %v1496 = vunpack.c.l.b16 %v142
  %v1497 = vunpack.c.l.b16 %v148
  %v1498 = vunpack.c.l.b16 %v154
  %v1499 = vunpack.c.l.b16 %v160
  %v1500 = vunpack.c.l.b16 %v166
  %v1501 = vunpack.c.l.b16 %v172
  %v1502 = vunpack.c.l.b16 %v178
  %v1503 = vunpack.c.l.b16 %v184
  %v1504 = vpack.c.b16 %v1496, %v1448
  %v1505 = vpack.c.b16 %v1497, %v1449
  %v1506 = vpack.c.b16 %v1498, %v1450
  %v1507 = vpack.c.b16 %v1499, %v1451
  %v1508 = vpack.c.b16 %v1500, %v1452
  %v1509 = vpack.c.b16 %v1501, %v1453
  %v1510 = vpack.c.b16 %v1502, %v1454
  %v1511 = vpack.c.b16 %v1503, %v1455
  %v1513 = vshrl.u32 %v1504, 16
  %v1515 = vshll.u32 %v1504, 16
  %v1517 = vrot.slane %v1515, 1
  %v1518 = vor.u32 %v1513, %v1517
  %v1520 = vshrl.u32 %v1505, 16
  %v1522 = vshll.u32 %v1505, 16
  %v1524 = vrot.slane %v1522, 1
  %v1525 = vor.u32 %v1520, %v1524
  %v1527 = vshrl.u32 %v1506, 16
  %v1529 = vshll.u32 %v1506, 16
  %v1531 = vrot.slane %v1529, 1
  %v1532 = vor.u32 %v1527, %v1531
  %v1534 = vshrl.u32 %v1507, 16
  %v1536 = vshll.u32 %v1507, 16
  %v1538 = vrot.slane %v1536, 1
  %v1539 = vor.u32 %v1534, %v1538
  %v1541 = vshrl.u32 %v1508, 16
  %v1543 = vshll.u32 %v1508, 16
  %v1545 = vrot.slane %v1543, 1
  %v1546 = vor.u32 %v1541, %v1545
  %v1548 = vshrl.u32 %v1509, 16
  %v1550 = vshll.u32 %v1509, 16
  %v1552 = vrot.slane %v1550, 1
  %v1553 = vor.u32 %v1548, %v1552
  %v1555 = vshrl.u32 %v1510, 16
  %v1557 = vshll.u32 %v1510, 16
  %v1559 = vrot.slane %v1557, 1
  %v1560 = vor.u32 %v1555, %v1559
  %v1562 = vshrl.u32 %v1511, 16
  %v1564 = vshll.u32 %v1511, 16
  %v1566 = vrot.slane %v1564, 1
  %v1567 = vor.u32 %v1562, %v1566
  %1568 = vrot.lane.b32.xlu0 %v1518, 64
  %v1569 = vpop.permute.xlu0 %1568
  %1570 = vrot.lane.b32.xlu0 %v1525, 64
  %v1571 = vpop.permute.xlu0 %1570
  %1572 = vrot.lane.b32.xlu0 %v1532, 64
  %v1573 = vpop.permute.xlu0 %1572
  %1574 = vrot.lane.b32.xlu0 %v1539, 64
  %v1575 = vpop.permute.xlu0 %1574
  %1576 = vrot.lane.b32.xlu0 %v1546, 64
  %v1577 = vpop.permute.xlu0 %1576
  %1578 = vrot.lane.b32.xlu0 %v1553, 64
  %v1579 = vpop.permute.xlu0 %1578
  %1580 = vrot.lane.b32.xlu0 %v1560, 64
  %v1581 = vpop.permute.xlu0 %1580
  %1582 = vrot.lane.b32.xlu0 %v1567, 64
  %v1583 = vpop.permute.xlu0 %1582
  %v1584 = vsel %vm515, %v1245, %v1569
  %v1585 = vsel %vm515, %v1247, %v1571
  %v1586 = vsel %vm515, %v1249, %v1573
  %v1587 = vsel %vm515, %v1251, %v1575
  %v1588 = vsel %vm515, %v1253, %v1577
  %v1589 = vsel %vm515, %v1255, %v1579
  %v1590 = vsel %vm515, %v1257, %v1581
  %v1591 = vsel %vm515, %v1259, %v1583
  %v1592 = vunpack.c.l.b16 %v1480
  %v1593 = vunpack.c.l.b16 %v1584
  %v1594 = vunpack.c.l.b16 %v1481
  %v1595 = vunpack.c.l.b16 %v1585
  %v1596 = vunpack.c.l.b16 %v1482
  %v1597 = vunpack.c.l.b16 %v1586
  %v1598 = vunpack.c.l.b16 %v1483
  %v1599 = vunpack.c.l.b16 %v1587
  %v1600 = vunpack.c.l.b16 %v1484
  %v1601 = vunpack.c.l.b16 %v1588
  %v1602 = vunpack.c.l.b16 %v1485
  %v1603 = vunpack.c.l.b16 %v1589
  %v1604 = vunpack.c.l.b16 %v1486
  %v1605 = vunpack.c.l.b16 %v1590
  %v1606 = vunpack.c.l.b16 %v1487
  %v1607 = vunpack.c.l.b16 %v1591
  %v1608 = vpack.c.b16 %v1594, %v1592
  %v1609 = vpack.c.b16 %v1595, %v1593
  %v1610 = vpack.c.b16 %v1598, %v1596
  %v1611 = vpack.c.b16 %v1599, %v1597
  %v1612 = vpack.c.b16 %v1602, %v1600
  %v1613 = vpack.c.b16 %v1603, %v1601
  %v1614 = vpack.c.b16 %v1606, %v1604
  %v1615 = vpack.c.b16 %v1607, %v1605
  %1624 = vmatpush.bf16.msra.mxu0 %v376
  %1625 = vmatpush.bf16.msra.mxu0 %v375
  %1626 = vmatpush.bf16.msra.mxu0 %v374
  %1627 = vmatpush.bf16.msra.mxu0 %v373
  %1628 = vmatpush.bf16.msra.mxu0 %v372
  %1629 = vmatpush.bf16.msra.mxu0 %v371
  %1630 = vmatpush.bf16.msra.mxu0 %v370
  %1631 = vmatpush.bf16.msra.mxu0 %v369
  %1632 = vmatmul.bf16.gmra.mxu0 %v1608
  %v1633 = vpop.f32.mrf.mxu0
  %v1634 = vadd.f32 0.0, %v1633
  %v1635 = vpop.f32.mrf.mxu0
  %v1636 = vadd.f32 0.0, %v1635
  %1637 = vmatmul.bf16.gmra.mxu0 %v1610
  %v1638 = vpop.f32.mrf.mxu0
  %v1639 = vadd.f32 0.0, %v1638
  %v1640 = vpop.f32.mrf.mxu0
  %v1641 = vadd.f32 0.0, %v1640
  %1642 = vmatmul.bf16.gmra.mxu0 %v1612
  %v1643 = vpop.f32.mrf.mxu0
  %v1644 = vadd.f32 0.0, %v1643
  %v1645 = vpop.f32.mrf.mxu0
  %v1646 = vadd.f32 0.0, %v1645
  %1647 = vmatmul.bf16.gmra.mxu0 %v1614
  %v1648 = vpop.f32.mrf.mxu0
  %v1649 = vadd.f32 0.0, %v1648
  %v1650 = vpop.f32.mrf.mxu0
  %v1651 = vadd.f32 0.0, %v1650
  %1652 = vdwg.mxu0
  %1653 = vmatpush.bf16.msra.mxu0 %v384
  %1654 = vmatpush.bf16.msra.mxu0 %v383
  %1655 = vmatpush.bf16.msra.mxu0 %v382
  %1656 = vmatpush.bf16.msra.mxu0 %v381
  %1657 = vmatpush.bf16.msra.mxu0 %v380
  %1658 = vmatpush.bf16.msra.mxu0 %v379
  %1659 = vmatpush.bf16.msra.mxu0 %v378
  %1660 = vmatpush.bf16.msra.mxu0 %v377
  %1661 = vmatmul.bf16.gmra.mxu0 %v1609
  %v1662 = vpop.f32.mrf.mxu0
  %v1663 = vadd.f32 %v1634, %v1662
  %v1664 = vpop.f32.mrf.mxu0
  %v1665 = vadd.f32 %v1636, %v1664
  %1666 = vmatmul.bf16.gmra.mxu0 %v1611
  %v1667 = vpop.f32.mrf.mxu0
  %v1668 = vadd.f32 %v1639, %v1667
  %v1669 = vpop.f32.mrf.mxu0
  %v1670 = vadd.f32 %v1641, %v1669
  %1671 = vmatmul.bf16.gmra.mxu0 %v1613
  %v1672 = vpop.f32.mrf.mxu0
  %v1673 = vadd.f32 %v1644, %v1672
  %v1674 = vpop.f32.mrf.mxu0
  %v1675 = vadd.f32 %v1646, %v1674
  %1676 = vmatmul.bf16.gmra.mxu0 %v1615
  %v1677 = vpop.f32.mrf.mxu0
  %v1678 = vadd.f32 %v1649, %v1677
  %v1679 = vpop.f32.mrf.mxu0
  %v1680 = vadd.f32 %v1651, %v1679
  %1681 = vdwg.mxu0
  %1690 = vrot.lane.b32.xlu0 %v707, 32
  %v1691 = vpop.permute.xlu0 %1690
  %1692 = vrot.lane.b32.xlu0 %v709, 32
  %v1693 = vpop.permute.xlu0 %1692
  %1694 = vrot.lane.b32.xlu0 %v712, 32
  %v1695 = vpop.permute.xlu0 %1694
  %1696 = vrot.lane.b32.xlu0 %v714, 32
  %v1697 = vpop.permute.xlu0 %1696
  %1698 = vrot.lane.b32.xlu0 %v717, 32
  %v1699 = vpop.permute.xlu0 %1698
  %1700 = vrot.lane.b32.xlu0 %v719, 32
  %v1701 = vpop.permute.xlu0 %1700
  %1702 = vrot.lane.b32.xlu0 %v722, 32
  %v1703 = vpop.permute.xlu0 %1702
  %1704 = vrot.lane.b32.xlu0 %v724, 32
  %v1705 = vpop.permute.xlu0 %1704
  %1722 = vrot.lane.b32.xlu0 %v789, 64
  %v1723 = vpop.permute.xlu0 %1722
  %1724 = vrot.lane.b32.xlu0 %v791, 64
  %v1725 = vpop.permute.xlu0 %1724
  %1726 = vrot.lane.b32.xlu0 %v794, 64
  %v1727 = vpop.permute.xlu0 %1726
  %1728 = vrot.lane.b32.xlu0 %v796, 64
  %v1729 = vpop.permute.xlu0 %1728
  %1730 = vrot.lane.b32.xlu0 %v799, 64
  %v1731 = vpop.permute.xlu0 %1730
  %1732 = vrot.lane.b32.xlu0 %v801, 64
  %v1733 = vpop.permute.xlu0 %1732
  %1734 = vrot.lane.b32.xlu0 %v804, 64
  %v1735 = vpop.permute.xlu0 %1734
  %1736 = vrot.lane.b32.xlu0 %v806, 64
  %v1737 = vpop.permute.xlu0 %1736
  %1754 = vrot.lane.b32.xlu0 %v1031, 96
  %v1755 = vpop.permute.xlu0 %1754
  %1756 = vrot.lane.b32.xlu0 %v1033, 96
  %v1757 = vpop.permute.xlu0 %1756
  %1758 = vrot.lane.b32.xlu0 %v1036, 96
  %v1759 = vpop.permute.xlu0 %1758
  %1760 = vrot.lane.b32.xlu0 %v1038, 96
  %v1761 = vpop.permute.xlu0 %1760
  %1762 = vrot.lane.b32.xlu0 %v1041, 96
  %v1763 = vpop.permute.xlu0 %1762
  %1764 = vrot.lane.b32.xlu0 %v1043, 96
  %v1765 = vpop.permute.xlu0 %1764
  %1766 = vrot.lane.b32.xlu0 %v1046, 96
  %v1767 = vpop.permute.xlu0 %1766
  %1768 = vrot.lane.b32.xlu0 %v1048, 96
  %v1769 = vpop.permute.xlu0 %1768
  %1786 = vrot.lane.b32.xlu0 %v1339, 32
  %v1787 = vpop.permute.xlu0 %1786
  %1788 = vrot.lane.b32.xlu0 %v1341, 32
  %v1789 = vpop.permute.xlu0 %1788
  %1790 = vrot.lane.b32.xlu0 %v1344, 32
  %v1791 = vpop.permute.xlu0 %1790
  %1792 = vrot.lane.b32.xlu0 %v1346, 32
  %v1793 = vpop.permute.xlu0 %1792
  %1794 = vrot.lane.b32.xlu0 %v1349, 32
  %v1795 = vpop.permute.xlu0 %1794
  %1796 = vrot.lane.b32.xlu0 %v1351, 32
  %v1797 = vpop.permute.xlu0 %1796
  %1798 = vrot.lane.b32.xlu0 %v1354, 32
  %v1799 = vpop.permute.xlu0 %1798
  %1800 = vrot.lane.b32.xlu0 %v1356, 32
  %v1801 = vpop.permute.xlu0 %1800
  %1818 = vrot.lane.b32.xlu0 %v1421, 64
  %v1819 = vpop.permute.xlu0 %1818
  %1820 = vrot.lane.b32.xlu0 %v1423, 64
  %v1821 = vpop.permute.xlu0 %1820
  %1822 = vrot.lane.b32.xlu0 %v1426, 64
  %v1823 = vpop.permute.xlu0 %1822
  %1824 = vrot.lane.b32.xlu0 %v1428, 64
  %v1825 = vpop.permute.xlu0 %1824
  %1826 = vrot.lane.b32.xlu0 %v1431, 64
  %v1827 = vpop.permute.xlu0 %1826
  %1828 = vrot.lane.b32.xlu0 %v1433, 64
  %v1829 = vpop.permute.xlu0 %1828
  %1830 = vrot.lane.b32.xlu0 %v1436, 64
  %v1831 = vpop.permute.xlu0 %1830
  %1832 = vrot.lane.b32.xlu0 %v1438, 64
  %v1833 = vpop.permute.xlu0 %1832
  %1850 = vrot.lane.b32.xlu0 %v1663, 96
  %v1851 = vpop.permute.xlu0 %1850
  %1852 = vrot.lane.b32.xlu0 %v1665, 96
  %v1853 = vpop.permute.xlu0 %1852
  %1854 = vrot.lane.b32.xlu0 %v1668, 96
  %v1855 = vpop.permute.xlu0 %1854
  %1856 = vrot.lane.b32.xlu0 %v1670, 96
  %v1857 = vpop.permute.xlu0 %1856
  %1858 = vrot.lane.b32.xlu0 %v1673, 96
  %v1859 = vpop.permute.xlu0 %1858
  %1860 = vrot.lane.b32.xlu0 %v1675, 96
  %v1861 = vpop.permute.xlu0 %1860
  %1862 = vrot.lane.b32.xlu0 %v1678, 96
  %v1863 = vpop.permute.xlu0 %1862
  %1864 = vrot.lane.b32.xlu0 %v1680, 96
  %v1865 = vpop.permute.xlu0 %1864
  %vm1874 = vcmask 261120
  %v1875 = vsel %vm1874, %v440, %v1691
  %v1876 = vsel %vm1874, %v442, %v1693
  %v1877 = vsel %vm1874, %v445, %v1695
  %v1878 = vsel %vm1874, %v447, %v1697
  %v1879 = vsel %vm1874, %v450, %v1699
  %v1880 = vsel %vm1874, %v452, %v1701
  %v1881 = vsel %vm1874, %v455, %v1703
  %v1882 = vsel %vm1874, %v457, %v1705
  %vm1883 = vcmask 523264
  %v1884 = vsel %vm1883, %v1875, %v1723
  %v1885 = vsel %vm1883, %v1876, %v1725
  %v1886 = vsel %vm1883, %v1877, %v1727
  %v1887 = vsel %vm1883, %v1878, %v1729
  %v1888 = vsel %vm1883, %v1879, %v1731
  %v1889 = vsel %vm1883, %v1880, %v1733
  %v1890 = vsel %vm1883, %v1881, %v1735
  %v1891 = vsel %vm1883, %v1882, %v1737
  %vm1892 = vcmask 785408
  %v1893 = vsel %vm1892, %v1884, %v1755
  %v1894 = vsel %vm1892, %v1885, %v1757
  %v1895 = vsel %vm1892, %v1886, %v1759
  %v1896 = vsel %vm1892, %v1887, %v1761
  %v1897 = vsel %vm1892, %v1888, %v1763
  %v1898 = vsel %vm1892, %v1889, %v1765
  %v1899 = vsel %vm1892, %v1890, %v1767
  %v1900 = vsel %vm1892, %v1891, %v1769
  %v1901 = vsel %vm1874, %v1113, %v1787
  %v1902 = vsel %vm1874, %v1115, %v1789
  %v1903 = vsel %vm1874, %v1118, %v1791
  %v1904 = vsel %vm1874, %v1120, %v1793
  %v1905 = vsel %vm1874, %v1123, %v1795
  %v1906 = vsel %vm1874, %v1125, %v1797
  %v1907 = vsel %vm1874, %v1128, %v1799
  %v1908 = vsel %vm1874, %v1130, %v1801
  %v1909 = vsel %vm1883, %v1901, %v1819
  %v1910 = vsel %vm1883, %v1902, %v1821
  %v1911 = vsel %vm1883, %v1903, %v1823
  %v1912 = vsel %vm1883, %v1904, %v1825
  %v1913 = vsel %vm1883, %v1905, %v1827
  %v1914 = vsel %vm1883, %v1906, %v1829
  %v1915 = vsel %vm1883, %v1907, %v1831
  %v1916 = vsel %vm1883, %v1908, %v1833
  %v1917 = vsel %vm1892, %v1909, %v1851
  %v1918 = vsel %vm1892, %v1910, %v1853
  %v1919 = vsel %vm1892, %v1911, %v1855
  %v1920 = vsel %vm1892, %v1912, %v1857
  %v1921 = vsel %vm1892, %v1913, %v1859
  %v1922 = vsel %vm1892, %v1914, %v1861
  %v1923 = vsel %vm1892, %v1915, %v1863
  %v1924 = vsel %vm1892, %v1916, %v1865
  %v1925 = vld [vmem:[%s2] sm:$0x3]
  %v1927 = vperm.slane %v1925, 0
  %v1928 = vperm.slane %v1925, 1
  %v1931 = vadd.f32 %v1893, %v1927
  %v1932 = vadd.f32 %v1917, %v1928
  %v1933 = vadd.f32 %v1894, %v1927
  %v1934 = vadd.f32 %v1918, %v1928
  %v1935 = vadd.f32 %v1895, %v1927
  %v1936 = vadd.f32 %v1919, %v1928
  %v1937 = vadd.f32 %v1896, %v1927
  %v1938 = vadd.f32 %v1920, %v1928
  %v1939 = vadd.f32 %v1897, %v1927
  %v1940 = vadd.f32 %v1921, %v1928
  %v1941 = vadd.f32 %v1898, %v1927
  %v1942 = vadd.f32 %v1922, %v1928
  %v1943 = vadd.f32 %v1899, %v1927
  %v1944 = vadd.f32 %v1923, %v1928
  %v1945 = vadd.f32 %v1900, %v1927
  %v1946 = vadd.f32 %v1924, %v1928
  %v1947 = vmax.f32 %v1931, 0.0
  %v1948 = vmax.f32 %v1932, 0.0
  %v1949 = vmax.f32 %v1933, 0.0
  %v1950 = vmax.f32 %v1934, 0.0
  %v1951 = vmax.f32 %v1935, 0.0
  %v1952 = vmax.f32 %v1936, 0.0
  %v1953 = vmax.f32 %v1937, 0.0
  %v1954 = vmax.f32 %v1938, 0.0
  %v1955 = vmax.f32 %v1939, 0.0
  %v1956 = vmax.f32 %v1940, 0.0
  %v1957 = vmax.f32 %v1941, 0.0
  %v1958 = vmax.f32 %v1942, 0.0
  %v1959 = vmax.f32 %v1943, 0.0
  %v1960 = vmax.f32 %v1944, 0.0
  %v1961 = vmax.f32 %v1945, 0.0
  %v1962 = vmax.f32 %v1946, 0.0
  %v1963 = vpack.c.bf16 %v1948, %v1947
  %v1964 = vpack.c.bf16 %v1950, %v1949
  %v1965 = vpack.c.bf16 %v1952, %v1951
  %v1966 = vpack.c.bf16 %v1954, %v1953
  %v1967 = vpack.c.bf16 %v1956, %v1955
  %v1968 = vpack.c.bf16 %v1958, %v1957
  %v1969 = vpack.c.bf16 %v1960, %v1959
  %v1970 = vpack.c.bf16 %v1962, %v1961
  %v1979 = vunpack.c.l.b16 %v1963
  %v1980 = vunpack.c.l.b16 %v1964
  %v1981 = vunpack.c.l.b16 %v1965
  %v1982 = vunpack.c.l.b16 %v1966
  %v1983 = vunpack.c.l.b16 %v1967
  %v1984 = vunpack.c.l.b16 %v1968
  %v1985 = vunpack.c.l.b16 %v1969
  %v1986 = vunpack.c.l.b16 %v1970
  %v1987 = vpack.c.b16 %v1979, %v1979
  %v1988 = vpack.c.b16 %v1980, %v1980
  %v1989 = vpack.c.b16 %v1981, %v1981
  %v1990 = vpack.c.b16 %v1982, %v1982
  %v1991 = vpack.c.b16 %v1983, %v1983
  %v1992 = vpack.c.b16 %v1984, %v1984
  %v1993 = vpack.c.b16 %v1985, %v1985
  %v1994 = vpack.c.b16 %v1986, %v1986
  %v1995 = vunpack.c.l.b16 %v1987
  %v1996 = vunpack.c.l.b16 %v1988
  %v1997 = vunpack.c.l.b16 %v1989
  %v1998 = vunpack.c.l.b16 %v1990
  %v1999 = vunpack.c.l.b16 %v1991
  %v2000 = vunpack.c.l.b16 %v1992
  %v2001 = vunpack.c.l.b16 %v1993
  %v2002 = vunpack.c.l.b16 %v1994
  %v2003 = vrot.slane %v1996, 7
  %vm2004 = vcmask 1041409
  %v2005 = vsel %vm2004, %v2003, %v1995
  %v2006 = vrot.slane %v1997, 6
  %vm2007 = vcmask 1042434
  %v2008 = vsel %vm2007, %v2006, %v2005
  %v2009 = vrot.slane %v1998, 5
  %vm2010 = vcmask 1043459
  %v2011 = vsel %vm2010, %v2009, %v2008
  %v2012 = vrot.slane %v1999, 4
  %vm2013 = vcmask 1044484
  %v2014 = vsel %vm2013, %v2012, %v2011
  %v2015 = vrot.slane %v2000, 3
  %vm2016 = vcmask 1045509
  %v2017 = vsel %vm2016, %v2015, %v2014
  %v2018 = vrot.slane %v2001, 2
  %vm2019 = vcmask 1046534
  %v2020 = vsel %vm2019, %v2018, %v2017
  %v2021 = vrot.slane %v2002, 1
  %vm2022 = vcmask 1047559
  %v2023 = vsel %vm2022, %v2021, %v2020
  %v2024 = vpack.c.b16 %v2023, %v2023
  %v2026 = vrot.slane %v1995, 1
  %v2027 = vsel %vm2004, %v1996, %v2026
  %v2028 = vrot.slane %v1997, 7
  %v2029 = vsel %vm2007, %v2028, %v2027
  %v2030 = vrot.slane %v1998, 6
  %v2031 = vsel %vm2010, %v2030, %v2029
  %v2032 = vrot.slane %v1999, 5
  %v2033 = vsel %vm2013, %v2032, %v2031
  %v2034 = vrot.slane %v2000, 4
  %v2035 = vsel %vm2016, %v2034, %v2033
  %v2036 = vrot.slane %v2001, 3
  %v2037 = vsel %vm2019, %v2036, %v2035
  %v2038 = vrot.slane %v2002, 2
  %v2039 = vsel %vm2022, %v2038, %v2037
  %v2040 = vpack.c.b16 %v2039, %v2039
  %v2042 = vrot.slane %v1995, 2
  %v2043 = vrot.slane %v1996, 1
  %v2044 = vsel %vm2004, %v2043, %v2042
  %v2045 = vsel %vm2007, %v1997, %v2044
  %v2046 = vrot.slane %v1998, 7
  %v2047 = vsel %vm2010, %v2046, %v2045
  %v2048 = vrot.slane %v1999, 6
  %v2049 = vsel %vm2013, %v2048, %v2047
  %v2050 = vrot.slane %v2000, 5
  %v2051 = vsel %vm2016, %v2050, %v2049
  %v2052 = vrot.slane %v2001, 4
  %v2053 = vsel %vm2019, %v2052, %v2051
  %v2054 = vrot.slane %v2002, 3
  %v2055 = vsel %vm2022, %v2054, %v2053
  %v2056 = vpack.c.b16 %v2055, %v2055
  %v2058 = vrot.slane %v1995, 3
  %v2059 = vrot.slane %v1996, 2
  %v2060 = vsel %vm2004, %v2059, %v2058
  %v2061 = vrot.slane %v1997, 1
  %v2062 = vsel %vm2007, %v2061, %v2060
  %v2063 = vsel %vm2010, %v1998, %v2062
  %v2064 = vrot.slane %v1999, 7
  %v2065 = vsel %vm2013, %v2064, %v2063
  %v2066 = vrot.slane %v2000, 6
  %v2067 = vsel %vm2016, %v2066, %v2065
  %v2068 = vrot.slane %v2001, 5
  %v2069 = vsel %vm2019, %v2068, %v2067
  %v2070 = vrot.slane %v2002, 4
  %v2071 = vsel %vm2022, %v2070, %v2069
  %v2072 = vpack.c.b16 %v2071, %v2071
  %v2138 = vunpack.c.l.b16 %v73
  %v2139 = vunpack.c.l.b16 %v74
  %v2140 = vunpack.c.l.b16 %v75
  %v2141 = vunpack.c.l.b16 %v76
  %v2142 = vunpack.c.l.b16 %v77
  %v2143 = vunpack.c.l.b16 %v78
  %v2144 = vunpack.c.l.b16 %v79
  %v2145 = vunpack.c.l.b16 %v80
  %v2146 = vunpack.c.l.b16 %v81
  %v2147 = vunpack.c.l.b16 %v82
  %v2148 = vunpack.c.l.b16 %v83
  %v2149 = vunpack.c.l.b16 %v84
  %v2150 = vunpack.c.l.b16 %v85
  %v2151 = vunpack.c.l.b16 %v86
  %v2152 = vunpack.c.l.b16 %v87
  %v2153 = vunpack.c.l.b16 %v88
  %v2154 = vunpack.c.l.b16 %v89
  %v2155 = vunpack.c.l.b16 %v90
  %v2156 = vunpack.c.l.b16 %v91
  %v2157 = vunpack.c.l.b16 %v92
  %v2158 = vunpack.c.l.b16 %v93
  %v2159 = vunpack.c.l.b16 %v94
  %v2160 = vunpack.c.l.b16 %v95
  %v2161 = vunpack.c.l.b16 %v96
  %v2162 = vunpack.c.l.b16 %v97
  %v2163 = vunpack.c.l.b16 %v98
  %v2164 = vunpack.c.l.b16 %v99
  %v2165 = vunpack.c.l.b16 %v100
  %v2166 = vunpack.c.l.b16 %v101
  %v2167 = vunpack.c.l.b16 %v102
  %v2168 = vunpack.c.l.b16 %v103
  %v2169 = vunpack.c.l.b16 %v104
  %v2170 = vunpack.c.l.b16 %v105
  %v2171 = vunpack.c.l.b16 %v106
  %v2172 = vunpack.c.l.b16 %v107
  %v2173 = vunpack.c.l.b16 %v108
  %v2174 = vunpack.c.l.b16 %v109
  %v2175 = vunpack.c.l.b16 %v110
  %v2176 = vunpack.c.l.b16 %v111
  %v2177 = vunpack.c.l.b16 %v112
  %v2178 = vunpack.c.l.b16 %v113
  %v2179 = vunpack.c.l.b16 %v114
  %v2180 = vunpack.c.l.b16 %v115
  %v2181 = vunpack.c.l.b16 %v116
  %v2182 = vunpack.c.l.b16 %v117
  %v2183 = vunpack.c.l.b16 %v118
  %v2184 = vunpack.c.l.b16 %v119
  %v2185 = vunpack.c.l.b16 %v120
  %v2186 = vunpack.c.l.b16 %v121
  %v2187 = vunpack.c.l.b16 %v122
  %v2188 = vunpack.c.l.b16 %v123
  %v2189 = vunpack.c.l.b16 %v124
  %v2190 = vunpack.c.l.b16 %v125
  %v2191 = vunpack.c.l.b16 %v126
  %v2192 = vunpack.c.l.b16 %v127
  %v2193 = vunpack.c.l.b16 %v128
  %v2194 = vunpack.c.l.b16 %v129
  %v2195 = vunpack.c.l.b16 %v130
  %v2196 = vunpack.c.l.b16 %v131
  %v2197 = vunpack.c.l.b16 %v132
  %v2198 = vunpack.c.l.b16 %v133
  %v2199 = vunpack.c.l.b16 %v134
  %v2200 = vunpack.c.l.b16 %v135
  %v2201 = vunpack.c.l.b16 %v136
  %v2202 = vpack.c.b16 %v2139, %v2138
  %v2203 = vpack.c.b16 %v2141, %v2140
  %v2204 = vpack.c.b16 %v2143, %v2142
  %v2205 = vpack.c.b16 %v2145, %v2144
  %v2206 = vpack.c.b16 %v2147, %v2146
  %v2207 = vpack.c.b16 %v2149, %v2148
  %v2208 = vpack.c.b16 %v2151, %v2150
  %v2209 = vpack.c.b16 %v2153, %v2152
  %v2210 = vpack.c.b16 %v2155, %v2154
  %v2211 = vpack.c.b16 %v2157, %v2156
  %v2212 = vpack.c.b16 %v2159, %v2158
  %v2213 = vpack.c.b16 %v2161, %v2160
  %v2214 = vpack.c.b16 %v2163, %v2162
  %v2215 = vpack.c.b16 %v2165, %v2164
  %v2216 = vpack.c.b16 %v2167, %v2166
  %v2217 = vpack.c.b16 %v2169, %v2168
  %v2218 = vpack.c.b16 %v2171, %v2170
  %v2219 = vpack.c.b16 %v2173, %v2172
  %v2220 = vpack.c.b16 %v2175, %v2174
  %v2221 = vpack.c.b16 %v2177, %v2176
  %v2222 = vpack.c.b16 %v2179, %v2178
  %v2223 = vpack.c.b16 %v2181, %v2180
  %v2224 = vpack.c.b16 %v2183, %v2182
  %v2225 = vpack.c.b16 %v2185, %v2184
  %v2226 = vpack.c.b16 %v2187, %v2186
  %v2227 = vpack.c.b16 %v2189, %v2188
  %v2228 = vpack.c.b16 %v2191, %v2190
  %v2229 = vpack.c.b16 %v2193, %v2192
  %v2230 = vpack.c.b16 %v2195, %v2194
  %v2231 = vpack.c.b16 %v2197, %v2196
  %v2232 = vpack.c.b16 %v2199, %v2198
  %v2233 = vpack.c.b16 %v2201, %v2200
  %2266 = vmatpush.bf16.msra.mxu0 %v2209
  %2267 = vmatpush.bf16.msra.mxu0 %v2208
  %2268 = vmatpush.bf16.msra.mxu0 %v2207
  %2269 = vmatpush.bf16.msra.mxu0 %v2206
  %2270 = vmatpush.bf16.msra.mxu0 %v2205
  %2271 = vmatpush.bf16.msra.mxu0 %v2204
  %2272 = vmatpush.bf16.msra.mxu0 %v2203
  %2273 = vmatpush.bf16.msra.mxu0 %v2202
  %2274 = vmatmul.bf16.gmra.mxu0 %v2024
  %v2275 = vpop.f32.mrf.mxu0
  %v2276 = vadd.f32 0.0, %v2275
  %v2277 = vpop.f32.mrf.mxu0
  %2278 = vdwg.mxu0
  %2279 = vmatpush.bf16.msra.mxu0 %v2217
  %2280 = vmatpush.bf16.msra.mxu0 %v2216
  %2281 = vmatpush.bf16.msra.mxu0 %v2215
  %2282 = vmatpush.bf16.msra.mxu0 %v2214
  %2283 = vmatpush.bf16.msra.mxu0 %v2213
  %2284 = vmatpush.bf16.msra.mxu0 %v2212
  %2285 = vmatpush.bf16.msra.mxu0 %v2211
  %2286 = vmatpush.bf16.msra.mxu0 %v2210
  %2287 = vmatmul.bf16.gmra.mxu0 %v2040
  %v2288 = vpop.f32.mrf.mxu0
  %v2289 = vadd.f32 %v2276, %v2288
  %v2290 = vpop.f32.mrf.mxu0
  %2291 = vdwg.mxu0
  %2292 = vmatpush.bf16.msra.mxu0 %v2225
  %2293 = vmatpush.bf16.msra.mxu0 %v2224
  %2294 = vmatpush.bf16.msra.mxu0 %v2223
  %2295 = vmatpush.bf16.msra.mxu0 %v2222
  %2296 = vmatpush.bf16.msra.mxu0 %v2221
  %2297 = vmatpush.bf16.msra.mxu0 %v2220
  %2298 = vmatpush.bf16.msra.mxu0 %v2219
  %2299 = vmatpush.bf16.msra.mxu0 %v2218
  %2300 = vmatmul.bf16.gmra.mxu0 %v2056
  %v2301 = vpop.f32.mrf.mxu0
  %v2302 = vadd.f32 %v2289, %v2301
  %v2303 = vpop.f32.mrf.mxu0
  %2304 = vdwg.mxu0
  %2305 = vmatpush.bf16.msra.mxu0 %v2233
  %2306 = vmatpush.bf16.msra.mxu0 %v2232
  %2307 = vmatpush.bf16.msra.mxu0 %v2231
  %2308 = vmatpush.bf16.msra.mxu0 %v2230
  %2309 = vmatpush.bf16.msra.mxu0 %v2229
  %2310 = vmatpush.bf16.msra.mxu0 %v2228
  %2311 = vmatpush.bf16.msra.mxu0 %v2227
  %2312 = vmatpush.bf16.msra.mxu0 %v2226
  %2313 = vmatmul.bf16.gmra.mxu0 %v2072
  %v2314 = vpop.f32.mrf.mxu0
  %v2315 = vadd.f32 %v2302, %v2314
  %v2316 = vpop.f32.mrf.mxu0
  %2317 = vdwg.mxu0
  %v2318 = vunpack.c.h.b16 %v1963
  %v2319 = vunpack.c.h.b16 %v1964
  %v2320 = vunpack.c.h.b16 %v1965
  %v2321 = vunpack.c.h.b16 %v1966
  %v2322 = vunpack.c.h.b16 %v1967
  %v2323 = vunpack.c.h.b16 %v1968
  %v2324 = vunpack.c.h.b16 %v1969
  %v2325 = vunpack.c.h.b16 %v1970
  %v2326 = vpack.c.b16 %v2318, %v2318
  %v2327 = vpack.c.b16 %v2319, %v2319
  %v2328 = vpack.c.b16 %v2320, %v2320
  %v2329 = vpack.c.b16 %v2321, %v2321
  %v2330 = vpack.c.b16 %v2322, %v2322
  %v2331 = vpack.c.b16 %v2323, %v2323
  %v2332 = vpack.c.b16 %v2324, %v2324
  %v2333 = vpack.c.b16 %v2325, %v2325
  %v2334 = vunpack.c.l.b16 %v2326
  %v2335 = vunpack.c.l.b16 %v2327
  %v2336 = vunpack.c.l.b16 %v2328
  %v2337 = vunpack.c.l.b16 %v2329
  %v2338 = vunpack.c.l.b16 %v2330
  %v2339 = vunpack.c.l.b16 %v2331
  %v2340 = vunpack.c.l.b16 %v2332
  %v2341 = vunpack.c.l.b16 %v2333
  %v2342 = vrot.slane %v2335, 7
  %v2343 = vsel %vm2004, %v2342, %v2334
  %v2344 = vrot.slane %v2336, 6
  %v2345 = vsel %vm2007, %v2344, %v2343
  %v2346 = vrot.slane %v2337, 5
  %v2347 = vsel %vm2010, %v2346, %v2345
  %v2348 = vrot.slane %v2338, 4
  %v2349 = vsel %vm2013, %v2348, %v2347
  %v2350 = vrot.slane %v2339, 3
  %v2351 = vsel %vm2016, %v2350, %v2349
  %v2352 = vrot.slane %v2340, 2
  %v2353 = vsel %vm2019, %v2352, %v2351
  %v2354 = vrot.slane %v2341, 1
  %v2355 = vsel %vm2022, %v2354, %v2353
  %v2356 = vpack.c.b16 %v2355, %v2355
  %2357 = vrot.lane.b32.xlu0 %v2024, 64
  %v2358 = vpop.permute.xlu0 %2357
  %2359 = vrot.lane.b32.xlu0 %v2356, 64
  %v2360 = vpop.permute.xlu0 %2359
  %v2361 = vsel %vm515, %v2358, %v2360
  %v2363 = vrot.slane %v2334, 1
  %v2364 = vsel %vm2004, %v2335, %v2363
  %v2365 = vrot.slane %v2336, 7
  %v2366 = vsel %vm2007, %v2365, %v2364
  %v2367 = vrot.slane %v2337, 6
  %v2368 = vsel %vm2010, %v2367, %v2366
  %v2369 = vrot.slane %v2338, 5
  %v2370 = vsel %vm2013, %v2369, %v2368
  %v2371 = vrot.slane %v2339, 4
  %v2372 = vsel %vm2016, %v2371, %v2370
  %v2373 = vrot.slane %v2340, 3
  %v2374 = vsel %vm2019, %v2373, %v2372
  %v2375 = vrot.slane %v2341, 2
  %v2376 = vsel %vm2022, %v2375, %v2374
  %v2377 = vpack.c.b16 %v2376, %v2376
  %2378 = vrot.lane.b32.xlu0 %v2040, 64
  %v2379 = vpop.permute.xlu0 %2378
  %2380 = vrot.lane.b32.xlu0 %v2377, 64
  %v2381 = vpop.permute.xlu0 %2380
  %v2382 = vsel %vm515, %v2379, %v2381
  %v2384 = vrot.slane %v2334, 2
  %v2385 = vrot.slane %v2335, 1
  %v2386 = vsel %vm2004, %v2385, %v2384
  %v2387 = vsel %vm2007, %v2336, %v2386
  %v2388 = vrot.slane %v2337, 7
  %v2389 = vsel %vm2010, %v2388, %v2387
  %v2390 = vrot.slane %v2338, 6
  %v2391 = vsel %vm2013, %v2390, %v2389
  %v2392 = vrot.slane %v2339, 5
  %v2393 = vsel %vm2016, %v2392, %v2391
  %v2394 = vrot.slane %v2340, 4
  %v2395 = vsel %vm2019, %v2394, %v2393
  %v2396 = vrot.slane %v2341, 3
  %v2397 = vsel %vm2022, %v2396, %v2395
  %v2398 = vpack.c.b16 %v2397, %v2397
  %2399 = vrot.lane.b32.xlu0 %v2056, 64
  %v2400 = vpop.permute.xlu0 %2399
  %2401 = vrot.lane.b32.xlu0 %v2398, 64
  %v2402 = vpop.permute.xlu0 %2401
  %v2403 = vsel %vm515, %v2400, %v2402
  %v2405 = vrot.slane %v2334, 3
  %v2406 = vrot.slane %v2335, 2
  %v2407 = vsel %vm2004, %v2406, %v2405
  %v2408 = vrot.slane %v2336, 1
  %v2409 = vsel %vm2007, %v2408, %v2407
  %v2410 = vsel %vm2010, %v2337, %v2409
  %v2411 = vrot.slane %v2338, 7
  %v2412 = vsel %vm2013, %v2411, %v2410
  %v2413 = vrot.slane %v2339, 6
  %v2414 = vsel %vm2016, %v2413, %v2412
  %v2415 = vrot.slane %v2340, 5
  %v2416 = vsel %vm2019, %v2415, %v2414
  %v2417 = vrot.slane %v2341, 4
  %v2418 = vsel %vm2022, %v2417, %v2416
  %v2419 = vpack.c.b16 %v2418, %v2418
  %2420 = vrot.lane.b32.xlu0 %v2072, 64
  %v2421 = vpop.permute.xlu0 %2420
  %2422 = vrot.lane.b32.xlu0 %v2419, 64
  %v2423 = vpop.permute.xlu0 %2422
  %v2424 = vsel %vm515, %v2421, %v2423
  %2426 = vmatpush.bf16.msra.mxu0 %v2209
  %2427 = vmatpush.bf16.msra.mxu0 %v2208
  %2428 = vmatpush.bf16.msra.mxu0 %v2207
  %2429 = vmatpush.bf16.msra.mxu0 %v2206
  %2430 = vmatpush.bf16.msra.mxu0 %v2205
  %2431 = vmatpush.bf16.msra.mxu0 %v2204
  %2432 = vmatpush.bf16.msra.mxu0 %v2203
  %2433 = vmatpush.bf16.msra.mxu0 %v2202
  %2434 = vmatmul.bf16.gmra.mxu0 %v2361
  %v2435 = vpop.f32.mrf.mxu0
  %v2436 = vadd.f32 0.0, %v2435
  %v2437 = vpop.f32.mrf.mxu0
  %2438 = vdwg.mxu0
  %2439 = vmatpush.bf16.msra.mxu0 %v2217
  %2440 = vmatpush.bf16.msra.mxu0 %v2216
  %2441 = vmatpush.bf16.msra.mxu0 %v2215
  %2442 = vmatpush.bf16.msra.mxu0 %v2214
  %2443 = vmatpush.bf16.msra.mxu0 %v2213
  %2444 = vmatpush.bf16.msra.mxu0 %v2212
  %2445 = vmatpush.bf16.msra.mxu0 %v2211
  %2446 = vmatpush.bf16.msra.mxu0 %v2210
  %2447 = vmatmul.bf16.gmra.mxu0 %v2382
  %v2448 = vpop.f32.mrf.mxu0
  %v2449 = vadd.f32 %v2436, %v2448
  %v2450 = vpop.f32.mrf.mxu0
  %2451 = vdwg.mxu0
  %2452 = vmatpush.bf16.msra.mxu0 %v2225
  %2453 = vmatpush.bf16.msra.mxu0 %v2224
  %2454 = vmatpush.bf16.msra.mxu0 %v2223
  %2455 = vmatpush.bf16.msra.mxu0 %v2222
  %2456 = vmatpush.bf16.msra.mxu0 %v2221
  %2457 = vmatpush.bf16.msra.mxu0 %v2220
  %2458 = vmatpush.bf16.msra.mxu0 %v2219
  %2459 = vmatpush.bf16.msra.mxu0 %v2218
  %2460 = vmatmul.bf16.gmra.mxu0 %v2403
  %v2461 = vpop.f32.mrf.mxu0
  %v2462 = vadd.f32 %v2449, %v2461
  %v2463 = vpop.f32.mrf.mxu0
  %2464 = vdwg.mxu0
  %2465 = vmatpush.bf16.msra.mxu0 %v2233
  %2466 = vmatpush.bf16.msra.mxu0 %v2232
  %2467 = vmatpush.bf16.msra.mxu0 %v2231
  %2468 = vmatpush.bf16.msra.mxu0 %v2230
  %2469 = vmatpush.bf16.msra.mxu0 %v2229
  %2470 = vmatpush.bf16.msra.mxu0 %v2228
  %2471 = vmatpush.bf16.msra.mxu0 %v2227
  %2472 = vmatpush.bf16.msra.mxu0 %v2226
  %2473 = vmatmul.bf16.gmra.mxu0 %v2424
  %v2474 = vpop.f32.mrf.mxu0
  %v2475 = vadd.f32 %v2462, %v2474
  %v2476 = vpop.f32.mrf.mxu0
  %2477 = vdwg.mxu0
  %v2478 = vrot.slane %v1963, 4
  %v2479 = vrot.slane %v1964, 4
  %v2480 = vrot.slane %v1965, 4
  %v2481 = vrot.slane %v1966, 4
  %v2482 = vrot.slane %v1967, 4
  %v2483 = vrot.slane %v1968, 4
  %v2484 = vrot.slane %v1969, 4
  %v2485 = vrot.slane %v1970, 4
  %v2486 = vunpack.c.l.b16 %v2478
  %v2487 = vunpack.c.l.b16 %v2479
  %v2488 = vunpack.c.l.b16 %v2480
  %v2489 = vunpack.c.l.b16 %v2481
  %v2490 = vunpack.c.l.b16 %v2482
  %v2491 = vunpack.c.l.b16 %v2483
  %v2492 = vunpack.c.l.b16 %v2484
  %v2493 = vunpack.c.l.b16 %v2485
  %v2494 = vpack.c.b16 %v2486, %v2486
  %v2495 = vpack.c.b16 %v2487, %v2487
  %v2496 = vpack.c.b16 %v2488, %v2488
  %v2497 = vpack.c.b16 %v2489, %v2489
  %v2498 = vpack.c.b16 %v2490, %v2490
  %v2499 = vpack.c.b16 %v2491, %v2491
  %v2500 = vpack.c.b16 %v2492, %v2492
  %v2501 = vpack.c.b16 %v2493, %v2493
  %v2502 = vunpack.c.l.b16 %v2494
  %v2503 = vunpack.c.l.b16 %v2495
  %v2504 = vunpack.c.l.b16 %v2496
  %v2505 = vunpack.c.l.b16 %v2497
  %v2506 = vunpack.c.l.b16 %v2498
  %v2507 = vunpack.c.l.b16 %v2499
  %v2508 = vunpack.c.l.b16 %v2500
  %v2509 = vunpack.c.l.b16 %v2501
  %v2510 = vrot.slane %v2503, 7
  %v2511 = vsel %vm2004, %v2510, %v2502
  %v2512 = vrot.slane %v2504, 6
  %v2513 = vsel %vm2007, %v2512, %v2511
  %v2514 = vrot.slane %v2505, 5
  %v2515 = vsel %vm2010, %v2514, %v2513
  %v2516 = vrot.slane %v2506, 4
  %v2517 = vsel %vm2013, %v2516, %v2515
  %v2518 = vrot.slane %v2507, 3
  %v2519 = vsel %vm2016, %v2518, %v2517
  %v2520 = vrot.slane %v2508, 2
  %v2521 = vsel %vm2019, %v2520, %v2519
  %v2522 = vrot.slane %v2509, 1
  %v2523 = vsel %vm2022, %v2522, %v2521
  %v2524 = vpack.c.b16 %v2523, %v2523
  %v2526 = vrot.slane %v2502, 1
  %v2527 = vsel %vm2004, %v2503, %v2526
  %v2528 = vrot.slane %v2504, 7
  %v2529 = vsel %vm2007, %v2528, %v2527
  %v2530 = vrot.slane %v2505, 6
  %v2531 = vsel %vm2010, %v2530, %v2529
  %v2532 = vrot.slane %v2506, 5
  %v2533 = vsel %vm2013, %v2532, %v2531
  %v2534 = vrot.slane %v2507, 4
  %v2535 = vsel %vm2016, %v2534, %v2533
  %v2536 = vrot.slane %v2508, 3
  %v2537 = vsel %vm2019, %v2536, %v2535
  %v2538 = vrot.slane %v2509, 2
  %v2539 = vsel %vm2022, %v2538, %v2537
  %v2540 = vpack.c.b16 %v2539, %v2539
  %v2542 = vrot.slane %v2502, 2
  %v2543 = vrot.slane %v2503, 1
  %v2544 = vsel %vm2004, %v2543, %v2542
  %v2545 = vsel %vm2007, %v2504, %v2544
  %v2546 = vrot.slane %v2505, 7
  %v2547 = vsel %vm2010, %v2546, %v2545
  %v2548 = vrot.slane %v2506, 6
  %v2549 = vsel %vm2013, %v2548, %v2547
  %v2550 = vrot.slane %v2507, 5
  %v2551 = vsel %vm2016, %v2550, %v2549
  %v2552 = vrot.slane %v2508, 4
  %v2553 = vsel %vm2019, %v2552, %v2551
  %v2554 = vrot.slane %v2509, 3
  %v2555 = vsel %vm2022, %v2554, %v2553
  %v2556 = vpack.c.b16 %v2555, %v2555
  %v2558 = vrot.slane %v2502, 3
  %v2559 = vrot.slane %v2503, 2
  %v2560 = vsel %vm2004, %v2559, %v2558
  %v2561 = vrot.slane %v2504, 1
  %v2562 = vsel %vm2007, %v2561, %v2560
  %v2563 = vsel %vm2010, %v2505, %v2562
  %v2564 = vrot.slane %v2506, 7
  %v2565 = vsel %vm2013, %v2564, %v2563
  %v2566 = vrot.slane %v2507, 6
  %v2567 = vsel %vm2016, %v2566, %v2565
  %v2568 = vrot.slane %v2508, 5
  %v2569 = vsel %vm2019, %v2568, %v2567
  %v2570 = vrot.slane %v2509, 4
  %v2571 = vsel %vm2022, %v2570, %v2569
  %v2572 = vpack.c.b16 %v2571, %v2571
  %2574 = vmatpush.bf16.msra.mxu0 %v2209
  %2575 = vmatpush.bf16.msra.mxu0 %v2208
  %2576 = vmatpush.bf16.msra.mxu0 %v2207
  %2577 = vmatpush.bf16.msra.mxu0 %v2206
  %2578 = vmatpush.bf16.msra.mxu0 %v2205
  %2579 = vmatpush.bf16.msra.mxu0 %v2204
  %2580 = vmatpush.bf16.msra.mxu0 %v2203
  %2581 = vmatpush.bf16.msra.mxu0 %v2202
  %2582 = vmatmul.bf16.gmra.mxu0 %v2524
  %v2583 = vpop.f32.mrf.mxu0
  %v2584 = vadd.f32 0.0, %v2583
  %v2585 = vpop.f32.mrf.mxu0
  %2586 = vdwg.mxu0
  %2587 = vmatpush.bf16.msra.mxu0 %v2217
  %2588 = vmatpush.bf16.msra.mxu0 %v2216
  %2589 = vmatpush.bf16.msra.mxu0 %v2215
  %2590 = vmatpush.bf16.msra.mxu0 %v2214
  %2591 = vmatpush.bf16.msra.mxu0 %v2213
  %2592 = vmatpush.bf16.msra.mxu0 %v2212
  %2593 = vmatpush.bf16.msra.mxu0 %v2211
  %2594 = vmatpush.bf16.msra.mxu0 %v2210
  %2595 = vmatmul.bf16.gmra.mxu0 %v2540
  %v2596 = vpop.f32.mrf.mxu0
  %v2597 = vadd.f32 %v2584, %v2596
  %v2598 = vpop.f32.mrf.mxu0
  %2599 = vdwg.mxu0
  %2600 = vmatpush.bf16.msra.mxu0 %v2225
  %2601 = vmatpush.bf16.msra.mxu0 %v2224
  %2602 = vmatpush.bf16.msra.mxu0 %v2223
  %2603 = vmatpush.bf16.msra.mxu0 %v2222
  %2604 = vmatpush.bf16.msra.mxu0 %v2221
  %2605 = vmatpush.bf16.msra.mxu0 %v2220
  %2606 = vmatpush.bf16.msra.mxu0 %v2219
  %2607 = vmatpush.bf16.msra.mxu0 %v2218
  %2608 = vmatmul.bf16.gmra.mxu0 %v2556
  %v2609 = vpop.f32.mrf.mxu0
  %v2610 = vadd.f32 %v2597, %v2609
  %v2611 = vpop.f32.mrf.mxu0
  %2612 = vdwg.mxu0
  %2613 = vmatpush.bf16.msra.mxu0 %v2233
  %2614 = vmatpush.bf16.msra.mxu0 %v2232
  %2615 = vmatpush.bf16.msra.mxu0 %v2231
  %2616 = vmatpush.bf16.msra.mxu0 %v2230
  %2617 = vmatpush.bf16.msra.mxu0 %v2229
  %2618 = vmatpush.bf16.msra.mxu0 %v2228
  %2619 = vmatpush.bf16.msra.mxu0 %v2227
  %2620 = vmatpush.bf16.msra.mxu0 %v2226
  %2621 = vmatmul.bf16.gmra.mxu0 %v2572
  %v2622 = vpop.f32.mrf.mxu0
  %v2623 = vadd.f32 %v2610, %v2622
  %v2624 = vpop.f32.mrf.mxu0
  %2625 = vdwg.mxu0
  %v2626 = vsel %vm2010, %v2003, %v1995
  %v2627 = vsel %vm2013, %v2006, %v2626
  %v2628 = vsel %vm2016, %v2009, %v2627
  %v2629 = vsel %vm2019, %v2012, %v2628
  %v2630 = vsel %vm2022, %v2015, %v2629
  %v2631 = vsel %vm2004, %v2021, %v2018
  %v2632 = vpack.c.b16 %v2631, %v2630
  %v2633 = vsel %vm2010, %v1996, %v2026
  %v2634 = vsel %vm2013, %v2028, %v2633
  %v2635 = vsel %vm2016, %v2030, %v2634
  %v2636 = vsel %vm2019, %v2032, %v2635
  %v2637 = vsel %vm2022, %v2034, %v2636
  %v2638 = vsel %vm2004, %v2038, %v2036
  %v2639 = vpack.c.b16 %v2638, %v2637
  %v2640 = vsel %vm2010, %v2043, %v2042
  %v2641 = vsel %vm2013, %v1997, %v2640
  %v2642 = vsel %vm2016, %v2046, %v2641
  %v2643 = vsel %vm2019, %v2048, %v2642
  %v2644 = vsel %vm2022, %v2050, %v2643
  %v2645 = vsel %vm2004, %v2054, %v2052
  %v2646 = vpack.c.b16 %v2645, %v2644
  %v2647 = vsel %vm2010, %v2059, %v2058
  %v2648 = vsel %vm2013, %v2061, %v2647
  %v2649 = vsel %vm2016, %v1998, %v2648
  %v2650 = vsel %vm2019, %v2064, %v2649
  %v2651 = vsel %vm2022, %v2066, %v2650
  %v2652 = vsel %vm2004, %v2070, %v2068
  %v2653 = vpack.c.b16 %v2652, %v2651
  %v2654 = vrot.slane %v2632, 1
  %v2655 = vrot.slane %v2639, 1
  %v2656 = vrot.slane %v2646, 1
  %v2657 = vrot.slane %v2653, 1
  %2662 = vmatpush.bf16.msra.mxu0 %v2209
  %2663 = vmatpush.bf16.msra.mxu0 %v2208
  %2664 = vmatpush.bf16.msra.mxu0 %v2207
  %2665 = vmatpush.bf16.msra.mxu0 %v2206
  %2666 = vmatpush.bf16.msra.mxu0 %v2205
  %2667 = vmatpush.bf16.msra.mxu0 %v2204
  %2668 = vmatpush.bf16.msra.mxu0 %v2203
  %2669 = vmatpush.bf16.msra.mxu0 %v2202
  %2670 = vmatmul.bf16.gmra.mxu0 %v2654
  %v2671 = vpop.f32.mrf.mxu0
  %v2672 = vadd.f32 0.0, %v2671
  %v2673 = vpop.f32.mrf.mxu0
  %2674 = vdwg.mxu0
  %2675 = vmatpush.bf16.msra.mxu0 %v2217
  %2676 = vmatpush.bf16.msra.mxu0 %v2216
  %2677 = vmatpush.bf16.msra.mxu0 %v2215
  %2678 = vmatpush.bf16.msra.mxu0 %v2214
  %2679 = vmatpush.bf16.msra.mxu0 %v2213
  %2680 = vmatpush.bf16.msra.mxu0 %v2212
  %2681 = vmatpush.bf16.msra.mxu0 %v2211
  %2682 = vmatpush.bf16.msra.mxu0 %v2210
  %2683 = vmatmul.bf16.gmra.mxu0 %v2655
  %v2684 = vpop.f32.mrf.mxu0
  %v2685 = vadd.f32 %v2672, %v2684
  %v2686 = vpop.f32.mrf.mxu0
  %2687 = vdwg.mxu0
  %2688 = vmatpush.bf16.msra.mxu0 %v2225
  %2689 = vmatpush.bf16.msra.mxu0 %v2224
  %2690 = vmatpush.bf16.msra.mxu0 %v2223
  %2691 = vmatpush.bf16.msra.mxu0 %v2222
  %2692 = vmatpush.bf16.msra.mxu0 %v2221
  %2693 = vmatpush.bf16.msra.mxu0 %v2220
  %2694 = vmatpush.bf16.msra.mxu0 %v2219
  %2695 = vmatpush.bf16.msra.mxu0 %v2218
  %2696 = vmatmul.bf16.gmra.mxu0 %v2656
  %v2697 = vpop.f32.mrf.mxu0
  %v2698 = vadd.f32 %v2685, %v2697
  %v2699 = vpop.f32.mrf.mxu0
  %2700 = vdwg.mxu0
  %2701 = vmatpush.bf16.msra.mxu0 %v2233
  %2702 = vmatpush.bf16.msra.mxu0 %v2232
  %2703 = vmatpush.bf16.msra.mxu0 %v2231
  %2704 = vmatpush.bf16.msra.mxu0 %v2230
  %2705 = vmatpush.bf16.msra.mxu0 %v2229
  %2706 = vmatpush.bf16.msra.mxu0 %v2228
  %2707 = vmatpush.bf16.msra.mxu0 %v2227
  %2708 = vmatpush.bf16.msra.mxu0 %v2226
  %2709 = vmatmul.bf16.gmra.mxu0 %v2657
  %v2710 = vpop.f32.mrf.mxu0
  %v2711 = vadd.f32 %v2698, %v2710
  %v2712 = vpop.f32.mrf.mxu0
  %2713 = vdwg.mxu0
  %v2714 = vsel %vm2010, %v2342, %v2334
  %v2715 = vsel %vm2013, %v2344, %v2714
  %v2716 = vsel %vm2016, %v2346, %v2715
  %v2717 = vsel %vm2019, %v2348, %v2716
  %v2718 = vsel %vm2022, %v2350, %v2717
  %v2719 = vsel %vm2004, %v2354, %v2352
  %v2720 = vpack.c.b16 %v2719, %v2718
  %2721 = vrot.lane.b32.xlu0 %v2632, 64
  %v2722 = vpop.permute.xlu0 %2721
  %2723 = vrot.lane.b32.xlu0 %v2720, 64
  %v2724 = vpop.permute.xlu0 %2723
  %v2725 = vsel %vm515, %v2722, %v2724
  %v2726 = vsel %vm2010, %v2335, %v2363
  %v2727 = vsel %vm2013, %v2365, %v2726
  %v2728 = vsel %vm2016, %v2367, %v2727
  %v2729 = vsel %vm2019, %v2369, %v2728
  %v2730 = vsel %vm2022, %v2371, %v2729
  %v2731 = vsel %vm2004, %v2375, %v2373
  %v2732 = vpack.c.b16 %v2731, %v2730
  %2733 = vrot.lane.b32.xlu0 %v2639, 64
  %v2734 = vpop.permute.xlu0 %2733
  %2735 = vrot.lane.b32.xlu0 %v2732, 64
  %v2736 = vpop.permute.xlu0 %2735
  %v2737 = vsel %vm515, %v2734, %v2736
  %v2738 = vsel %vm2010, %v2385, %v2384
  %v2739 = vsel %vm2013, %v2336, %v2738
  %v2740 = vsel %vm2016, %v2388, %v2739
  %v2741 = vsel %vm2019, %v2390, %v2740
  %v2742 = vsel %vm2022, %v2392, %v2741
  %v2743 = vsel %vm2004, %v2396, %v2394
  %v2744 = vpack.c.b16 %v2743, %v2742
  %2745 = vrot.lane.b32.xlu0 %v2646, 64
  %v2746 = vpop.permute.xlu0 %2745
  %2747 = vrot.lane.b32.xlu0 %v2744, 64
  %v2748 = vpop.permute.xlu0 %2747
  %v2749 = vsel %vm515, %v2746, %v2748
  %v2750 = vsel %vm2010, %v2406, %v2405
  %v2751 = vsel %vm2013, %v2408, %v2750
  %v2752 = vsel %vm2016, %v2337, %v2751
  %v2753 = vsel %vm2019, %v2411, %v2752
  %v2754 = vsel %vm2022, %v2413, %v2753
  %v2755 = vsel %vm2004, %v2417, %v2415
  %v2756 = vpack.c.b16 %v2755, %v2754
  %2757 = vrot.lane.b32.xlu0 %v2653, 64
  %v2758 = vpop.permute.xlu0 %2757
  %2759 = vrot.lane.b32.xlu0 %v2756, 64
  %v2760 = vpop.permute.xlu0 %2759
  %v2761 = vsel %vm515, %v2758, %v2760
  %v2762 = vrot.slane %v2725, 1
  %v2763 = vrot.slane %v2737, 1
  %v2764 = vrot.slane %v2749, 1
  %v2765 = vrot.slane %v2761, 1
  %2770 = vmatpush.bf16.msra.mxu0 %v2209
  %2771 = vmatpush.bf16.msra.mxu0 %v2208
  %2772 = vmatpush.bf16.msra.mxu0 %v2207
  %2773 = vmatpush.bf16.msra.mxu0 %v2206
  %2774 = vmatpush.bf16.msra.mxu0 %v2205
  %2775 = vmatpush.bf16.msra.mxu0 %v2204
  %2776 = vmatpush.bf16.msra.mxu0 %v2203
  %2777 = vmatpush.bf16.msra.mxu0 %v2202
  %2778 = vmatmul.bf16.gmra.mxu0 %v2762
  %v2779 = vpop.f32.mrf.mxu0
  %v2780 = vadd.f32 0.0, %v2779
  %v2781 = vpop.f32.mrf.mxu0
  %2782 = vdwg.mxu0
  %2783 = vmatpush.bf16.msra.mxu0 %v2217
  %2784 = vmatpush.bf16.msra.mxu0 %v2216
  %2785 = vmatpush.bf16.msra.mxu0 %v2215
  %2786 = vmatpush.bf16.msra.mxu0 %v2214
  %2787 = vmatpush.bf16.msra.mxu0 %v2213
  %2788 = vmatpush.bf16.msra.mxu0 %v2212
  %2789 = vmatpush.bf16.msra.mxu0 %v2211
  %2790 = vmatpush.bf16.msra.mxu0 %v2210
  %2791 = vmatmul.bf16.gmra.mxu0 %v2763
  %v2792 = vpop.f32.mrf.mxu0
  %v2793 = vadd.f32 %v2780, %v2792
  %v2794 = vpop.f32.mrf.mxu0
  %2795 = vdwg.mxu0
  %2796 = vmatpush.bf16.msra.mxu0 %v2225
  %2797 = vmatpush.bf16.msra.mxu0 %v2224
  %2798 = vmatpush.bf16.msra.mxu0 %v2223
  %2799 = vmatpush.bf16.msra.mxu0 %v2222
  %2800 = vmatpush.bf16.msra.mxu0 %v2221
  %2801 = vmatpush.bf16.msra.mxu0 %v2220
  %2802 = vmatpush.bf16.msra.mxu0 %v2219
  %2803 = vmatpush.bf16.msra.mxu0 %v2218
  %2804 = vmatmul.bf16.gmra.mxu0 %v2764
  %v2805 = vpop.f32.mrf.mxu0
  %v2806 = vadd.f32 %v2793, %v2805
  %v2807 = vpop.f32.mrf.mxu0
  %2808 = vdwg.mxu0
  %2809 = vmatpush.bf16.msra.mxu0 %v2233
  %2810 = vmatpush.bf16.msra.mxu0 %v2232
  %2811 = vmatpush.bf16.msra.mxu0 %v2231
  %2812 = vmatpush.bf16.msra.mxu0 %v2230
  %2813 = vmatpush.bf16.msra.mxu0 %v2229
  %2814 = vmatpush.bf16.msra.mxu0 %v2228
  %2815 = vmatpush.bf16.msra.mxu0 %v2227
  %2816 = vmatpush.bf16.msra.mxu0 %v2226
  %2817 = vmatmul.bf16.gmra.mxu0 %v2765
  %v2818 = vpop.f32.mrf.mxu0
  %v2819 = vadd.f32 %v2806, %v2818
  %v2820 = vpop.f32.mrf.mxu0
  %2821 = vdwg.mxu0
  %v2822 = vsel %vm2010, %v2510, %v2502
  %v2823 = vsel %vm2013, %v2512, %v2822
  %v2824 = vsel %vm2016, %v2514, %v2823
  %v2825 = vsel %vm2019, %v2516, %v2824
  %v2826 = vsel %vm2022, %v2518, %v2825
  %v2827 = vsel %vm2004, %v2522, %v2520
  %v2828 = vpack.c.b16 %v2827, %v2826
  %v2829 = vsel %vm2010, %v2503, %v2526
  %v2830 = vsel %vm2013, %v2528, %v2829
  %v2831 = vsel %vm2016, %v2530, %v2830
  %v2832 = vsel %vm2019, %v2532, %v2831
  %v2833 = vsel %vm2022, %v2534, %v2832
  %v2834 = vsel %vm2004, %v2538, %v2536
  %v2835 = vpack.c.b16 %v2834, %v2833
  %v2836 = vsel %vm2010, %v2543, %v2542
  %v2837 = vsel %vm2013, %v2504, %v2836
  %v2838 = vsel %vm2016, %v2546, %v2837
  %v2839 = vsel %vm2019, %v2548, %v2838
  %v2840 = vsel %vm2022, %v2550, %v2839
  %v2841 = vsel %vm2004, %v2554, %v2552
  %v2842 = vpack.c.b16 %v2841, %v2840
  %v2843 = vsel %vm2010, %v2559, %v2558
  %v2844 = vsel %vm2013, %v2561, %v2843
  %v2845 = vsel %vm2016, %v2505, %v2844
  %v2846 = vsel %vm2019, %v2564, %v2845
  %v2847 = vsel %vm2022, %v2566, %v2846
  %v2848 = vsel %vm2004, %v2570, %v2568
  %v2849 = vpack.c.b16 %v2848, %v2847
  %v2850 = vrot.slane %v2828, 1
  %v2851 = vrot.slane %v2835, 1
  %v2852 = vrot.slane %v2842, 1
  %v2853 = vrot.slane %v2849, 1
  %2858 = vmatpush.bf16.msra.mxu0 %v2209
  %2859 = vmatpush.bf16.msra.mxu0 %v2208
  %2860 = vmatpush.bf16.msra.mxu0 %v2207
  %2861 = vmatpush.bf16.msra.mxu0 %v2206
  %2862 = vmatpush.bf16.msra.mxu0 %v2205
  %2863 = vmatpush.bf16.msra.mxu0 %v2204
  %2864 = vmatpush.bf16.msra.mxu0 %v2203
  %2865 = vmatpush.bf16.msra.mxu0 %v2202
  %2866 = vmatmul.bf16.gmra.mxu0 %v2850
  %v2867 = vpop.f32.mrf.mxu0
  %v2868 = vadd.f32 0.0, %v2867
  %v2869 = vpop.f32.mrf.mxu0
  %2870 = vdwg.mxu0
  %2871 = vmatpush.bf16.msra.mxu0 %v2217
  %2872 = vmatpush.bf16.msra.mxu0 %v2216
  %2873 = vmatpush.bf16.msra.mxu0 %v2215
  %2874 = vmatpush.bf16.msra.mxu0 %v2214
  %2875 = vmatpush.bf16.msra.mxu0 %v2213
  %2876 = vmatpush.bf16.msra.mxu0 %v2212
  %2877 = vmatpush.bf16.msra.mxu0 %v2211
  %2878 = vmatpush.bf16.msra.mxu0 %v2210
  %2879 = vmatmul.bf16.gmra.mxu0 %v2851
  %v2880 = vpop.f32.mrf.mxu0
  %v2881 = vadd.f32 %v2868, %v2880
  %v2882 = vpop.f32.mrf.mxu0
  %2883 = vdwg.mxu0
  %2884 = vmatpush.bf16.msra.mxu0 %v2225
  %2885 = vmatpush.bf16.msra.mxu0 %v2224
  %2886 = vmatpush.bf16.msra.mxu0 %v2223
  %2887 = vmatpush.bf16.msra.mxu0 %v2222
  %2888 = vmatpush.bf16.msra.mxu0 %v2221
  %2889 = vmatpush.bf16.msra.mxu0 %v2220
  %2890 = vmatpush.bf16.msra.mxu0 %v2219
  %2891 = vmatpush.bf16.msra.mxu0 %v2218
  %2892 = vmatmul.bf16.gmra.mxu0 %v2852
  %v2893 = vpop.f32.mrf.mxu0
  %v2894 = vadd.f32 %v2881, %v2893
  %v2895 = vpop.f32.mrf.mxu0
  %2896 = vdwg.mxu0
  %2897 = vmatpush.bf16.msra.mxu0 %v2233
  %2898 = vmatpush.bf16.msra.mxu0 %v2232
  %2899 = vmatpush.bf16.msra.mxu0 %v2231
  %2900 = vmatpush.bf16.msra.mxu0 %v2230
  %2901 = vmatpush.bf16.msra.mxu0 %v2229
  %2902 = vmatpush.bf16.msra.mxu0 %v2228
  %2903 = vmatpush.bf16.msra.mxu0 %v2227
  %2904 = vmatpush.bf16.msra.mxu0 %v2226
  %2905 = vmatmul.bf16.gmra.mxu0 %v2853
  %v2906 = vpop.f32.mrf.mxu0
  %v2907 = vadd.f32 %v2894, %v2906
  %v2908 = vpop.f32.mrf.mxu0
  %2909 = vdwg.mxu0
  %v2910 = vsel %vm2016, %v2003, %v1995
  %v2911 = vsel %vm2019, %v2006, %v2910
  %v2912 = vsel %vm2022, %v2009, %v2911
  %v2913 = vsel %vm2004, %v2015, %v2012
  %v2914 = vsel %vm2007, %v2018, %v2913
  %v2915 = vsel %vm2010, %v2021, %v2914
  %v2916 = vpack.c.b16 %v2915, %v2912
  %v2917 = vsel %vm2016, %v1996, %v2026
  %v2918 = vsel %vm2019, %v2028, %v2917
  %v2919 = vsel %vm2022, %v2030, %v2918
  %v2920 = vsel %vm2004, %v2034, %v2032
  %v2921 = vsel %vm2007, %v2036, %v2920
  %v2922 = vsel %vm2010, %v2038, %v2921
  %v2923 = vpack.c.b16 %v2922, %v2919
  %v2924 = vsel %vm2016, %v2043, %v2042
  %v2925 = vsel %vm2019, %v1997, %v2924
  %v2926 = vsel %vm2022, %v2046, %v2925
  %v2927 = vsel %vm2004, %v2050, %v2048
  %v2928 = vsel %vm2007, %v2052, %v2927
  %v2929 = vsel %vm2010, %v2054, %v2928
  %v2930 = vpack.c.b16 %v2929, %v2926
  %v2931 = vsel %vm2016, %v2059, %v2058
  %v2932 = vsel %vm2019, %v2061, %v2931
  %v2933 = vsel %vm2022, %v1998, %v2932
  %v2934 = vsel %vm2004, %v2066, %v2064
  %v2935 = vsel %vm2007, %v2068, %v2934
  %v2936 = vsel %vm2010, %v2070, %v2935
  %v2937 = vpack.c.b16 %v2936, %v2933
  %v2938 = vrot.slane %v2916, 2
  %v2939 = vrot.slane %v2923, 2
  %v2940 = vrot.slane %v2930, 2
  %v2941 = vrot.slane %v2937, 2
  %2946 = vmatpush.bf16.msra.mxu0 %v2209
  %2947 = vmatpush.bf16.msra.mxu0 %v2208
  %2948 = vmatpush.bf16.msra.mxu0 %v2207
  %2949 = vmatpush.bf16.msra.mxu0 %v2206
  %2950 = vmatpush.bf16.msra.mxu0 %v2205
  %2951 = vmatpush.bf16.msra.mxu0 %v2204
  %2952 = vmatpush.bf16.msra.mxu0 %v2203
  %2953 = vmatpush.bf16.msra.mxu0 %v2202
  %2954 = vmatmul.bf16.gmra.mxu0 %v2938
  %v2955 = vpop.f32.mrf.mxu0
  %v2956 = vadd.f32 0.0, %v2955
  %v2957 = vpop.f32.mrf.mxu0
  %2958 = vdwg.mxu0
  %2959 = vmatpush.bf16.msra.mxu0 %v2217
  %2960 = vmatpush.bf16.msra.mxu0 %v2216
  %2961 = vmatpush.bf16.msra.mxu0 %v2215
  %2962 = vmatpush.bf16.msra.mxu0 %v2214
  %2963 = vmatpush.bf16.msra.mxu0 %v2213
  %2964 = vmatpush.bf16.msra.mxu0 %v2212
  %2965 = vmatpush.bf16.msra.mxu0 %v2211
  %2966 = vmatpush.bf16.msra.mxu0 %v2210
  %2967 = vmatmul.bf16.gmra.mxu0 %v2939
  %v2968 = vpop.f32.mrf.mxu0
  %v2969 = vadd.f32 %v2956, %v2968
  %v2970 = vpop.f32.mrf.mxu0
  %2971 = vdwg.mxu0
  %2972 = vmatpush.bf16.msra.mxu0 %v2225
  %2973 = vmatpush.bf16.msra.mxu0 %v2224
  %2974 = vmatpush.bf16.msra.mxu0 %v2223
  %2975 = vmatpush.bf16.msra.mxu0 %v2222
  %2976 = vmatpush.bf16.msra.mxu0 %v2221
  %2977 = vmatpush.bf16.msra.mxu0 %v2220
  %2978 = vmatpush.bf16.msra.mxu0 %v2219
  %2979 = vmatpush.bf16.msra.mxu0 %v2218
  %2980 = vmatmul.bf16.gmra.mxu0 %v2940
  %v2981 = vpop.f32.mrf.mxu0
  %v2982 = vadd.f32 %v2969, %v2981
  %v2983 = vpop.f32.mrf.mxu0
  %2984 = vdwg.mxu0
  %2985 = vmatpush.bf16.msra.mxu0 %v2233
  %2986 = vmatpush.bf16.msra.mxu0 %v2232
  %2987 = vmatpush.bf16.msra.mxu0 %v2231
  %2988 = vmatpush.bf16.msra.mxu0 %v2230
  %2989 = vmatpush.bf16.msra.mxu0 %v2229
  %2990 = vmatpush.bf16.msra.mxu0 %v2228
  %2991 = vmatpush.bf16.msra.mxu0 %v2227
  %2992 = vmatpush.bf16.msra.mxu0 %v2226
  %2993 = vmatmul.bf16.gmra.mxu0 %v2941
  %v2994 = vpop.f32.mrf.mxu0
  %v2995 = vadd.f32 %v2982, %v2994
  %v2996 = vpop.f32.mrf.mxu0
  %2997 = vdwg.mxu0
  %v2998 = vsel %vm2016, %v2342, %v2334
  %v2999 = vsel %vm2019, %v2344, %v2998
  %v3000 = vsel %vm2022, %v2346, %v2999
  %v3001 = vsel %vm2004, %v2350, %v2348
  %v3002 = vsel %vm2007, %v2352, %v3001
  %v3003 = vsel %vm2010, %v2354, %v3002
  %v3004 = vpack.c.b16 %v3003, %v3000
  %3005 = vrot.lane.b32.xlu0 %v2916, 64
  %v3006 = vpop.permute.xlu0 %3005
  %3007 = vrot.lane.b32.xlu0 %v3004, 64
  %v3008 = vpop.permute.xlu0 %3007
  %v3009 = vsel %vm515, %v3006, %v3008
  %v3010 = vsel %vm2016, %v2335, %v2363
  %v3011 = vsel %vm2019, %v2365, %v3010
  %v3012 = vsel %vm2022, %v2367, %v3011
  %v3013 = vsel %vm2004, %v2371, %v2369
  %v3014 = vsel %vm2007, %v2373, %v3013
  %v3015 = vsel %vm2010, %v2375, %v3014
  %v3016 = vpack.c.b16 %v3015, %v3012
  %3017 = vrot.lane.b32.xlu0 %v2923, 64
  %v3018 = vpop.permute.xlu0 %3017
  %3019 = vrot.lane.b32.xlu0 %v3016, 64
  %v3020 = vpop.permute.xlu0 %3019
  %v3021 = vsel %vm515, %v3018, %v3020
  %v3022 = vsel %vm2016, %v2385, %v2384
  %v3023 = vsel %vm2019, %v2336, %v3022
  %v3024 = vsel %vm2022, %v2388, %v3023
  %v3025 = vsel %vm2004, %v2392, %v2390
  %v3026 = vsel %vm2007, %v2394, %v3025
  %v3027 = vsel %vm2010, %v2396, %v3026
  %v3028 = vpack.c.b16 %v3027, %v3024
  %3029 = vrot.lane.b32.xlu0 %v2930, 64
  %v3030 = vpop.permute.xlu0 %3029
  %3031 = vrot.lane.b32.xlu0 %v3028, 64
  %v3032 = vpop.permute.xlu0 %3031
  %v3033 = vsel %vm515, %v3030, %v3032
  %v3034 = vsel %vm2016, %v2406, %v2405
  %v3035 = vsel %vm2019, %v2408, %v3034
  %v3036 = vsel %vm2022, %v2337, %v3035
  %v3037 = vsel %vm2004, %v2413, %v2411
  %v3038 = vsel %vm2007, %v2415, %v3037
  %v3039 = vsel %vm2010, %v2417, %v3038
  %v3040 = vpack.c.b16 %v3039, %v3036
  %3041 = vrot.lane.b32.xlu0 %v2937, 64
  %v3042 = vpop.permute.xlu0 %3041
  %3043 = vrot.lane.b32.xlu0 %v3040, 64
  %v3044 = vpop.permute.xlu0 %3043
  %v3045 = vsel %vm515, %v3042, %v3044
  %v3046 = vrot.slane %v3009, 2
  %v3047 = vrot.slane %v3021, 2
  %v3048 = vrot.slane %v3033, 2
  %v3049 = vrot.slane %v3045, 2
  %3054 = vmatpush.bf16.msra.mxu0 %v2209
  %3055 = vmatpush.bf16.msra.mxu0 %v2208
  %3056 = vmatpush.bf16.msra.mxu0 %v2207
  %3057 = vmatpush.bf16.msra.mxu0 %v2206
  %3058 = vmatpush.bf16.msra.mxu0 %v2205
  %3059 = vmatpush.bf16.msra.mxu0 %v2204
  %3060 = vmatpush.bf16.msra.mxu0 %v2203
  %3061 = vmatpush.bf16.msra.mxu0 %v2202
  %3062 = vmatmul.bf16.gmra.mxu0 %v3046
  %v3063 = vpop.f32.mrf.mxu0
  %v3064 = vadd.f32 0.0, %v3063
  %v3065 = vpop.f32.mrf.mxu0
  %3066 = vdwg.mxu0
  %3067 = vmatpush.bf16.msra.mxu0 %v2217
  %3068 = vmatpush.bf16.msra.mxu0 %v2216
  %3069 = vmatpush.bf16.msra.mxu0 %v2215
  %3070 = vmatpush.bf16.msra.mxu0 %v2214
  %3071 = vmatpush.bf16.msra.mxu0 %v2213
  %3072 = vmatpush.bf16.msra.mxu0 %v2212
  %3073 = vmatpush.bf16.msra.mxu0 %v2211
  %3074 = vmatpush.bf16.msra.mxu0 %v2210
  %3075 = vmatmul.bf16.gmra.mxu0 %v3047
  %v3076 = vpop.f32.mrf.mxu0
  %v3077 = vadd.f32 %v3064, %v3076
  %v3078 = vpop.f32.mrf.mxu0
  %3079 = vdwg.mxu0
  %3080 = vmatpush.bf16.msra.mxu0 %v2225
  %3081 = vmatpush.bf16.msra.mxu0 %v2224
  %3082 = vmatpush.bf16.msra.mxu0 %v2223
  %3083 = vmatpush.bf16.msra.mxu0 %v2222
  %3084 = vmatpush.bf16.msra.mxu0 %v2221
  %3085 = vmatpush.bf16.msra.mxu0 %v2220
  %3086 = vmatpush.bf16.msra.mxu0 %v2219
  %3087 = vmatpush.bf16.msra.mxu0 %v2218
  %3088 = vmatmul.bf16.gmra.mxu0 %v3048
  %v3089 = vpop.f32.mrf.mxu0
  %v3090 = vadd.f32 %v3077, %v3089
  %v3091 = vpop.f32.mrf.mxu0
  %3092 = vdwg.mxu0
  %3093 = vmatpush.bf16.msra.mxu0 %v2233
  %3094 = vmatpush.bf16.msra.mxu0 %v2232
  %3095 = vmatpush.bf16.msra.mxu0 %v2231
  %3096 = vmatpush.bf16.msra.mxu0 %v2230
  %3097 = vmatpush.bf16.msra.mxu0 %v2229
  %3098 = vmatpush.bf16.msra.mxu0 %v2228
  %3099 = vmatpush.bf16.msra.mxu0 %v2227
  %3100 = vmatpush.bf16.msra.mxu0 %v2226
  %3101 = vmatmul.bf16.gmra.mxu0 %v3049
  %v3102 = vpop.f32.mrf.mxu0
  %v3103 = vadd.f32 %v3090, %v3102
  %v3104 = vpop.f32.mrf.mxu0
  %3105 = vdwg.mxu0
  %v3106 = vsel %vm2016, %v2510, %v2502
  %v3107 = vsel %vm2019, %v2512, %v3106
  %v3108 = vsel %vm2022, %v2514, %v3107
  %v3109 = vsel %vm2004, %v2518, %v2516
  %v3110 = vsel %vm2007, %v2520, %v3109
  %v3111 = vsel %vm2010, %v2522, %v3110
  %v3112 = vpack.c.b16 %v3111, %v3108
  %v3113 = vsel %vm2016, %v2503, %v2526
  %v3114 = vsel %vm2019, %v2528, %v3113
  %v3115 = vsel %vm2022, %v2530, %v3114
  %v3116 = vsel %vm2004, %v2534, %v2532
  %v3117 = vsel %vm2007, %v2536, %v3116
  %v3118 = vsel %vm2010, %v2538, %v3117
  %v3119 = vpack.c.b16 %v3118, %v3115
  %v3120 = vsel %vm2016, %v2543, %v2542
  %v3121 = vsel %vm2019, %v2504, %v3120
  %v3122 = vsel %vm2022, %v2546, %v3121
  %v3123 = vsel %vm2004, %v2550, %v2548
  %v3124 = vsel %vm2007, %v2552, %v3123
  %v3125 = vsel %vm2010, %v2554, %v3124
  %v3126 = vpack.c.b16 %v3125, %v3122
  %v3127 = vsel %vm2016, %v2559, %v2558
  %v3128 = vsel %vm2019, %v2561, %v3127
  %v3129 = vsel %vm2022, %v2505, %v3128
  %v3130 = vsel %vm2004, %v2566, %v2564
  %v3131 = vsel %vm2007, %v2568, %v3130
  %v3132 = vsel %vm2010, %v2570, %v3131
  %v3133 = vpack.c.b16 %v3132, %v3129
  %v3134 = vrot.slane %v3112, 2
  %v3135 = vrot.slane %v3119, 2
  %v3136 = vrot.slane %v3126, 2
  %v3137 = vrot.slane %v3133, 2
  %3142 = vmatpush.bf16.msra.mxu0 %v2209
  %3143 = vmatpush.bf16.msra.mxu0 %v2208
  %3144 = vmatpush.bf16.msra.mxu0 %v2207
  %3145 = vmatpush.bf16.msra.mxu0 %v2206
  %3146 = vmatpush.bf16.msra.mxu0 %v2205
  %3147 = vmatpush.bf16.msra.mxu0 %v2204
  %3148 = vmatpush.bf16.msra.mxu0 %v2203
  %3149 = vmatpush.bf16.msra.mxu0 %v2202
  %3150 = vmatmul.bf16.gmra.mxu0 %v3134
  %v3151 = vpop.f32.mrf.mxu0
  %v3152 = vadd.f32 0.0, %v3151
  %v3153 = vpop.f32.mrf.mxu0
  %3154 = vdwg.mxu0
  %3155 = vmatpush.bf16.msra.mxu0 %v2217
  %3156 = vmatpush.bf16.msra.mxu0 %v2216
  %3157 = vmatpush.bf16.msra.mxu0 %v2215
  %3158 = vmatpush.bf16.msra.mxu0 %v2214
  %3159 = vmatpush.bf16.msra.mxu0 %v2213
  %3160 = vmatpush.bf16.msra.mxu0 %v2212
  %3161 = vmatpush.bf16.msra.mxu0 %v2211
  %3162 = vmatpush.bf16.msra.mxu0 %v2210
  %3163 = vmatmul.bf16.gmra.mxu0 %v3135
  %v3164 = vpop.f32.mrf.mxu0
  %v3165 = vadd.f32 %v3152, %v3164
  %v3166 = vpop.f32.mrf.mxu0
  %3167 = vdwg.mxu0
  %3168 = vmatpush.bf16.msra.mxu0 %v2225
  %3169 = vmatpush.bf16.msra.mxu0 %v2224
  %3170 = vmatpush.bf16.msra.mxu0 %v2223
  %3171 = vmatpush.bf16.msra.mxu0 %v2222
  %3172 = vmatpush.bf16.msra.mxu0 %v2221
  %3173 = vmatpush.bf16.msra.mxu0 %v2220
  %3174 = vmatpush.bf16.msra.mxu0 %v2219
  %3175 = vmatpush.bf16.msra.mxu0 %v2218
  %3176 = vmatmul.bf16.gmra.mxu0 %v3136
  %v3177 = vpop.f32.mrf.mxu0
  %v3178 = vadd.f32 %v3165, %v3177
  %v3179 = vpop.f32.mrf.mxu0
  %3180 = vdwg.mxu0
  %3181 = vmatpush.bf16.msra.mxu0 %v2233
  %3182 = vmatpush.bf16.msra.mxu0 %v2232
  %3183 = vmatpush.bf16.msra.mxu0 %v2231
  %3184 = vmatpush.bf16.msra.mxu0 %v2230
  %3185 = vmatpush.bf16.msra.mxu0 %v2229
  %3186 = vmatpush.bf16.msra.mxu0 %v2228
  %3187 = vmatpush.bf16.msra.mxu0 %v2227
  %3188 = vmatpush.bf16.msra.mxu0 %v2226
  %3189 = vmatmul.bf16.gmra.mxu0 %v3137
  %v3190 = vpop.f32.mrf.mxu0
  %v3191 = vadd.f32 %v3178, %v3190
  %v3192 = vpop.f32.mrf.mxu0
  %3193 = vdwg.mxu0
  %3195 = vrot.lane.b32.xlu0 %v2475, 64
  %v3196 = vpop.permute.xlu0 %3195
  %3199 = vrot.lane.b32.xlu0 %v2711, 64
  %v3200 = vpop.permute.xlu0 %3199
  %3203 = vrot.lane.b32.xlu0 %v2907, 64
  %v3204 = vpop.permute.xlu0 %3203
  %3207 = vrot.lane.b32.xlu0 %v3103, 64
  %v3208 = vpop.permute.xlu0 %3207
  %v3210 = vsel %vm1883, %v2315, %v3196
  %v3211 = vsel %vm1883, %v2623, %v3200
  %v3212 = vsel %vm1883, %v2819, %v3204
  %v3213 = vsel %vm1883, %v2995, %v3208
  %v3214 = vld [vmem:[%s4] sm:$0x1f]
  %v3216 = vperm.slane %v3214, 0
  %v3217 = vperm.slane %v3214, 1
  %v3218 = vperm.slane %v3214, 2
  %v3219 = vperm.slane %v3214, 3
  %v3220 = vperm.slane %v3214, 4
  %v3226 = vadd.f32 %v3210, %v3216
  %v3227 = vadd.f32 %v3211, %v3217
  %v3228 = vadd.f32 %v3212, %v3218
  %v3229 = vadd.f32 %v3213, %v3219
  %v3230 = vadd.f32 %v3191, %v3220
  %v3231 = vmax.f32 %v3226, 0.0
  %v3232 = vmax.f32 %v3227, 0.0
  %v3233 = vmax.f32 %v3228, 0.0
  %v3234 = vmax.f32 %v3229, 0.0
  %v3235 = vmax.f32 %v3230, 0.0
  %v3236 = vpack.c.bf16 %v3231, %v3231
  %v3237 = vpack.c.bf16 %v3232, %v3232
  %v3238 = vpack.c.bf16 %v3233, %v3233
  %v3239 = vpack.c.bf16 %v3234, %v3234
  %v3240 = vpack.c.bf16 %v3235, %v3235
  %v3241 = vld [vmem:[%s5] sm:$0xf]
  %v3242 = vld [vmem:[%s5 + $0x4] sm:$0xf]
  %v3243 = vld [vmem:[%s5 + $0x8] sm:$0xf]
  %v3244 = vld [vmem:[%s5 + $0xc] sm:$0xf]
  %v3245 = vld [vmem:[%s5 + $0x10] sm:$0xf]
  %v3246 = vld [vmem:[%s5 + $0x14] sm:$0xf]
  %v3247 = vld [vmem:[%s5 + $0x18] sm:$0xf]
  %v3248 = vld [vmem:[%s5 + $0x1c] sm:$0xf]
  %v3249 = vld [vmem:[%s5 + $0x20] sm:$0xf]
  %v3250 = vld [vmem:[%s5 + $0x24] sm:$0xf]
  %v3251 = vld [vmem:[%s5 + $0x28] sm:$0xf]
  %v3252 = vld [vmem:[%s5 + $0x2c] sm:$0xf]
  %v3253 = vld [vmem:[%s5 + $0x30] sm:$0xf]
  %v3254 = vld [vmem:[%s5 + $0x34] sm:$0xf]
  %v3255 = vld [vmem:[%s5 + $0x38] sm:$0xf]
  %v3256 = vld [vmem:[%s5 + $0x3c] sm:$0xf]
  %v3257 = vld [vmem:[%s5 + $0x40] sm:$0xf]
  %v3258 = vld [vmem:[%s5 + $0x44] sm:$0xf]
  %v3259 = vld [vmem:[%s5 + $0x48] sm:$0xf]
  %v3260 = vld [vmem:[%s5 + $0x4c] sm:$0xf]
  %v3261 = vld [vmem:[%s5 + $0x50] sm:$0xf]
  %v3262 = vld [vmem:[%s5 + $0x54] sm:$0xf]
  %v3263 = vld [vmem:[%s5 + $0x58] sm:$0xf]
  %v3264 = vld [vmem:[%s5 + $0x5c] sm:$0xf]
  %v3265 = vld [vmem:[%s5 + $0x60] sm:$0xf]
  %v3266 = vld [vmem:[%s5 + $0x64] sm:$0xf]
  %v3267 = vld [vmem:[%s5 + $0x68] sm:$0xf]
  %v3268 = vld [vmem:[%s5 + $0x6c] sm:$0xf]
  %v3269 = vld [vmem:[%s5 + $0x70] sm:$0xf]
  %v3270 = vld [vmem:[%s5 + $0x74] sm:$0xf]
  %v3271 = vld [vmem:[%s5 + $0x78] sm:$0xf]
  %v3272 = vld [vmem:[%s5 + $0x7c] sm:$0xf]
  %v3273 = vld [vmem:[%s5 + $0x80] sm:$0xf]
  %v3274 = vld [vmem:[%s5 + $0x84] sm:$0xf]
  %v3275 = vld [vmem:[%s5 + $0x88] sm:$0xf]
  %v3276 = vld [vmem:[%s5 + $0x8c] sm:$0xf]
  %v3277 = vld [vmem:[%s5 + $0x90] sm:$0xf]
  %v3278 = vld [vmem:[%s5 + $0x94] sm:$0xf]
  %v3279 = vld [vmem:[%s5 + $0x98] sm:$0xf]
  %v3280 = vld [vmem:[%s5 + $0x9c] sm:$0xf]
  %v3281 = vld [vmem:[%s5 + $0xa0] sm:$0xf]
  %v3282 = vld [vmem:[%s5 + $0xa4] sm:$0xf]
  %v3283 = vld [vmem:[%s5 + $0xa8] sm:$0xf]
  %v3284 = vld [vmem:[%s5 + $0xac] sm:$0xf]
  %v3285 = vld [vmem:[%s5 + $0xb0] sm:$0xf]
  %v3286 = vld [vmem:[%s5 + $0xb4] sm:$0xf]
  %v3287 = vld [vmem:[%s5 + $0xb8] sm:$0xf]
  %v3288 = vld [vmem:[%s5 + $0xbc] sm:$0xf]
  %v3289 = vld [vmem:[%s5 + $0xc0] sm:$0xf]
  %v3290 = vld [vmem:[%s5 + $0xc4] sm:$0xf]
  %v3291 = vld [vmem:[%s5 + $0xc8] sm:$0xf]
  %v3292 = vld [vmem:[%s5 + $0xcc] sm:$0xf]
  %v3293 = vld [vmem:[%s5 + $0xd0] sm:$0xf]
  %v3294 = vld [vmem:[%s5 + $0xd4] sm:$0xf]
  %v3295 = vld [vmem:[%s5 + $0xd8] sm:$0xf]
  %v3296 = vld [vmem:[%s5 + $0xdc] sm:$0xf]
  %v3297 = vld [vmem:[%s5 + $0xe0] sm:$0xf]
  %v3298 = vld [vmem:[%s5 + $0xe4] sm:$0xf]
  %v3299 = vld [vmem:[%s5 + $0xe8] sm:$0xf]
  %v3300 = vld [vmem:[%s5 + $0xec] sm:$0xf]
  %v3301 = vld [vmem:[%s5 + $0xf0] sm:$0xf]
  %v3302 = vld [vmem:[%s5 + $0xf4] sm:$0xf]
  %v3303 = vld [vmem:[%s5 + $0xf8] sm:$0xf]
  %v3304 = vld [vmem:[%s5 + $0xfc] sm:$0xf]
  %v3305 = vld [vmem:[%s5 + $0x100] sm:$0xf]
  %v3306 = vld [vmem:[%s5 + $0x104] sm:$0xf]
  %v3307 = vld [vmem:[%s5 + $0x108] sm:$0xf]
  %v3308 = vld [vmem:[%s5 + $0x10c] sm:$0xf]
  %v3309 = vld [vmem:[%s5 + $0x110] sm:$0xf]
  %v3310 = vld [vmem:[%s5 + $0x114] sm:$0xf]
  %v3311 = vld [vmem:[%s5 + $0x118] sm:$0xf]
  %v3312 = vld [vmem:[%s5 + $0x11c] sm:$0xf]
  %v3313 = vld [vmem:[%s6] sm:$0x1]
  %v3315 = vperm.slane %v3313, 0
  %v3389 = vunpack.c.l.b16 %v3241
  %v3390 = vunpack.c.l.b16 %v3242
  %v3391 = vunpack.c.l.b16 %v3243
  %v3392 = vunpack.c.l.b16 %v3244
  %v3393 = vunpack.c.l.b16 %v3245
  %v3394 = vunpack.c.l.b16 %v3246
  %v3395 = vunpack.c.l.b16 %v3247
  %v3396 = vunpack.c.l.b16 %v3248
  %v3397 = vunpack.c.l.b16 %v3249
  %v3398 = vunpack.c.l.b16 %v3250
  %v3399 = vunpack.c.l.b16 %v3251
  %v3400 = vunpack.c.l.b16 %v3252
  %v3401 = vunpack.c.l.b16 %v3253
  %v3402 = vunpack.c.l.b16 %v3254
  %v3403 = vunpack.c.l.b16 %v3255
  %v3404 = vunpack.c.l.b16 %v3256
  %v3405 = vunpack.c.l.b16 %v3257
  %v3406 = vunpack.c.l.b16 %v3258
  %v3407 = vunpack.c.l.b16 %v3259
  %v3408 = vunpack.c.l.b16 %v3260
  %v3409 = vunpack.c.l.b16 %v3261
  %v3410 = vunpack.c.l.b16 %v3262
  %v3411 = vunpack.c.l.b16 %v3263
  %v3412 = vunpack.c.l.b16 %v3264
  %v3413 = vunpack.c.l.b16 %v3265
  %v3414 = vunpack.c.l.b16 %v3266
  %v3415 = vunpack.c.l.b16 %v3267
  %v3416 = vunpack.c.l.b16 %v3268
  %v3417 = vunpack.c.l.b16 %v3269
  %v3418 = vunpack.c.l.b16 %v3270
  %v3419 = vunpack.c.l.b16 %v3271
  %v3420 = vunpack.c.l.b16 %v3272
  %v3421 = vunpack.c.l.b16 %v3273
  %v3422 = vunpack.c.l.b16 %v3274
  %v3423 = vunpack.c.l.b16 %v3275
  %v3424 = vunpack.c.l.b16 %v3276
  %v3425 = vunpack.c.l.b16 %v3277
  %v3426 = vunpack.c.l.b16 %v3278
  %v3427 = vunpack.c.l.b16 %v3279
  %v3428 = vunpack.c.l.b16 %v3280
  %v3429 = vunpack.c.l.b16 %v3281
  %v3430 = vunpack.c.l.b16 %v3282
  %v3431 = vunpack.c.l.b16 %v3283
  %v3432 = vunpack.c.l.b16 %v3284
  %v3433 = vunpack.c.l.b16 %v3285
  %v3434 = vunpack.c.l.b16 %v3286
  %v3435 = vunpack.c.l.b16 %v3287
  %v3436 = vunpack.c.l.b16 %v3288
  %v3437 = vunpack.c.l.b16 %v3289
  %v3438 = vunpack.c.l.b16 %v3290
  %v3439 = vunpack.c.l.b16 %v3291
  %v3440 = vunpack.c.l.b16 %v3292
  %v3441 = vunpack.c.l.b16 %v3293
  %v3442 = vunpack.c.l.b16 %v3294
  %v3443 = vunpack.c.l.b16 %v3295
  %v3444 = vunpack.c.l.b16 %v3296
  %v3445 = vunpack.c.l.b16 %v3297
  %v3446 = vunpack.c.l.b16 %v3298
  %v3447 = vunpack.c.l.b16 %v3299
  %v3448 = vunpack.c.l.b16 %v3300
  %v3449 = vunpack.c.l.b16 %v3301
  %v3450 = vunpack.c.l.b16 %v3302
  %v3451 = vunpack.c.l.b16 %v3303
  %v3452 = vunpack.c.l.b16 %v3304
  %v3453 = vunpack.c.l.b16 %v3305
  %v3454 = vunpack.c.l.b16 %v3306
  %v3455 = vunpack.c.l.b16 %v3307
  %v3456 = vunpack.c.l.b16 %v3308
  %v3457 = vunpack.c.l.b16 %v3309
  %v3458 = vunpack.c.l.b16 %v3310
  %v3459 = vunpack.c.l.b16 %v3311
  %v3460 = vunpack.c.l.b16 %v3312
  %v3461 = vpack.c.b16 %v3390, %v3389
  %v3462 = vpack.c.b16 %v3392, %v3391
  %v3463 = vpack.c.b16 %v3394, %v3393
  %v3464 = vpack.c.b16 %v3396, %v3395
  %v3465 = vpack.c.b16 %v3398, %v3397
  %v3466 = vpack.c.b16 %v3400, %v3399
  %v3467 = vpack.c.b16 %v3402, %v3401
  %v3468 = vpack.c.b16 %v3404, %v3403
  %v3469 = vpack.c.b16 %v3406, %v3405
  %v3470 = vpack.c.b16 %v3408, %v3407
  %v3471 = vpack.c.b16 %v3410, %v3409
  %v3472 = vpack.c.b16 %v3412, %v3411
  %v3473 = vpack.c.b16 %v3414, %v3413
  %v3474 = vpack.c.b16 %v3416, %v3415
  %v3475 = vpack.c.b16 %v3418, %v3417
  %v3476 = vpack.c.b16 %v3420, %v3419
  %v3477 = vpack.c.b16 %v3422, %v3421
  %v3478 = vpack.c.b16 %v3424, %v3423
  %v3479 = vpack.c.b16 %v3426, %v3425
  %v3480 = vpack.c.b16 %v3428, %v3427
  %v3481 = vpack.c.b16 %v3430, %v3429
  %v3482 = vpack.c.b16 %v3432, %v3431
  %v3483 = vpack.c.b16 %v3434, %v3433
  %v3484 = vpack.c.b16 %v3436, %v3435
  %v3485 = vpack.c.b16 %v3438, %v3437
  %v3486 = vpack.c.b16 %v3440, %v3439
  %v3487 = vpack.c.b16 %v3442, %v3441
  %v3488 = vpack.c.b16 %v3444, %v3443
  %v3489 = vpack.c.b16 %v3446, %v3445
  %v3490 = vpack.c.b16 %v3448, %v3447
  %v3491 = vpack.c.b16 %v3450, %v3449
  %v3492 = vpack.c.b16 %v3452, %v3451
  %v3493 = vpack.c.b16 %v3454, %v3453
  %v3494 = vpack.c.b16 %v3456, %v3455
  %v3495 = vpack.c.b16 %v3458, %v3457
  %v3496 = vpack.c.b16 %v3460, %v3459
  %v3534 = vsel %vm1883, %v3240, 0
  %3536 = vmatpush.bf16.msra.mxu0 %v3468
  %3537 = vmatpush.bf16.msra.mxu0 %v3467
  %3538 = vmatpush.bf16.msra.mxu0 %v3466
  %3539 = vmatpush.bf16.msra.mxu0 %v3465
  %3540 = vmatpush.bf16.msra.mxu0 %v3464
  %3541 = vmatpush.bf16.msra.mxu0 %v3463
  %3542 = vmatpush.bf16.msra.mxu0 %v3462
  %3543 = vmatpush.bf16.msra.mxu0 %v3461
  %3544 = vmatmul.bf16.gmra.mxu0 %v3236
  %v3545 = vpop.f32.mrf.mxu0
  %v3546 = vadd.f32 %v3315, %v3545
  %v3547 = vpop.f32.mrf.mxu0
  %3548 = vdwg.mxu0
  %3549 = vmatpush.bf16.msra.mxu0 %v3476
  %3550 = vmatpush.bf16.msra.mxu0 %v3475
  %3551 = vmatpush.bf16.msra.mxu0 %v3474
  %3552 = vmatpush.bf16.msra.mxu0 %v3473
  %3553 = vmatpush.bf16.msra.mxu0 %v3472
  %3554 = vmatpush.bf16.msra.mxu0 %v3471
  %3555 = vmatpush.bf16.msra.mxu0 %v3470
  %3556 = vmatpush.bf16.msra.mxu0 %v3469
  %3557 = vmatmul.bf16.gmra.mxu0 %v3237
  %v3558 = vpop.f32.mrf.mxu0
  %v3559 = vadd.f32 %v3546, %v3558
  %v3560 = vpop.f32.mrf.mxu0
  %3561 = vdwg.mxu0
  %3562 = vmatpush.bf16.msra.mxu0 %v3484
  %3563 = vmatpush.bf16.msra.mxu0 %v3483
  %3564 = vmatpush.bf16.msra.mxu0 %v3482
  %3565 = vmatpush.bf16.msra.mxu0 %v3481
  %3566 = vmatpush.bf16.msra.mxu0 %v3480
  %3567 = vmatpush.bf16.msra.mxu0 %v3479
  %3568 = vmatpush.bf16.msra.mxu0 %v3478
  %3569 = vmatpush.bf16.msra.mxu0 %v3477
  %3570 = vmatmul.bf16.gmra.mxu0 %v3238
  %v3571 = vpop.f32.mrf.mxu0
  %v3572 = vadd.f32 %v3559, %v3571
  %v3573 = vpop.f32.mrf.mxu0
  %3574 = vdwg.mxu0
  %3575 = vmatpush.bf16.msra.mxu0 %v3492
  %3576 = vmatpush.bf16.msra.mxu0 %v3491
  %3577 = vmatpush.bf16.msra.mxu0 %v3490
  %3578 = vmatpush.bf16.msra.mxu0 %v3489
  %3579 = vmatpush.bf16.msra.mxu0 %v3488
  %3580 = vmatpush.bf16.msra.mxu0 %v3487
  %3581 = vmatpush.bf16.msra.mxu0 %v3486
  %3582 = vmatpush.bf16.msra.mxu0 %v3485
  %3583 = vmatmul.bf16.gmra.mxu0 %v3239
  %v3584 = vpop.f32.mrf.mxu0
  %v3585 = vadd.f32 %v3572, %v3584
  %v3586 = vpop.f32.mrf.mxu0
  %3587 = vdwg.mxu0
  %3588 = vmatpush.bf16.msra.mxu0 0
  %3589 = vmatpush.bf16.msra.mxu0 0
  %3590 = vmatpush.bf16.msra.mxu0 0
  %3591 = vmatpush.bf16.msra.mxu0 0
  %3592 = vmatpush.bf16.msra.mxu0 %v3496
  %3593 = vmatpush.bf16.msra.mxu0 %v3495
  %3594 = vmatpush.bf16.msra.mxu0 %v3494
  %3595 = vmatpush.bf16.msra.mxu0 %v3493
  %3596 = vmatmul.bf16.gmra.mxu0 %v3534
  %v3597 = vpop.f32.mrf.mxu0
  %v3598 = vadd.f32 %v3585, %v3597
  %v3599 = vpop.f32.mrf.mxu0
  %3600 = vdwg.mxu0
  %v3601 = vmax.f32 %v3598, 0.0
  %v3602 = vpack.c.bf16 %v3601, %v3601
  %v3603 = vld [vmem:[%s7] sm:$0xff]
  %v3604 = vld [vmem:[%s7 + $0x8] sm:$0xff]
  %v3605 = vld [vmem:[%s7 + $0x10] sm:$0xff]
  %v3606 = vld [vmem:[%s7 + $0x18] sm:$0xff]
  %v3607 = vld [vmem:[%s7 + $0x20] sm:$0xff]
  %v3608 = vld [vmem:[%s7 + $0x28] sm:$0xff]
  %v3609 = vld [vmem:[%s7 + $0x30] sm:$0xff]
  %v3610 = vld [vmem:[%s7 + $0x38] sm:$0xff]
  %v3611 = vld [vmem:[%s7 + $0x40] sm:$0xff]
  %v3612 = vld [vmem:[%s7 + $0x48] sm:$0xff]
  %v3613 = vld [vmem:[%s7 + $0x50] sm:$0xff]
  %v3614 = vld [vmem:[%s7 + $0x58] sm:$0xff]
  %v3615 = vld [vmem:[%s7 + $0x60] sm:$0xff]
  %v3616 = vld [vmem:[%s7 + $0x68] sm:$0xff]
  %v3617 = vld [vmem:[%s7 + $0x70] sm:$0xff]
  %v3618 = vld [vmem:[%s7 + $0x78] sm:$0xff]
  %v3619 = vld [vmem:[%s8] sm:$0xf]
  %v3621 = vperm.slane %v3619, 0
  %v3622 = vperm.slane %v3619, 1
  %v3623 = vperm.slane %v3619, 2
  %v3624 = vperm.slane %v3619, 3
  %v3645 = vunpack.c.l.b16 %v3603
  %v3646 = vunpack.c.h.b16 %v3603
  %v3647 = vunpack.c.l.b16 %v3604
  %v3648 = vunpack.c.h.b16 %v3604
  %v3649 = vunpack.c.l.b16 %v3605
  %v3650 = vunpack.c.h.b16 %v3605
  %v3651 = vunpack.c.l.b16 %v3606
  %v3652 = vunpack.c.h.b16 %v3606
  %v3653 = vunpack.c.l.b16 %v3607
  %v3654 = vunpack.c.h.b16 %v3607
  %v3655 = vunpack.c.l.b16 %v3608
  %v3656 = vunpack.c.h.b16 %v3608
  %v3657 = vunpack.c.l.b16 %v3609
  %v3658 = vunpack.c.h.b16 %v3609
  %v3659 = vunpack.c.l.b16 %v3610
  %v3660 = vunpack.c.h.b16 %v3610
  %v3661 = vunpack.c.l.b16 %v3611
  %v3662 = vunpack.c.h.b16 %v3611
  %v3663 = vunpack.c.l.b16 %v3612
  %v3664 = vunpack.c.h.b16 %v3612
  %v3665 = vunpack.c.l.b16 %v3613
  %v3666 = vunpack.c.h.b16 %v3613
  %v3667 = vunpack.c.l.b16 %v3614
  %v3668 = vunpack.c.h.b16 %v3614
  %v3669 = vunpack.c.l.b16 %v3615
  %v3670 = vunpack.c.h.b16 %v3615
  %v3671 = vunpack.c.l.b16 %v3616
  %v3672 = vunpack.c.h.b16 %v3616
  %v3673 = vunpack.c.l.b16 %v3617
  %v3674 = vunpack.c.h.b16 %v3617
  %v3675 = vunpack.c.l.b16 %v3618
  %v3676 = vunpack.c.h.b16 %v3618
  %v3677 = vpack.c.b16 %v3649, %v3645
  %v3678 = vpack.c.b16 %v3650, %v3646
  %v3679 = vpack.c.b16 %v3651, %v3647
  %v3680 = vpack.c.b16 %v3652, %v3648
  %v3681 = vpack.c.b16 %v3657, %v3653
  %v3682 = vpack.c.b16 %v3658, %v3654
  %v3683 = vpack.c.b16 %v3659, %v3655
  %v3684 = vpack.c.b16 %v3660, %v3656
  %v3685 = vpack.c.b16 %v3665, %v3661
  %v3686 = vpack.c.b16 %v3666, %v3662
  %v3687 = vpack.c.b16 %v3667, %v3663
  %v3688 = vpack.c.b16 %v3668, %v3664
  %v3689 = vpack.c.b16 %v3673, %v3669
  %v3690 = vpack.c.b16 %v3674, %v3670
  %v3691 = vpack.c.b16 %v3675, %v3671
  %v3692 = vpack.c.b16 %v3676, %v3672
  %v3710 = vsel %vm1883, %v3602, 0
  %3712 = vmatpush.bf16.msra.mxu0 0
  %3713 = vmatpush.bf16.msra.mxu0 0
  %3714 = vmatpush.bf16.msra.mxu0 0
  %3715 = vmatpush.bf16.msra.mxu0 0
  %3716 = vmatpush.bf16.msra.mxu0 %v3689
  %3717 = vmatpush.bf16.msra.mxu0 %v3685
  %3718 = vmatpush.bf16.msra.mxu0 %v3681
  %3719 = vmatpush.bf16.msra.mxu0 %v3677
  %3720 = vmatmul.bf16.gmra.mxu0 %v3710
  %v3721 = vpop.f32.mrf.mxu0
  %v3722 = vadd.f32 %v3621, %v3721
  %v3723 = vpop.f32.mrf.mxu0
  %3724 = vdwg.mxu0
  %3725 = vmatpush.bf16.msra.mxu0 0
  %3726 = vmatpush.bf16.msra.mxu0 0
  %3727 = vmatpush.bf16.msra.mxu0 0
  %3728 = vmatpush.bf16.msra.mxu0 0
  %3729 = vmatpush.bf16.msra.mxu0 %v3690
  %3730 = vmatpush.bf16.msra.mxu0 %v3686
  %3731 = vmatpush.bf16.msra.mxu0 %v3682
  %3732 = vmatpush.bf16.msra.mxu0 %v3678
  %3733 = vmatmul.bf16.gmra.mxu0 %v3710
  %v3734 = vpop.f32.mrf.mxu0
  %v3735 = vadd.f32 %v3622, %v3734
  %v3736 = vpop.f32.mrf.mxu0
  %3737 = vdwg.mxu0
  %3738 = vmatpush.bf16.msra.mxu0 0
  %3739 = vmatpush.bf16.msra.mxu0 0
  %3740 = vmatpush.bf16.msra.mxu0 0
  %3741 = vmatpush.bf16.msra.mxu0 0
  %3742 = vmatpush.bf16.msra.mxu0 %v3691
  %3743 = vmatpush.bf16.msra.mxu0 %v3687
  %3744 = vmatpush.bf16.msra.mxu0 %v3683
  %3745 = vmatpush.bf16.msra.mxu0 %v3679
  %3746 = vmatmul.bf16.gmra.mxu0 %v3710
  %v3747 = vpop.f32.mrf.mxu0
  %v3748 = vadd.f32 %v3623, %v3747
  %v3749 = vpop.f32.mrf.mxu0
  %3750 = vdwg.mxu0
  %3751 = vmatpush.bf16.msra.mxu0 0
  %3752 = vmatpush.bf16.msra.mxu0 0
  %3753 = vmatpush.bf16.msra.mxu0 0
  %3754 = vmatpush.bf16.msra.mxu0 0
  %3755 = vmatpush.bf16.msra.mxu0 %v3692
  %3756 = vmatpush.bf16.msra.mxu0 %v3688
  %3757 = vmatpush.bf16.msra.mxu0 %v3684
  %3758 = vmatpush.bf16.msra.mxu0 %v3680
  %3759 = vmatmul.bf16.gmra.mxu0 %v3710
  %v3760 = vpop.f32.mrf.mxu0
  %v3761 = vadd.f32 %v3624, %v3760
  %v3762 = vpop.f32.mrf.mxu0
  %3763 = vdwg.mxu0
  %v3764 = vmax.f32 %v3722, 0.0
  %v3765 = vmax.f32 %v3735, 0.0
  %v3766 = vmax.f32 %v3748, 0.0
  %v3767 = vmax.f32 %v3761, 0.0
  %v3768 = vpack.c.bf16 %v3764, %v3764
  %v3769 = vpack.c.bf16 %v3765, %v3765
  %v3770 = vpack.c.bf16 %v3766, %v3766
  %v3771 = vpack.c.bf16 %v3767, %v3767
  %v3772 = vld [vmem:[%s9] sm:$0xff]
  %v3773 = vld [vmem:[%s9 + $0x8] sm:$0xf]
  %v3774 = vld [vmem:[%s9 + $0xc] sm:$0xff]
  %v3775 = vld [vmem:[%s9 + $0x14] sm:$0xf]
  %v3776 = vld [vmem:[%s9 + $0x18] sm:$0xff]
  %v3777 = vld [vmem:[%s9 + $0x20] sm:$0xf]
  %v3778 = vld [vmem:[%s9 + $0x24] sm:$0xff]
  %v3779 = vld [vmem:[%s9 + $0x2c] sm:$0xf]
  %v3780 = vld [vmem:[%s9 + $0x30] sm:$0xff]
  %v3781 = vld [vmem:[%s9 + $0x38] sm:$0xf]
  %v3782 = vld [vmem:[%s9 + $0x3c] sm:$0xff]
  %v3783 = vld [vmem:[%s9 + $0x44] sm:$0xf]
  %v3784 = vld [vmem:[%s9 + $0x48] sm:$0xff]
  %v3785 = vld [vmem:[%s9 + $0x50] sm:$0xf]
  %v3786 = vld [vmem:[%s9 + $0x54] sm:$0xff]
  %v3787 = vld [vmem:[%s9 + $0x5c] sm:$0xf]
  %v3788 = vld [vmem:[%s9 + $0x60] sm:$0xff]
  %v3789 = vld [vmem:[%s9 + $0x68] sm:$0xf]
  %v3790 = vld [vmem:[%s9 + $0x6c] sm:$0xff]
  %v3791 = vld [vmem:[%s9 + $0x74] sm:$0xf]
  %v3792 = vld [vmem:[%s9 + $0x78] sm:$0xff]
  %v3793 = vld [vmem:[%s9 + $0x80] sm:$0xf]
  %v3794 = vld [vmem:[%s9 + $0x84] sm:$0xff]
  %v3795 = vld [vmem:[%s9 + $0x8c] sm:$0xf]
  %v3796 = vld [vmem:[%s9 + $0x90] sm:$0xff]
  %v3797 = vld [vmem:[%s9 + $0x98] sm:$0xf]
  %v3798 = vld [vmem:[%s9 + $0x9c] sm:$0xff]
  %v3799 = vld [vmem:[%s9 + $0xa4] sm:$0xf]
  %v3800 = vld [vmem:[%s9 + $0xa8] sm:$0xff]
  %v3801 = vld [vmem:[%s9 + $0xb0] sm:$0xf]
  %v3802 = vld [vmem:[%s9 + $0xb4] sm:$0xff]
  %v3803 = vld [vmem:[%s9 + $0xbc] sm:$0xf]
  %v3804 = vld [vmem:[%s9 + $0xc0] sm:$0xff]
  %v3805 = vld [vmem:[%s9 + $0xc8] sm:$0xf]
  %v3806 = vld [vmem:[%s9 + $0xcc] sm:$0xff]
  %v3807 = vld [vmem:[%s9 + $0xd4] sm:$0xf]
  %v3808 = vld [vmem:[%s9 + $0xd8] sm:$0xff]
  %v3809 = vld [vmem:[%s9 + $0xe0] sm:$0xf]
  %v3810 = vld [vmem:[%s9 + $0xe4] sm:$0xff]
  %v3811 = vld [vmem:[%s9 + $0xec] sm:$0xf]
  %v3812 = vld [vmem:[%s9 + $0xf0] sm:$0xff]
  %v3813 = vld [vmem:[%s9 + $0xf8] sm:$0xf]
  %v3814 = vld [vmem:[%s9 + $0xfc] sm:$0xff]
  %v3815 = vld [vmem:[%s9 + $0x104] sm:$0xf]
  %v3816 = vld [vmem:[%s9 + $0x108] sm:$0xff]
  %v3817 = vld [vmem:[%s9 + $0x110] sm:$0xf]
  %v3818 = vld [vmem:[%s9 + $0x114] sm:$0xff]
  %v3819 = vld [vmem:[%s9 + $0x11c] sm:$0xf]
  %v3820 = vld [vmem:[%s9 + $0x120] sm:$0xff]
  %v3821 = vld [vmem:[%s9 + $0x128] sm:$0xf]
  %v3822 = vld [vmem:[%s9 + $0x12c] sm:$0xff]
  %v3823 = vld [vmem:[%s9 + $0x134] sm:$0xf]
  %v3824 = vld [vmem:[%s9 + $0x138] sm:$0xff]
  %v3825 = vld [vmem:[%s9 + $0x140] sm:$0xf]
  %v3826 = vld [vmem:[%s9 + $0x144] sm:$0xff]
  %v3827 = vld [vmem:[%s9 + $0x14c] sm:$0xf]
  %v3828 = vld [vmem:[%s9 + $0x150] sm:$0xff]
  %v3829 = vld [vmem:[%s9 + $0x158] sm:$0xf]
  %v3830 = vld [vmem:[%s9 + $0x15c] sm:$0xff]
  %v3831 = vld [vmem:[%s9 + $0x164] sm:$0xf]
  %v3832 = vld [vmem:[%s9 + $0x168] sm:$0xff]
  %v3833 = vld [vmem:[%s9 + $0x170] sm:$0xf]
  %v3834 = vld [vmem:[%s9 + $0x174] sm:$0xff]
  %v3835 = vld [vmem:[%s9 + $0x17c] sm:$0xf]
  %v3836 = vld [vmem:[%s9 + $0x180] sm:$0xff]
  %v3837 = vld [vmem:[%s9 + $0x188] sm:$0xf]
  %v3838 = vld [vmem:[%s9 + $0x18c] sm:$0xff]
  %v3839 = vld [vmem:[%s9 + $0x194] sm:$0xf]
  %v3840 = vld [vmem:[%s9 + $0x198] sm:$0xff]
  %v3841 = vld [vmem:[%s9 + $0x1a0] sm:$0xf]
  %v3842 = vld [vmem:[%s9 + $0x1a4] sm:$0xff]
  %v3843 = vld [vmem:[%s9 + $0x1ac] sm:$0xf]
  %v3844 = vld [vmem:[%s9 + $0x1b0] sm:$0xff]
  %v3845 = vld [vmem:[%s9 + $0x1b8] sm:$0xf]
  %v3846 = vld [vmem:[%s9 + $0x1bc] sm:$0xff]
  %v3847 = vld [vmem:[%s9 + $0x1c4] sm:$0xf]
  %v3848 = vld [vmem:[%s9 + $0x1c8] sm:$0xff]
  %v3849 = vld [vmem:[%s9 + $0x1d0] sm:$0xf]
  %v3850 = vld [vmem:[%s9 + $0x1d4] sm:$0xff]
  %v3851 = vld [vmem:[%s9 + $0x1dc] sm:$0xf]
  %v3852 = vld [vmem:[%s9 + $0x1e0] sm:$0xff]
  %v3853 = vld [vmem:[%s9 + $0x1e8] sm:$0xf]
  %v3854 = vld [vmem:[%s9 + $0x1ec] sm:$0xff]
  %v3855 = vld [vmem:[%s9 + $0x1f4] sm:$0xf]
  %v3856 = vld [vmem:[%s9 + $0x1f8] sm:$0xff]
  %v3857 = vld [vmem:[%s9 + $0x200] sm:$0xf]
  %v3858 = vld [vmem:[%s9 + $0x204] sm:$0xff]
  %v3859 = vld [vmem:[%s9 + $0x20c] sm:$0xf]
  %v3860 = vld [vmem:[%s9 + $0x210] sm:$0xff]
  %v3861 = vld [vmem:[%s9 + $0x218] sm:$0xf]
  %v3862 = vld [vmem:[%s9 + $0x21c] sm:$0xff]
  %v3863 = vld [vmem:[%s9 + $0x224] sm:$0xf]
  %v3864 = vld [vmem:[%s9 + $0x228] sm:$0xff]
  %v3865 = vld [vmem:[%s9 + $0x230] sm:$0xf]
  %v3866 = vld [vmem:[%s9 + $0x234] sm:$0xff]
  %v3867 = vld [vmem:[%s9 + $0x23c] sm:$0xf]
  %v3868 = vld [vmem:[%s9 + $0x240] sm:$0xff]
  %v3869 = vld [vmem:[%s9 + $0x248] sm:$0xf]
  %v3870 = vld [vmem:[%s9 + $0x24c] sm:$0xff]
  %v3871 = vld [vmem:[%s9 + $0x254] sm:$0xf]
  %v3872 = vld [vmem:[%s9 + $0x258] sm:$0xff]
  %v3873 = vld [vmem:[%s9 + $0x260] sm:$0xf]
  %v3874 = vld [vmem:[%s9 + $0x264] sm:$0xff]
  %v3875 = vld [vmem:[%s9 + $0x26c] sm:$0xf]
  %v3876 = vld [vmem:[%s9 + $0x270] sm:$0xff]
  %v3877 = vld [vmem:[%s9 + $0x278] sm:$0xf]
  %v3878 = vld [vmem:[%s9 + $0x27c] sm:$0xff]
  %v3879 = vld [vmem:[%s9 + $0x284] sm:$0xf]
  %v3880 = vld [vmem:[%s9 + $0x288] sm:$0xff]
  %v3881 = vld [vmem:[%s9 + $0x290] sm:$0xf]
  %v3882 = vld [vmem:[%s9 + $0x294] sm:$0xff]
  %v3883 = vld [vmem:[%s9 + $0x29c] sm:$0xf]
  %v3884 = vld [vmem:[%s9 + $0x2a0] sm:$0xff]
  %v3885 = vld [vmem:[%s9 + $0x2a8] sm:$0xf]
  %v3886 = vld [vmem:[%s9 + $0x2ac] sm:$0xff]
  %v3887 = vld [vmem:[%s9 + $0x2b4] sm:$0xf]
  %v3888 = vld [vmem:[%s9 + $0x2b8] sm:$0xff]
  %v3889 = vld [vmem:[%s9 + $0x2c0] sm:$0xf]
  %v3890 = vld [vmem:[%s9 + $0x2c4] sm:$0xff]
  %v3891 = vld [vmem:[%s9 + $0x2cc] sm:$0xf]
  %v3892 = vld [vmem:[%s9 + $0x2d0] sm:$0xff]
  %v3893 = vld [vmem:[%s9 + $0x2d8] sm:$0xf]
  %v3894 = vld [vmem:[%s9 + $0x2dc] sm:$0xff]
  %v3895 = vld [vmem:[%s9 + $0x2e4] sm:$0xf]
  %v3896 = vld [vmem:[%s9 + $0x2e8] sm:$0xff]
  %v3897 = vld [vmem:[%s9 + $0x2f0] sm:$0xf]
  %v3898 = vld [vmem:[%s9 + $0x2f4] sm:$0xff]
  %v3899 = vld [vmem:[%s9 + $0x2fc] sm:$0xf]
  %v3900 = vld [vmem:[%s10] sm:$0x7]
  %v3902 = vperm.slane %v3900, 0
  %v3903 = vperm.slane %v3900, 1
  %v3904 = vperm.slane %v3900, 2
  %v4036 = vunpack.c.l.b16 %v3772
  %v4037 = vunpack.c.h.b16 %v3772
  %v4038 = vunpack.c.l.b16 %v3773
  %v4039 = vunpack.c.l.b16 %v3774
  %v4040 = vunpack.c.h.b16 %v3774
  %v4041 = vunpack.c.l.b16 %v3775
  %v4042 = vunpack.c.l.b16 %v3776
  %v4043 = vunpack.c.h.b16 %v3776
  %v4044 = vunpack.c.l.b16 %v3777
  %v4045 = vunpack.c.l.b16 %v3778
  %v4046 = vunpack.c.h.b16 %v3778
  %v4047 = vunpack.c.l.b16 %v3779
  %v4048 = vunpack.c.l.b16 %v3780
  %v4049 = vunpack.c.h.b16 %v3780
  %v4050 = vunpack.c.l.b16 %v3781
  %v4051 = vunpack.c.l.b16 %v3782
  %v4052 = vunpack.c.h.b16 %v3782
  %v4053 = vunpack.c.l.b16 %v3783
  %v4054 = vunpack.c.l.b16 %v3784
  %v4055 = vunpack.c.h.b16 %v3784
  %v4056 = vunpack.c.l.b16 %v3785
  %v4057 = vunpack.c.l.b16 %v3786
  %v4058 = vunpack.c.h.b16 %v3786
  %v4059 = vunpack.c.l.b16 %v3787
  %v4060 = vunpack.c.l.b16 %v3788
  %v4061 = vunpack.c.h.b16 %v3788
  %v4062 = vunpack.c.l.b16 %v3789
  %v4063 = vunpack.c.l.b16 %v3790
  %v4064 = vunpack.c.h.b16 %v3790
  %v4065 = vunpack.c.l.b16 %v3791
  %v4066 = vunpack.c.l.b16 %v3792
  %v4067 = vunpack.c.h.b16 %v3792
  %v4068 = vunpack.c.l.b16 %v3793
  %v4069 = vunpack.c.l.b16 %v3794
  %v4070 = vunpack.c.h.b16 %v3794
  %v4071 = vunpack.c.l.b16 %v3795
  %v4072 = vunpack.c.l.b16 %v3796
  %v4073 = vunpack.c.h.b16 %v3796
  %v4074 = vunpack.c.l.b16 %v3797
  %v4075 = vunpack.c.l.b16 %v3798
  %v4076 = vunpack.c.h.b16 %v3798
  %v4077 = vunpack.c.l.b16 %v3799
  %v4078 = vunpack.c.l.b16 %v3800
  %v4079 = vunpack.c.h.b16 %v3800
  %v4080 = vunpack.c.l.b16 %v3801
  %v4081 = vunpack.c.l.b16 %v3802
  %v4082 = vunpack.c.h.b16 %v3802
  %v4083 = vunpack.c.l.b16 %v3803
  %v4084 = vunpack.c.l.b16 %v3804
  %v4085 = vunpack.c.h.b16 %v3804
  %v4086 = vunpack.c.l.b16 %v3805
  %v4087 = vunpack.c.l.b16 %v3806
  %v4088 = vunpack.c.h.b16 %v3806
  %v4089 = vunpack.c.l.b16 %v3807
  %v4090 = vunpack.c.l.b16 %v3808
  %v4091 = vunpack.c.h.b16 %v3808
  %v4092 = vunpack.c.l.b16 %v3809
  %v4093 = vunpack.c.l.b16 %v3810
  %v4094 = vunpack.c.h.b16 %v3810
  %v4095 = vunpack.c.l.b16 %v3811
  %v4096 = vunpack.c.l.b16 %v3812
  %v4097 = vunpack.c.h.b16 %v3812
  %v4098 = vunpack.c.l.b16 %v3813
  %v4099 = vunpack.c.l.b16 %v3814
  %v4100 = vunpack.c.h.b16 %v3814
  %v4101 = vunpack.c.l.b16 %v3815
  %v4102 = vunpack.c.l.b16 %v3816
  %v4103 = vunpack.c.h.b16 %v3816
  %v4104 = vunpack.c.l.b16 %v3817
  %v4105 = vunpack.c.l.b16 %v3818
  %v4106 = vunpack.c.h.b16 %v3818
  %v4107 = vunpack.c.l.b16 %v3819
  %v4108 = vunpack.c.l.b16 %v3820
  %v4109 = vunpack.c.h.b16 %v3820
  %v4110 = vunpack.c.l.b16 %v3821
  %v4111 = vunpack.c.l.b16 %v3822
  %v4112 = vunpack.c.h.b16 %v3822
  %v4113 = vunpack.c.l.b16 %v3823
  %v4114 = vunpack.c.l.b16 %v3824
  %v4115 = vunpack.c.h.b16 %v3824
  %v4116 = vunpack.c.l.b16 %v3825
  %v4117 = vunpack.c.l.b16 %v3826
  %v4118 = vunpack.c.h.b16 %v3826
  %v4119 = vunpack.c.l.b16 %v3827
  %v4120 = vunpack.c.l.b16 %v3828
  %v4121 = vunpack.c.h.b16 %v3828
  %v4122 = vunpack.c.l.b16 %v3829
  %v4123 = vunpack.c.l.b16 %v3830
  %v4124 = vunpack.c.h.b16 %v3830
  %v4125 = vunpack.c.l.b16 %v3831
  %v4126 = vunpack.c.l.b16 %v3832
  %v4127 = vunpack.c.h.b16 %v3832
  %v4128 = vunpack.c.l.b16 %v3833
  %v4129 = vunpack.c.l.b16 %v3834
  %v4130 = vunpack.c.h.b16 %v3834
  %v4131 = vunpack.c.l.b16 %v3835
  %v4132 = vunpack.c.l.b16 %v3836
  %v4133 = vunpack.c.h.b16 %v3836
  %v4134 = vunpack.c.l.b16 %v3837
  %v4135 = vunpack.c.l.b16 %v3838
  %v4136 = vunpack.c.h.b16 %v3838
  %v4137 = vunpack.c.l.b16 %v3839
  %v4138 = vunpack.c.l.b16 %v3840
  %v4139 = vunpack.c.h.b16 %v3840
  %v4140 = vunpack.c.l.b16 %v3841
  %v4141 = vunpack.c.l.b16 %v3842
  %v4142 = vunpack.c.h.b16 %v3842
  %v4143 = vunpack.c.l.b16 %v3843
  %v4144 = vunpack.c.l.b16 %v3844
  %v4145 = vunpack.c.h.b16 %v3844
  %v4146 = vunpack.c.l.b16 %v3845
  %v4147 = vunpack.c.l.b16 %v3846
  %v4148 = vunpack.c.h.b16 %v3846
  %v4149 = vunpack.c.l.b16 %v3847
  %v4150 = vunpack.c.l.b16 %v3848
  %v4151 = vunpack.c.h.b16 %v3848
  %v4152 = vunpack.c.l.b16 %v3849
  %v4153 = vunpack.c.l.b16 %v3850
  %v4154 = vunpack.c.h.b16 %v3850
  %v4155 = vunpack.c.l.b16 %v3851
  %v4156 = vunpack.c.l.b16 %v3852
  %v4157 = vunpack.c.h.b16 %v3852
  %v4158 = vunpack.c.l.b16 %v3853
  %v4159 = vunpack.c.l.b16 %v3854
  %v4160 = vunpack.c.h.b16 %v3854
  %v4161 = vunpack.c.l.b16 %v3855
  %v4162 = vunpack.c.l.b16 %v3856
  %v4163 = vunpack.c.h.b16 %v3856
  %v4164 = vunpack.c.l.b16 %v3857
  %v4165 = vunpack.c.l.b16 %v3858
  %v4166 = vunpack.c.h.b16 %v3858
  %v4167 = vunpack.c.l.b16 %v3859
  %v4168 = vunpack.c.l.b16 %v3860
  %v4169 = vunpack.c.h.b16 %v3860
  %v4170 = vunpack.c.l.b16 %v3861
  %v4171 = vunpack.c.l.b16 %v3862
  %v4172 = vunpack.c.h.b16 %v3862
  %v4173 = vunpack.c.l.b16 %v3863
  %v4174 = vunpack.c.l.b16 %v3864
  %v4175 = vunpack.c.h.b16 %v3864
  %v4176 = vunpack.c.l.b16 %v3865
  %v4177 = vunpack.c.l.b16 %v3866
  %v4178 = vunpack.c.h.b16 %v3866
  %v4179 = vunpack.c.l.b16 %v3867
  %v4180 = vunpack.c.l.b16 %v3868
  %v4181 = vunpack.c.h.b16 %v3868
  %v4182 = vunpack.c.l.b16 %v3869
  %v4183 = vunpack.c.l.b16 %v3870
  %v4184 = vunpack.c.h.b16 %v3870
  %v4185 = vunpack.c.l.b16 %v3871
  %v4186 = vunpack.c.l.b16 %v3872
  %v4187 = vunpack.c.h.b16 %v3872
  %v4188 = vunpack.c.l.b16 %v3873
  %v4189 = vunpack.c.l.b16 %v3874
  %v4190 = vunpack.c.h.b16 %v3874
  %v4191 = vunpack.c.l.b16 %v3875
  %v4192 = vunpack.c.l.b16 %v3876
  %v4193 = vunpack.c.h.b16 %v3876
  %v4194 = vunpack.c.l.b16 %v3877
  %v4195 = vunpack.c.l.b16 %v3878
  %v4196 = vunpack.c.h.b16 %v3878
  %v4197 = vunpack.c.l.b16 %v3879
  %v4198 = vunpack.c.l.b16 %v3880
  %v4199 = vunpack.c.h.b16 %v3880
  %v4200 = vunpack.c.l.b16 %v3881
  %v4201 = vunpack.c.l.b16 %v3882
  %v4202 = vunpack.c.h.b16 %v3882
  %v4203 = vunpack.c.l.b16 %v3883
  %v4204 = vunpack.c.l.b16 %v3884
  %v4205 = vunpack.c.h.b16 %v3884
  %v4206 = vunpack.c.l.b16 %v3885
  %v4207 = vunpack.c.l.b16 %v3886
  %v4208 = vunpack.c.h.b16 %v3886
  %v4209 = vunpack.c.l.b16 %v3887
  %v4210 = vunpack.c.l.b16 %v3888
  %v4211 = vunpack.c.h.b16 %v3888
  %v4212 = vunpack.c.l.b16 %v3889
  %v4213 = vunpack.c.l.b16 %v3890
  %v4214 = vunpack.c.h.b16 %v3890
  %v4215 = vunpack.c.l.b16 %v3891
  %v4216 = vunpack.c.l.b16 %v3892
  %v4217 = vunpack.c.h.b16 %v3892
  %v4218 = vunpack.c.l.b16 %v3893
  %v4219 = vunpack.c.l.b16 %v3894
  %v4220 = vunpack.c.h.b16 %v3894
  %v4221 = vunpack.c.l.b16 %v3895
  %v4222 = vunpack.c.l.b16 %v3896
  %v4223 = vunpack.c.h.b16 %v3896
  %v4224 = vunpack.c.l.b16 %v3897
  %v4225 = vunpack.c.l.b16 %v3898
  %v4226 = vunpack.c.h.b16 %v3898
  %v4227 = vunpack.c.l.b16 %v3899
  %v4228 = vpack.c.b16 %v4039, %v4036
  %v4229 = vpack.c.b16 %v4040, %v4037
  %v4230 = vpack.c.b16 %v4041, %v4038
  %v4231 = vpack.c.b16 %v4045, %v4042
  %v4232 = vpack.c.b16 %v4046, %v4043
  %v4233 = vpack.c.b16 %v4047, %v4044
  %v4234 = vpack.c.b16 %v4051, %v4048
  %v4235 = vpack.c.b16 %v4052, %v4049
  %v4236 = vpack.c.b16 %v4053, %v4050
  %v4237 = vpack.c.b16 %v4057, %v4054
  %v4238 = vpack.c.b16 %v4058, %v4055
  %v4239 = vpack.c.b16 %v4059, %v4056
  %v4240 = vpack.c.b16 %v4063, %v4060
  %v4241 = vpack.c.b16 %v4064, %v4061
  %v4242 = vpack.c.b16 %v4065, %v4062
  %v4243 = vpack.c.b16 %v4069, %v4066
  %v4244 = vpack.c.b16 %v4070, %v4067
  %v4245 = vpack.c.b16 %v4071, %v4068
  %v4246 = vpack.c.b16 %v4075, %v4072
  %v4247 = vpack.c.b16 %v4076, %v4073
  %v4248 = vpack.c.b16 %v4077, %v4074
  %v4249 = vpack.c.b16 %v4081, %v4078
  %v4250 = vpack.c.b16 %v4082, %v4079
  %v4251 = vpack.c.b16 %v4083, %v4080
  %v4252 = vpack.c.b16 %v4087, %v4084
  %v4253 = vpack.c.b16 %v4088, %v4085
  %v4254 = vpack.c.b16 %v4089, %v4086
  %v4255 = vpack.c.b16 %v4093, %v4090
  %v4256 = vpack.c.b16 %v4094, %v4091
  %v4257 = vpack.c.b16 %v4095, %v4092
  %v4258 = vpack.c.b16 %v4099, %v4096
  %v4259 = vpack.c.b16 %v4100, %v4097
  %v4260 = vpack.c.b16 %v4101, %v4098
  %v4261 = vpack.c.b16 %v4105, %v4102
  %v4262 = vpack.c.b16 %v4106, %v4103
  %v4263 = vpack.c.b16 %v4107, %v4104
  %v4264 = vpack.c.b16 %v4111, %v4108
  %v4265 = vpack.c.b16 %v4112, %v4109
  %v4266 = vpack.c.b16 %v4113, %v4110
  %v4267 = vpack.c.b16 %v4117, %v4114
  %v4268 = vpack.c.b16 %v4118, %v4115
  %v4269 = vpack.c.b16 %v4119, %v4116
  %v4270 = vpack.c.b16 %v4123, %v4120
  %v4271 = vpack.c.b16 %v4124, %v4121
  %v4272 = vpack.c.b16 %v4125, %v4122
  %v4273 = vpack.c.b16 %v4129, %v4126
  %v4274 = vpack.c.b16 %v4130, %v4127
  %v4275 = vpack.c.b16 %v4131, %v4128
  %v4276 = vpack.c.b16 %v4135, %v4132
  %v4277 = vpack.c.b16 %v4136, %v4133
  %v4278 = vpack.c.b16 %v4137, %v4134
  %v4279 = vpack.c.b16 %v4141, %v4138
  %v4280 = vpack.c.b16 %v4142, %v4139
  %v4281 = vpack.c.b16 %v4143, %v4140
  %v4282 = vpack.c.b16 %v4147, %v4144
  %v4283 = vpack.c.b16 %v4148, %v4145
  %v4284 = vpack.c.b16 %v4149, %v4146
  %v4285 = vpack.c.b16 %v4153, %v4150
  %v4286 = vpack.c.b16 %v4154, %v4151
  %v4287 = vpack.c.b16 %v4155, %v4152
  %v4288 = vpack.c.b16 %v4159, %v4156
  %v4289 = vpack.c.b16 %v4160, %v4157
  %v4290 = vpack.c.b16 %v4161, %v4158
  %v4291 = vpack.c.b16 %v4165, %v4162
  %v4292 = vpack.c.b16 %v4166, %v4163
  %v4293 = vpack.c.b16 %v4167, %v4164
  %v4294 = vpack.c.b16 %v4171, %v4168
  %v4295 = vpack.c.b16 %v4172, %v4169
  %v4296 = vpack.c.b16 %v4173, %v4170
  %v4297 = vpack.c.b16 %v4177, %v4174
  %v4298 = vpack.c.b16 %v4178, %v4175
  %v4299 = vpack.c.b16 %v4179, %v4176
  %v4300 = vpack.c.b16 %v4183, %v4180
  %v4301 = vpack.c.b16 %v4184, %v4181
  %v4302 = vpack.c.b16 %v4185, %v4182
  %v4303 = vpack.c.b16 %v4189, %v4186
  %v4304 = vpack.c.b16 %v4190, %v4187
  %v4305 = vpack.c.b16 %v4191, %v4188
  %v4306 = vpack.c.b16 %v4195, %v4192
  %v4307 = vpack.c.b16 %v4196, %v4193
  %v4308 = vpack.c.b16 %v4197, %v4194
  %v4309 = vpack.c.b16 %v4201, %v4198
  %v4310 = vpack.c.b16 %v4202, %v4199
  %v4311 = vpack.c.b16 %v4203, %v4200
  %v4312 = vpack.c.b16 %v4207, %v4204
  %v4313 = vpack.c.b16 %v4208, %v4205
  %v4314 = vpack.c.b16 %v4209, %v4206
  %v4315 = vpack.c.b16 %v4213, %v4210
  %v4316 = vpack.c.b16 %v4214, %v4211
  %v4317 = vpack.c.b16 %v4215, %v4212
  %v4318 = vpack.c.b16 %v4219, %v4216
  %v4319 = vpack.c.b16 %v4220, %v4217
  %v4320 = vpack.c.b16 %v4221, %v4218
  %v4321 = vpack.c.b16 %v4225, %v4222
  %v4322 = vpack.c.b16 %v4226, %v4223
  %v4323 = vpack.c.b16 %v4227, %v4224
  %4420 = vmatpush.bf16.msra.mxu0 %v4249
  %4421 = vmatpush.bf16.msra.mxu0 %v4246
  %4422 = vmatpush.bf16.msra.mxu0 %v4243
  %4423 = vmatpush.bf16.msra.mxu0 %v4240
  %4424 = vmatpush.bf16.msra.mxu0 %v4237
  %4425 = vmatpush.bf16.msra.mxu0 %v4234
  %4426 = vmatpush.bf16.msra.mxu0 %v4231
  %4427 = vmatpush.bf16.msra.mxu0 %v4228
  %4428 = vmatmul.bf16.gmra.mxu0 %v3768
  %v4429 = vpop.f32.mrf.mxu0
  %v4430 = vadd.f32 %v3902, %v4429
  %v4431 = vpop.f32.mrf.mxu0
  %4432 = vdwg.mxu0
  %4433 = vmatpush.bf16.msra.mxu0 %v4273
  %4434 = vmatpush.bf16.msra.mxu0 %v4270
  %4435 = vmatpush.bf16.msra.mxu0 %v4267
  %4436 = vmatpush.bf16.msra.mxu0 %v4264
  %4437 = vmatpush.bf16.msra.mxu0 %v4261
  %4438 = vmatpush.bf16.msra.mxu0 %v4258
  %4439 = vmatpush.bf16.msra.mxu0 %v4255
  %4440 = vmatpush.bf16.msra.mxu0 %v4252
  %4441 = vmatmul.bf16.gmra.mxu0 %v3769
  %v4442 = vpop.f32.mrf.mxu0
  %v4443 = vadd.f32 %v4430, %v4442
  %v4444 = vpop.f32.mrf.mxu0
  %4445 = vdwg.mxu0
  %4446 = vmatpush.bf16.msra.mxu0 %v4297
  %4447 = vmatpush.bf16.msra.mxu0 %v4294
  %4448 = vmatpush.bf16.msra.mxu0 %v4291
  %4449 = vmatpush.bf16.msra.mxu0 %v4288
  %4450 = vmatpush.bf16.msra.mxu0 %v4285
  %4451 = vmatpush.bf16.msra.mxu0 %v4282
  %4452 = vmatpush.bf16.msra.mxu0 %v4279
  %4453 = vmatpush.bf16.msra.mxu0 %v4276
  %4454 = vmatmul.bf16.gmra.mxu0 %v3770
  %v4455 = vpop.f32.mrf.mxu0
  %v4456 = vadd.f32 %v4443, %v4455
  %v4457 = vpop.f32.mrf.mxu0
  %4458 = vdwg.mxu0
  %4459 = vmatpush.bf16.msra.mxu0 %v4321
  %4460 = vmatpush.bf16.msra.mxu0 %v4318
  %4461 = vmatpush.bf16.msra.mxu0 %v4315
  %4462 = vmatpush.bf16.msra.mxu0 %v4312
  %4463 = vmatpush.bf16.msra.mxu0 %v4309
  %4464 = vmatpush.bf16.msra.mxu0 %v4306
  %4465 = vmatpush.bf16.msra.mxu0 %v4303
  %4466 = vmatpush.bf16.msra.mxu0 %v4300
  %4467 = vmatmul.bf16.gmra.mxu0 %v3771
  %v4468 = vpop.f32.mrf.mxu0
  %v4469 = vadd.f32 %v4456, %v4468
  %v4470 = vpop.f32.mrf.mxu0
  %4471 = vdwg.mxu0
  %4472 = vmatpush.bf16.msra.mxu0 %v4250
  %4473 = vmatpush.bf16.msra.mxu0 %v4247
  %4474 = vmatpush.bf16.msra.mxu0 %v4244
  %4475 = vmatpush.bf16.msra.mxu0 %v4241
  %4476 = vmatpush.bf16.msra.mxu0 %v4238
  %4477 = vmatpush.bf16.msra.mxu0 %v4235
  %4478 = vmatpush.bf16.msra.mxu0 %v4232
  %4479 = vmatpush.bf16.msra.mxu0 %v4229
  %4480 = vmatmul.bf16.gmra.mxu0 %v3768
  %v4481 = vpop.f32.mrf.mxu0
  %v4482 = vadd.f32 %v3903, %v4481
  %v4483 = vpop.f32.mrf.mxu0
  %4484 = vdwg.mxu0
  %4485 = vmatpush.bf16.msra.mxu0 %v4274
  %4486 = vmatpush.bf16.msra.mxu0 %v4271
  %4487 = vmatpush.bf16.msra.mxu0 %v4268
  %4488 = vmatpush.bf16.msra.mxu0 %v4265
  %4489 = vmatpush.bf16.msra.mxu0 %v4262
  %4490 = vmatpush.bf16.msra.mxu0 %v4259
  %4491 = vmatpush.bf16.msra.mxu0 %v4256
  %4492 = vmatpush.bf16.msra.mxu0 %v4253
  %4493 = vmatmul.bf16.gmra.mxu0 %v3769
  %v4494 = vpop.f32.mrf.mxu0
  %v4495 = vadd.f32 %v4482, %v4494
  %v4496 = vpop.f32.mrf.mxu0
  %4497 = vdwg.mxu0
  %4498 = vmatpush.bf16.msra.mxu0 %v4298
  %4499 = vmatpush.bf16.msra.mxu0 %v4295
  %4500 = vmatpush.bf16.msra.mxu0 %v4292
  %4501 = vmatpush.bf16.msra.mxu0 %v4289
  %4502 = vmatpush.bf16.msra.mxu0 %v4286
  %4503 = vmatpush.bf16.msra.mxu0 %v4283
  %4504 = vmatpush.bf16.msra.mxu0 %v4280
  %4505 = vmatpush.bf16.msra.mxu0 %v4277
  %4506 = vmatmul.bf16.gmra.mxu0 %v3770
  %v4507 = vpop.f32.mrf.mxu0
  %v4508 = vadd.f32 %v4495, %v4507
  %v4509 = vpop.f32.mrf.mxu0
  %4510 = vdwg.mxu0
  %4511 = vmatpush.bf16.msra.mxu0 %v4322
  %4512 = vmatpush.bf16.msra.mxu0 %v4319
  %4513 = vmatpush.bf16.msra.mxu0 %v4316
  %4514 = vmatpush.bf16.msra.mxu0 %v4313
  %4515 = vmatpush.bf16.msra.mxu0 %v4310
  %4516 = vmatpush.bf16.msra.mxu0 %v4307
  %4517 = vmatpush.bf16.msra.mxu0 %v4304
  %4518 = vmatpush.bf16.msra.mxu0 %v4301
  %4519 = vmatmul.bf16.gmra.mxu0 %v3771
  %v4520 = vpop.f32.mrf.mxu0
  %v4521 = vadd.f32 %v4508, %v4520
  %v4522 = vpop.f32.mrf.mxu0
  %4523 = vdwg.mxu0
  %4524 = vmatpush.bf16.msra.mxu0 %v4251
  %4525 = vmatpush.bf16.msra.mxu0 %v4248
  %4526 = vmatpush.bf16.msra.mxu0 %v4245
  %4527 = vmatpush.bf16.msra.mxu0 %v4242
  %4528 = vmatpush.bf16.msra.mxu0 %v4239
  %4529 = vmatpush.bf16.msra.mxu0 %v4236
  %4530 = vmatpush.bf16.msra.mxu0 %v4233
  %4531 = vmatpush.bf16.msra.mxu0 %v4230
  %4532 = vmatmul.bf16.gmra.mxu0 %v3768
  %v4533 = vpop.f32.mrf.mxu0
  %v4534 = vadd.f32 %v3904, %v4533
  %v4535 = vpop.f32.mrf.mxu0
  %4536 = vdwg.mxu0
  %4537 = vmatpush.bf16.msra.mxu0 %v4275
  %4538 = vmatpush.bf16.msra.mxu0 %v4272
  %4539 = vmatpush.bf16.msra.mxu0 %v4269
  %4540 = vmatpush.bf16.msra.mxu0 %v4266
  %4541 = vmatpush.bf16.msra.mxu0 %v4263
  %4542 = vmatpush.bf16.msra.mxu0 %v4260
  %4543 = vmatpush.bf16.msra.mxu0 %v4257
  %4544 = vmatpush.bf16.msra.mxu0 %v4254
  %4545 = vmatmul.bf16.gmra.mxu0 %v3769
  %v4546 = vpop.f32.mrf.mxu0
  %v4547 = vadd.f32 %v4534, %v4546
  %v4548 = vpop.f32.mrf.mxu0
  %4549 = vdwg.mxu0
  %4550 = vmatpush.bf16.msra.mxu0 %v4299
  %4551 = vmatpush.bf16.msra.mxu0 %v4296
  %4552 = vmatpush.bf16.msra.mxu0 %v4293
  %4553 = vmatpush.bf16.msra.mxu0 %v4290
  %4554 = vmatpush.bf16.msra.mxu0 %v4287
  %4555 = vmatpush.bf16.msra.mxu0 %v4284
  %4556 = vmatpush.bf16.msra.mxu0 %v4281
  %4557 = vmatpush.bf16.msra.mxu0 %v4278
  %4558 = vmatmul.bf16.gmra.mxu0 %v3770
  %v4559 = vpop.f32.mrf.mxu0
  %v4560 = vadd.f32 %v4547, %v4559
  %v4561 = vpop.f32.mrf.mxu0
  %4562 = vdwg.mxu0
  %4563 = vmatpush.bf16.msra.mxu0 %v4323
  %4564 = vmatpush.bf16.msra.mxu0 %v4320
  %4565 = vmatpush.bf16.msra.mxu0 %v4317
  %4566 = vmatpush.bf16.msra.mxu0 %v4314
  %4567 = vmatpush.bf16.msra.mxu0 %v4311
  %4568 = vmatpush.bf16.msra.mxu0 %v4308
  %4569 = vmatpush.bf16.msra.mxu0 %v4305
  %4570 = vmatpush.bf16.msra.mxu0 %v4302
  %4571 = vmatmul.bf16.gmra.mxu0 %v3771
  %v4572 = vpop.f32.mrf.mxu0
  %v4573 = vadd.f32 %v4560, %v4572
  %v4574 = vpop.f32.mrf.mxu0
  %4575 = vdwg.mxu0
  %4576 = vst [vmem:[%s12] sm:$0xff] %v4469
  %4577 = vst [vmem:[%s12 + $0x8] sm:$0xff] %v4521
  %4578 = vst [vmem:[%s12 + $0x10] sm:$0xff] %v4573
  %v4579 = vsel %vm1883, %v4469, -inf
  %4580 = vmax.xlane.f32.xlu0 %v4579
  %v4581 = vpop.xlane.xlu0 %4580
  %v4582 = vsub.f32 %v4469, %v4581
  %v4583 = vmul.f32 %v4582, 1.442695
  %v4584 = vpow.pop %v4583
  %v4585 = vsel %vm1883, %v4584, 0.0
  %4586 = vadd.xlane.f32.xlu0 %v4585
  %v4587 = vpop.xlane.xlu0 %4586
  %v4588 = vrcp.pop %v4587
  %v4589 = vmul.f32 %v4584, %v4588
  %vm4590 = vcmask 1048064
  %v4591 = vsel %vm4590, %v4469, -inf
  %4592 = vmax.xlane.f32.xlu0 %v4591
  %v4593 = vpop.xlane.xlu0 %4592
  %v4594 = vsub.f32 %v4469, %v4593
  %v4595 = vmul.f32 %v4594, 1.442695
  %v4596 = vpow.pop %v4595
  %4598 = vrot.lane.b32.xlu0 %v4596, 64
  %v4599 = vpop.permute.xlu0 %4598
  %v4601 = vsel %vm1883, %v4599, 0.0
  %4602 = vadd.xlane.f32.xlu0 %v4601
  %v4603 = vpop.xlane.xlu0 %4602
  %v4604 = vrcp.pop %v4603
  %v4605 = vmul.f32 %v4596, %v4604
  %v4606 = vsel %vm1883, %v4521, -inf
  %4607 = vmax.xlane.f32.xlu0 %v4606
  %v4608 = vpop.xlane.xlu0 %4607
  %v4609 = vsub.f32 %v4521, %v4608
  %v4610 = vmul.f32 %v4609, 1.442695
  %v4611 = vpow.pop %v4610
  %v4612 = vsel %vm1883, %v4611, 0.0
  %4613 = vadd.xlane.f32.xlu0 %v4612
  %v4614 = vpop.xlane.xlu0 %4613
  %v4615 = vrcp.pop %v4614
  %v4616 = vmul.f32 %v4611, %v4615
  %v4617 = vsel %vm4590, %v4521, -inf
  %4618 = vmax.xlane.f32.xlu0 %v4617
  %v4619 = vpop.xlane.xlu0 %4618
  %v4620 = vsub.f32 %v4521, %v4619
  %v4621 = vmul.f32 %v4620, 1.442695
  %v4622 = vpow.pop %v4621
  %4624 = vrot.lane.b32.xlu0 %v4622, 64
  %v4625 = vpop.permute.xlu0 %4624
  %v4627 = vsel %vm1883, %v4625, 0.0
  %4628 = vadd.xlane.f32.xlu0 %v4627
  %v4629 = vpop.xlane.xlu0 %4628
  %v4630 = vrcp.pop %v4629
  %v4631 = vmul.f32 %v4622, %v4630
  %v4632 = vsel %vm1883, %v4573, -inf
  %4633 = vmax.xlane.f32.xlu0 %v4632
  %v4634 = vpop.xlane.xlu0 %4633
  %v4635 = vsub.f32 %v4573, %v4634
  %v4636 = vmul.f32 %v4635, 1.442695
  %v4637 = vpow.pop %v4636
  %v4638 = vsel %vm1883, %v4637, 0.0
  %4639 = vadd.xlane.f32.xlu0 %v4638
  %v4640 = vpop.xlane.xlu0 %4639
  %v4641 = vrcp.pop %v4640
  %v4642 = vmul.f32 %v4637, %v4641
  %v4643 = vsel %vm4590, %v4573, -inf
  %4644 = vmax.xlane.f32.xlu0 %v4643
  %v4645 = vpop.xlane.xlu0 %4644
  %v4646 = vsub.f32 %v4573, %v4645
  %v4647 = vmul.f32 %v4646, 1.442695
  %v4648 = vpow.pop %v4647
  %4650 = vrot.lane.b32.xlu0 %v4648, 64
  %v4651 = vpop.permute.xlu0 %4650
  %v4653 = vsel %vm1883, %v4651, 0.0
  %4654 = vadd.xlane.f32.xlu0 %v4653
  %v4655 = vpop.xlane.xlu0 %4654
  %v4656 = vrcp.pop %v4655
  %v4657 = vmul.f32 %v4648, %v4656
  %v4658 = vsel %vm1883, %v4589, %v4605
  %v4659 = vsel %vm1883, %v4616, %v4631
  %v4660 = vsel %vm1883, %v4642, %v4657
  %4661 = vst [vmem:[%s11] sm:$0xff] %v4658
  %4662 = vst [vmem:[%s11 + $0x8] sm:$0xff] %v4659
  %4663 = vst [vmem:[%s11 + $0x10] sm:$0xff] %v4660
  // Predicated region
  $region46: #{_c51_pallas.1} parent=0 // pred_check
    _
  $region47: #{_c51_pallas.1} parent=0 // pred_check_branch
    %4665 = sbr.rel (0) target = $region49
  $region48: #{_c51_pallas.1} parent=0 // pred_region
    _
  $region49: #{_c51_pallas.1} parent=0 // pred_fallthru
    _
  // Predicated region
  $region50: #{_c51_pallas.1} parent=0 // pred_check
    _
  $region51: #{_c51_pallas.1} parent=0 // pred_check_branch
    %4667 = sbr.rel (0) target = $region53
  $region52: #{_c51_pallas.1} parent=0 // pred_region
    _
  $region53: #{_c51_pallas.1} parent=0 // pred_fallthru
    _
  // Predicated region
  $region54: #{_c51_pallas.1} parent=0 // pred_check
    _
  $region55: #{_c51_pallas.1} parent=0 // pred_check_branch
    %4669 = sbr.rel (0) target = $region57
  $region56: #{_c51_pallas.1} parent=0 // pred_region
    _
  $region57: #{_c51_pallas.1} parent=0 // pred_fallthru
    _
  // Predicated region
  $region58: #{_c51_pallas.1} parent=0 // pred_check
    _
  $region59: #{_c51_pallas.1} parent=0 // pred_check_branch
    %4671 = sbr.rel (0) target = $region61
  $region60: #{_c51_pallas.1} parent=0 // pred_region
    _
  $region61: #{_c51_pallas.1} parent=0 // pred_fallthru
    _

</llo_original>
